<compile_context>
chip_gen: v6e
topology: v6e:2x2x1
jax: 0.10.0
libtpu: 0.0.40
codegen_flags: <defaults>
</compile_context>

<pallas_src>
from functools import partial

import jax
import jax.numpy as jnp
from jax import lax
from jax.experimental import pallas as pl
from jax.experimental.pallas import tpu as pltpu

# hyperparameters mirroring model.py
BLOCK_SIZE = 32
N_LAYER = 6
N_HEADS = 4
LN_EPS = 1e-5


# ---------------------------------------------------------------------------
# Kernel
# ---------------------------------------------------------------------------
def _layer_norm(h, g, b):
    mu = jnp.mean(h, axis=-1, keepdims=True)
    var = jnp.mean((h - mu) ** 2, axis=-1, keepdims=True)
    return (h - mu) * lax.rsqrt(var + LN_EPS) * g + b


def _fused_forward_kernel(batch, seq, n_heads, n_layer,
                          x_ref,
                          ln1g_ref, ln1b_ref, wq_ref, wk_ref, wv_ref, wp_ref, bproj_ref,
                          ln2g_ref, ln2b_ref, w1_ref, b1_ref, w2_ref, b2_ref,
                          lnfg_ref, lnfb_ref, wlm_ref, blm_ref,
                          o_ref):
    """Whole-model forward on the folded (B*T, D) activations."""
    B, T, H = batch, seq, n_heads
    N, D = x_ref.shape
    hd = D // H
    scale = D ** -0.5          # reference scales by head_dim**-0.5 (== D**-0.5 here)

    # 2-D causal additive mask, built once; broadcasts over the (H*B) batch axis for free.
    row = lax.broadcasted_iota(jnp.int32, (T, T), 0)
    col = lax.broadcasted_iota(jnp.int32, (T, T), 1)
    neg_mask = jnp.where(row >= col, 0.0, -1e30).astype(jnp.float32)

    def to_heads(z):
        # (B*T, D) -> (H*B, T, hd).  The per-head feature split is inherent to MHA with
        # hd < 128 lanes; with only H*B = 8 static (T, hd) tiles this is a few cheap copies.
        return jnp.stack([z[b * T:(b + 1) * T, i * hd:(i + 1) * hd]
                          for i in range(H) for b in range(B)], axis=0)

    def layer(_, x):
        # ---- causal multi-head self-attention on ln1(x) ----
        h = _layer_norm(x, ln1g_ref[...], ln1b_ref[...])
        q = jnp.dot(h, wq_ref[...], preferred_element_type=jnp.float32)   # (N, D)
        k = jnp.dot(h, wk_ref[...], preferred_element_type=jnp.float32)
        v = jnp.dot(h, wv_ref[...], preferred_element_type=jnp.float32)
        qh, kh, vh = to_heads(q), to_heads(k), to_heads(v)                 # (H*B, T, hd)

        s = jnp.einsum("ntc,nsc->nts", qh, kh,
                       preferred_element_type=jnp.float32) * scale + neg_mask
        s = s - jnp.max(s, axis=-1, keepdims=True)
        e = jnp.exp(s)
        p = e / jnp.sum(e, axis=-1, keepdims=True)                         # exact softmax
        o = jnp.einsum("nts,nsc->ntc", p, vh,
                       preferred_element_type=jnp.float32)                 # (H*B, T, hd)

        # Recombine heads -> (N, D); ONE projection matmul (head-sum folded into K=D).
        o_flat = jnp.concatenate(
            [jnp.concatenate([o[i * B + b] for b in range(B)], axis=0)
             for i in range(H)], axis=-1)                                  # (N, D)
        attn = jnp.dot(o_flat, wp_ref[...],
                       preferred_element_type=jnp.float32) + bproj_ref[...]
        x = x + attn

        # ---- feed-forward on ln2(x) ----
        h2 = _layer_norm(x, ln2g_ref[...], ln2b_ref[...])
        ff = jnp.maximum(
            jnp.dot(h2, w1_ref[...], preferred_element_type=jnp.float32) + b1_ref[...],
            0.0)
        x = x + jnp.dot(ff, w2_ref[...], preferred_element_type=jnp.float32) + b2_ref[...]
        return x

    # one shared Block applied n_layer times: rolled loop bounds vreg live ranges
    x = lax.fori_loop(0, n_layer, layer, x_ref[...])

    # final LayerNorm + lm_head (vocab padded to 128 lanes -> unmasked lane-dense store)
    hf = _layer_norm(x, lnfg_ref[...], lnfb_ref[...])
    o_ref[...] = jnp.dot(hf, wlm_ref[...],
                         preferred_element_type=jnp.float32) + blm_ref[...]


# ---------------------------------------------------------------------------
# Wrapper (pallas_call plumbing)
# ---------------------------------------------------------------------------
def bigram_forward(tokens, params):
    """tokens: (B, T) int32, T <= BLOCK_SIZE. Returns logits (B, T, vocab)."""
    B, T = tokens.shape
    bp = params["block"]
    D = params["tok_emb"].shape[1]
    V = params["w_lm"].shape[1]
    VPAD = ((V + 127) // 128) * 128
    N = B * T

    # glue: embedding gathers stay in plain JAX; batch folded into the row dim
    x = (params["tok_emb"][tokens] + params["pos_emb"][:T]).reshape(N, D)

    # lm_head padded to a 128-lane vocab so the kernel's output store is lane-dense
    w_lm_pad = jnp.zeros((D, VPAD), jnp.float32).at[:, :V].set(params["w_lm"])
    b_lm_pad = jnp.zeros((1, VPAD), jnp.float32).at[:, :V].set(params["b_lm"])

    weights = [bp["ln1_g"], bp["ln1_b"], bp["wq"], bp["wk"], bp["wv"], bp["wp"], bp["bp"],
               bp["ln2_g"], bp["ln2_b"], bp["w1"], bp["b1"], bp["w2"], bp["b2"],
               params["ln_g"], params["ln_b"], w_lm_pad, b_lm_pad]

    operands = [x] + weights            # all 2-D, all resident in VMEM for the whole call
    in_specs = [pl.BlockSpec(op.shape, lambda i: (0, 0)) for op in operands]

    logits_pad = pl.pallas_call(
        partial(_fused_forward_kernel, B, T, N_HEADS, N_LAYER),
        out_shape=jax.ShapeDtypeStruct((N, VPAD), jnp.float32),
        grid=(1,),
        in_specs=in_specs,
        out_specs=pl.BlockSpec((N, VPAD), lambda i: (0, 0)),
        compiler_params=pltpu.CompilerParams(dimension_semantics=("arbitrary",)),
    )(*operands)
    return logits_pad[:, :V].reshape(B, T, V)


# ---------------------------------------------------------------------------
# Deterministic parameter init + pure-JAX reference
# ---------------------------------------------------------------------------
def init_params(key, vocab_size, n_embd, head_dim):
    assert n_embd == head_dim, "reference module requires n_embd == head_dim"
    D = head_dim
    ks = jax.random.split(key, 12)
    s = 0.1
    f32 = jnp.float32
    return {
        "tok_emb": jax.random.normal(ks[0], (vocab_size, D), f32) * s,
        "pos_emb": jax.random.normal(ks[1], (BLOCK_SIZE, D), f32) * s,
        "block": {
            "ln1_g": jnp.ones((1, D), f32),
            "ln1_b": jnp.zeros((1, D), f32),
            "wq": jax.random.normal(ks[2], (D, D), f32) * s,
            "wk": jax.random.normal(ks[3], (D, D), f32) * s,
            "wv": jax.random.normal(ks[4], (D, D), f32) * s,
            "wp": jax.random.normal(ks[5], (D, D), f32) * s,
            "bp": jax.random.normal(ks[6], (1, D), f32) * s,
            "ln2_g": jnp.ones((1, D), f32),
            "ln2_b": jnp.zeros((1, D), f32),
            "w1": jax.random.normal(ks[7], (D, 4 * D), f32) * s,
            "b1": jax.random.normal(ks[8], (1, 4 * D), f32) * s,
            "w2": jax.random.normal(ks[9], (4 * D, D), f32) * s,
            "b2": jax.random.normal(ks[10], (1, D), f32) * s,
        },
        "ln_g": jnp.ones((1, D), f32),
        "ln_b": jnp.zeros((1, D), f32),
        "w_lm": jax.random.normal(ks[11], (D, vocab_size), f32) * s,
        "b_lm": jnp.zeros((1, vocab_size), f32),
    }


def reference_forward(tokens, params):
    B, T = tokens.shape
    bp = params["block"]
    D = params["tok_emb"].shape[1]
    hd = D // N_HEADS
    x = params["tok_emb"][tokens] + params["pos_emb"][:T]

    def ln(h, g, b):
        mu = h.mean(-1, keepdims=True)
        var = ((h - mu) ** 2).mean(-1, keepdims=True)
        return (h - mu) / jnp.sqrt(var + LN_EPS) * g + b

    causal = jnp.tril(jnp.ones((T, T), bool))
    for _ in range(N_LAYER):
        h = ln(x, bp["ln1_g"], bp["ln1_b"])
        q = (h @ bp["wq"]).reshape(B, T, N_HEADS, hd).transpose(0, 2, 1, 3)
        k = (h @ bp["wk"]).reshape(B, T, N_HEADS, hd).transpose(0, 2, 1, 3)
        v = (h @ bp["wv"]).reshape(B, T, N_HEADS, hd).transpose(0, 2, 1, 3)
        wei = jnp.einsum("bhtc,bhsc->bhts", q, k) * D ** -0.5
        wei = jnp.where(causal, wei, -jnp.inf)
        wei = jax.nn.softmax(wei, axis=-1)
        o = jnp.einsum("bhts,bhsc->bhtc", wei, v).transpose(0, 2, 1, 3).reshape(B, T, D)
        x = x + (o @ bp["wp"] + bp["bp"])
        h2 = ln(x, bp["ln2_g"], bp["ln2_b"])
        x = x + (jnp.maximum(h2 @ bp["w1"] + bp["b1"], 0.0) @ bp["w2"] + bp["b2"])
    h = ln(x, params["ln_g"], params["ln_b"])
    return h @ params["w_lm"] + params["b_lm"]


# ---------------------------------------------------------------------------
if __name__ == "__main__":
    # small shapes consistent with the module: B=2, T=block_size=32, D=n_embd=head_dim=32
    VOCAB, N_EMBD, HEAD_DIM = 64, 32, 32
    B, T = 2, BLOCK_SIZE

    root = jax.random.PRNGKey(0)
    k_param, k_tok = jax.random.split(root)
    params = init_params(k_param, VOCAB, N_EMBD, HEAD_DIM)
    tokens = jax.random.randint(k_tok, (B, T), 0, VOCAB, dtype=jnp.int32)

    logits = jax.block_until_ready(bigram_forward(tokens, params))
    assert logits.shape == (B, T, VOCAB), logits.shape

    ref = jax.block_until_ready(reference_forward(tokens, params))
    max_err = float(jnp.max(jnp.abs(logits - ref)))
    assert max_err < 1e-3, f"mismatch vs reference: {max_err}"

    print("KERNEL_OK")
</pallas_src>

<mosaic_0001>
module attributes {stable_mosaic.version = 11 : i64} {
  func.func @_fused_forward_kernel(%arg0: i32, %arg1: memref<64x32xf32, #tpu.memory_space<vmem>>, %arg2: memref<1x32xf32, #tpu.memory_space<vmem>>, %arg3: memref<1x32xf32, #tpu.memory_space<vmem>>, %arg4: memref<32x32xf32, #tpu.memory_space<vmem>>, %arg5: memref<32x32xf32, #tpu.memory_space<vmem>>, %arg6: memref<32x32xf32, #tpu.memory_space<vmem>>, %arg7: memref<32x32xf32, #tpu.memory_space<vmem>>, %arg8: memref<1x32xf32, #tpu.memory_space<vmem>>, %arg9: memref<1x32xf32, #tpu.memory_space<vmem>>, %arg10: memref<1x32xf32, #tpu.memory_space<vmem>>, %arg11: memref<32x128xf32, #tpu.memory_space<vmem>>, %arg12: memref<1x128xf32, #tpu.memory_space<vmem>>, %arg13: memref<128x32xf32, #tpu.memory_space<vmem>>, %arg14: memref<1x32xf32, #tpu.memory_space<vmem>>, %arg15: memref<1x32xf32, #tpu.memory_space<vmem>>, %arg16: memref<1x32xf32, #tpu.memory_space<vmem>>, %arg17: memref<32x128xf32, #tpu.memory_space<vmem>>, %arg18: memref<1x128xf32, #tpu.memory_space<vmem>>, %arg19: memref<64x128xf32, #tpu.memory_space<vmem>>) attributes {dimension_semantics = [#tpu.dimension_semantics<arbitrary>], iteration_bounds = array<i64: 1>, scalar_prefetch = 0 : i64, scratch_operands = 0 : i64, tpu.core_type = #tpu.core_type<tc>, window_params = [{pipeline_mode = #tpu.pipeline_mode<synchronous>, transform_indices = @transform_0, window_bounds = array<i64: 64, 32>}, {pipeline_mode = #tpu.pipeline_mode<synchronous>, transform_indices = @transform_1, window_bounds = array<i64: 1, 32>}, {pipeline_mode = #tpu.pipeline_mode<synchronous>, transform_indices = @transform_2, window_bounds = array<i64: 1, 32>}, {pipeline_mode = #tpu.pipeline_mode<synchronous>, transform_indices = @transform_3, window_bounds = array<i64: 32, 32>}, {pipeline_mode = #tpu.pipeline_mode<synchronous>, transform_indices = @transform_4, window_bounds = array<i64: 32, 32>}, {pipeline_mode = #tpu.pipeline_mode<synchronous>, transform_indices = @transform_5, window_bounds = array<i64: 32, 32>}, {pipeline_mode = #tpu.pipeline_mode<synchronous>, transform_indices = @transform_6, window_bounds = array<i64: 32, 32>}, {pipeline_mode = #tpu.pipeline_mode<synchronous>, transform_indices = @transform_7, window_bounds = array<i64: 1, 32>}, {pipeline_mode = #tpu.pipeline_mode<synchronous>, transform_indices = @transform_8, window_bounds = array<i64: 1, 32>}, {pipeline_mode = #tpu.pipeline_mode<synchronous>, transform_indices = @transform_9, window_bounds = array<i64: 1, 32>}, {pipeline_mode = #tpu.pipeline_mode<synchronous>, transform_indices = @transform_10, window_bounds = array<i64: 32, 128>}, {pipeline_mode = #tpu.pipeline_mode<synchronous>, transform_indices = @transform_11, window_bounds = array<i64: 1, 128>}, {pipeline_mode = #tpu.pipeline_mode<synchronous>, transform_indices = @transform_12, window_bounds = array<i64: 128, 32>}, {pipeline_mode = #tpu.pipeline_mode<synchronous>, transform_indices = @transform_13, window_bounds = array<i64: 1, 32>}, {pipeline_mode = #tpu.pipeline_mode<synchronous>, transform_indices = @transform_14, window_bounds = array<i64: 1, 32>}, {pipeline_mode = #tpu.pipeline_mode<synchronous>, transform_indices = @transform_15, window_bounds = array<i64: 1, 32>}, {pipeline_mode = #tpu.pipeline_mode<synchronous>, transform_indices = @transform_16, window_bounds = array<i64: 32, 128>}, {pipeline_mode = #tpu.pipeline_mode<synchronous>, transform_indices = @transform_17, window_bounds = array<i64: 1, 128>}, {pipeline_mode = #tpu.pipeline_mode<synchronous>, transform_indices = @transform_18, window_bounds = array<i64: 64, 128>}]} {
    %0 = tpu.iota {dimensions = array<i32: 0>} : vector<32x32xi32>
    %1 = tpu.iota {dimensions = array<i32: 1>} : vector<32x32xi32>
    %2 = arith.cmpi sge, %0, %1 : vector<32x32xi32>
    %cst = arith.constant 0.000000e+00 : f32
    %cst_0 = arith.constant -1.000000e+30 : f32
    %3 = vector.broadcast %cst : f32 to vector<32x32xf32>
    %4 = vector.broadcast %cst_0 : f32 to vector<32x32xf32>
    %5 = arith.select %2, %3, %4 : vector<32x32xi1>, vector<32x32xf32>
    %c0 = arith.constant 0 : index
    %c0_1 = arith.constant 0 : index
    %6 = vector.load %arg1[%c0, %c0_1] : memref<64x32xf32, #tpu.memory_space<vmem>>, vector<64x32xf32>
    %c0_i32 = arith.constant 0 : i32
    %c6_i32 = arith.constant 6 : i32
    %7 = arith.addi %c0_i32, %c6_i32 : i32
    %c1_i32 = arith.constant 1 : i32
    %8 = scf.for %arg20 = %c0_i32 to %7 step %c1_i32 iter_args(%arg21 = %6) -> (vector<64x32xf32>)  : i32 {
      %c0_18 = arith.constant 0 : index
      %c0_19 = arith.constant 0 : index
      %39 = vector.load %arg2[%c0_18, %c0_19] : memref<1x32xf32, #tpu.memory_space<vmem>>, vector<1x32xf32>
      %c0_20 = arith.constant 0 : index
      %c0_21 = arith.constant 0 : index
      %40 = vector.load %arg3[%c0_20, %c0_21] : memref<1x32xf32, #tpu.memory_space<vmem>>, vector<1x32xf32>
      %cst_22 = arith.constant dense<0.000000e+00> : vector<64xf32>
      %41 = vector.multi_reduction <add>, %arg21, %cst_22 [1] : vector<64x32xf32> to vector<64xf32>
      %42 = vector.shape_cast %41 : vector<64xf32> to vector<64x1xf32>
      %cst_23 = arith.constant 3.200000e+01 : f32
      %43 = vector.broadcast %cst_23 : f32 to vector<64x1xf32>
      %44 = arith.divf %42, %43 : vector<64x1xf32>
      %45 = vector.broadcast %44 : vector<64x1xf32> to vector<64x32xf32>
      %46 = arith.subf %arg21, %45 : vector<64x32xf32>
      %47 = arith.mulf %46, %46 : vector<64x32xf32>
      %cst_24 = arith.constant dense<0.000000e+00> : vector<64xf32>
      %48 = vector.multi_reduction <add>, %47, %cst_24 [1] : vector<64x32xf32> to vector<64xf32>
      %49 = vector.shape_cast %48 : vector<64xf32> to vector<64x1xf32>
      %cst_25 = arith.constant 3.200000e+01 : f32
      %50 = vector.broadcast %cst_25 : f32 to vector<64x1xf32>
      %51 = arith.divf %49, %50 : vector<64x1xf32>
      %52 = vector.broadcast %44 : vector<64x1xf32> to vector<64x32xf32>
      %53 = arith.subf %arg21, %52 : vector<64x32xf32>
      %cst_26 = arith.constant 9.99999974E-6 : f32
      %54 = vector.broadcast %cst_26 : f32 to vector<64x1xf32>
      %55 = arith.addf %51, %54 : vector<64x1xf32>
      %56 = math.rsqrt %55 : vector<64x1xf32>
      %57 = vector.broadcast %56 : vector<64x1xf32> to vector<64x32xf32>
      %58 = arith.mulf %53, %57 : vector<64x32xf32>
      %59 = vector.broadcast %39 : vector<1x32xf32> to vector<64x32xf32>
      %60 = arith.mulf %58, %59 : vector<64x32xf32>
      %61 = vector.broadcast %40 : vector<1x32xf32> to vector<64x32xf32>
      %62 = arith.addf %60, %61 : vector<64x32xf32>
      %c0_27 = arith.constant 0 : index
      %c0_28 = arith.constant 0 : index
      %63 = vector.load %arg4[%c0_27, %c0_28] : memref<32x32xf32, #tpu.memory_space<vmem>>, vector<32x32xf32>
      %cst_29 = arith.constant dense<0.000000e+00> : vector<64x32xf32>
      %64 = tpu.matmul %62, %63, %cst_29 {dimension_numbers = #tpu.dot_dimension_numbers<[1], [0], [0], [1], [0, 0, 1, 1], [], []>} : vector<64x32xf32>, vector<32x32xf32>, vector<64x32xf32> -> vector<64x32xf32>
      %c0_30 = arith.constant 0 : index
      %c0_31 = arith.constant 0 : index
      %65 = vector.load %arg5[%c0_30, %c0_31] : memref<32x32xf32, #tpu.memory_space<vmem>>, vector<32x32xf32>
      %cst_32 = arith.constant dense<0.000000e+00> : vector<64x32xf32>
      %66 = tpu.matmul %62, %65, %cst_32 {dimension_numbers = #tpu.dot_dimension_numbers<[1], [0], [0], [1], [0, 0, 1, 1], [], []>} : vector<64x32xf32>, vector<32x32xf32>, vector<64x32xf32> -> vector<64x32xf32>
      %c0_33 = arith.constant 0 : index
      %c0_34 = arith.constant 0 : index
      %67 = vector.load %arg6[%c0_33, %c0_34] : memref<32x32xf32, #tpu.memory_space<vmem>>, vector<32x32xf32>
      %cst_35 = arith.constant dense<0.000000e+00> : vector<64x32xf32>
      %68 = tpu.matmul %62, %67, %cst_35 {dimension_numbers = #tpu.dot_dimension_numbers<[1], [0], [0], [1], [0, 0, 1, 1], [], []>} : vector<64x32xf32>, vector<32x32xf32>, vector<64x32xf32> -> vector<64x32xf32>
      %69 = vector.extract_strided_slice %64 {offsets = [0, 0], sizes = [32, 8], strides = [1, 1]} : vector<64x32xf32> to vector<32x8xf32>
      %70 = vector.extract_strided_slice %64 {offsets = [32, 0], sizes = [32, 8], strides = [1, 1]} : vector<64x32xf32> to vector<32x8xf32>
      %71 = vector.extract_strided_slice %64 {offsets = [0, 8], sizes = [32, 8], strides = [1, 1]} : vector<64x32xf32> to vector<32x8xf32>
      %72 = vector.extract_strided_slice %64 {offsets = [32, 8], sizes = [32, 8], strides = [1, 1]} : vector<64x32xf32> to vector<32x8xf32>
      %73 = vector.extract_strided_slice %64 {offsets = [0, 16], sizes = [32, 8], strides = [1, 1]} : vector<64x32xf32> to vector<32x8xf32>
      %74 = vector.extract_strided_slice %64 {offsets = [32, 16], sizes = [32, 8], strides = [1, 1]} : vector<64x32xf32> to vector<32x8xf32>
      %75 = vector.extract_strided_slice %64 {offsets = [0, 24], sizes = [32, 8], strides = [1, 1]} : vector<64x32xf32> to vector<32x8xf32>
      %76 = vector.extract_strided_slice %64 {offsets = [32, 24], sizes = [32, 8], strides = [1, 1]} : vector<64x32xf32> to vector<32x8xf32>
      %77 = vector.shape_cast %69 : vector<32x8xf32> to vector<1x32x8xf32>
      %78 = vector.shape_cast %70 : vector<32x8xf32> to vector<1x32x8xf32>
      %79 = vector.shape_cast %71 : vector<32x8xf32> to vector<1x32x8xf32>
      %80 = vector.shape_cast %72 : vector<32x8xf32> to vector<1x32x8xf32>
      %81 = vector.shape_cast %73 : vector<32x8xf32> to vector<1x32x8xf32>
      %82 = vector.shape_cast %74 : vector<32x8xf32> to vector<1x32x8xf32>
      %83 = vector.shape_cast %75 : vector<32x8xf32> to vector<1x32x8xf32>
      %84 = vector.shape_cast %76 : vector<32x8xf32> to vector<1x32x8xf32>
      %85 = tpu.concatenate %77, %78, %79, %80, %81, %82, %83, %84 in 0 : vector<1x32x8xf32>, vector<1x32x8xf32>, vector<1x32x8xf32>, vector<1x32x8xf32>, vector<1x32x8xf32>, vector<1x32x8xf32>, vector<1x32x8xf32>, vector<1x32x8xf32> -> vector<8x32x8xf32>
      %86 = vector.extract_strided_slice %66 {offsets = [0, 0], sizes = [32, 8], strides = [1, 1]} : vector<64x32xf32> to vector<32x8xf32>
      %87 = vector.extract_strided_slice %66 {offsets = [32, 0], sizes = [32, 8], strides = [1, 1]} : vector<64x32xf32> to vector<32x8xf32>
      %88 = vector.extract_strided_slice %66 {offsets = [0, 8], sizes = [32, 8], strides = [1, 1]} : vector<64x32xf32> to vector<32x8xf32>
      %89 = vector.extract_strided_slice %66 {offsets = [32, 8], sizes = [32, 8], strides = [1, 1]} : vector<64x32xf32> to vector<32x8xf32>
      %90 = vector.extract_strided_slice %66 {offsets = [0, 16], sizes = [32, 8], strides = [1, 1]} : vector<64x32xf32> to vector<32x8xf32>
      %91 = vector.extract_strided_slice %66 {offsets = [32, 16], sizes = [32, 8], strides = [1, 1]} : vector<64x32xf32> to vector<32x8xf32>
      %92 = vector.extract_strided_slice %66 {offsets = [0, 24], sizes = [32, 8], strides = [1, 1]} : vector<64x32xf32> to vector<32x8xf32>
      %93 = vector.extract_strided_slice %66 {offsets = [32, 24], sizes = [32, 8], strides = [1, 1]} : vector<64x32xf32> to vector<32x8xf32>
      %94 = vector.shape_cast %86 : vector<32x8xf32> to vector<1x32x8xf32>
      %95 = vector.shape_cast %87 : vector<32x8xf32> to vector<1x32x8xf32>
      %96 = vector.shape_cast %88 : vector<32x8xf32> to vector<1x32x8xf32>
      %97 = vector.shape_cast %89 : vector<32x8xf32> to vector<1x32x8xf32>
      %98 = vector.shape_cast %90 : vector<32x8xf32> to vector<1x32x8xf32>
      %99 = vector.shape_cast %91 : vector<32x8xf32> to vector<1x32x8xf32>
      %100 = vector.shape_cast %92 : vector<32x8xf32> to vector<1x32x8xf32>
      %101 = vector.shape_cast %93 : vector<32x8xf32> to vector<1x32x8xf32>
      %102 = tpu.concatenate %94, %95, %96, %97, %98, %99, %100, %101 in 0 : vector<1x32x8xf32>, vector<1x32x8xf32>, vector<1x32x8xf32>, vector<1x32x8xf32>, vector<1x32x8xf32>, vector<1x32x8xf32>, vector<1x32x8xf32>, vector<1x32x8xf32> -> vector<8x32x8xf32>
      %103 = vector.extract_strided_slice %68 {offsets = [0, 0], sizes = [32, 8], strides = [1, 1]} : vector<64x32xf32> to vector<32x8xf32>
      %104 = vector.extract_strided_slice %68 {offsets = [32, 0], sizes = [32, 8], strides = [1, 1]} : vector<64x32xf32> to vector<32x8xf32>
      %105 = vector.extract_strided_slice %68 {offsets = [0, 8], sizes = [32, 8], strides = [1, 1]} : vector<64x32xf32> to vector<32x8xf32>
      %106 = vector.extract_strided_slice %68 {offsets = [32, 8], sizes = [32, 8], strides = [1, 1]} : vector<64x32xf32> to vector<32x8xf32>
      %107 = vector.extract_strided_slice %68 {offsets = [0, 16], sizes = [32, 8], strides = [1, 1]} : vector<64x32xf32> to vector<32x8xf32>
      %108 = vector.extract_strided_slice %68 {offsets = [32, 16], sizes = [32, 8], strides = [1, 1]} : vector<64x32xf32> to vector<32x8xf32>
      %109 = vector.extract_strided_slice %68 {offsets = [0, 24], sizes = [32, 8], strides = [1, 1]} : vector<64x32xf32> to vector<32x8xf32>
      %110 = vector.extract_strided_slice %68 {offsets = [32, 24], sizes = [32, 8], strides = [1, 1]} : vector<64x32xf32> to vector<32x8xf32>
      %111 = vector.shape_cast %103 : vector<32x8xf32> to vector<1x32x8xf32>
      %112 = vector.shape_cast %104 : vector<32x8xf32> to vector<1x32x8xf32>
      %113 = vector.shape_cast %105 : vector<32x8xf32> to vector<1x32x8xf32>
      %114 = vector.shape_cast %106 : vector<32x8xf32> to vector<1x32x8xf32>
      %115 = vector.shape_cast %107 : vector<32x8xf32> to vector<1x32x8xf32>
      %116 = vector.shape_cast %108 : vector<32x8xf32> to vector<1x32x8xf32>
      %117 = vector.shape_cast %109 : vector<32x8xf32> to vector<1x32x8xf32>
      %118 = vector.shape_cast %110 : vector<32x8xf32> to vector<1x32x8xf32>
      %119 = tpu.concatenate %111, %112, %113, %114, %115, %116, %117, %118 in 0 : vector<1x32x8xf32>, vector<1x32x8xf32>, vector<1x32x8xf32>, vector<1x32x8xf32>, vector<1x32x8xf32>, vector<1x32x8xf32>, vector<1x32x8xf32>, vector<1x32x8xf32> -> vector<8x32x8xf32>
      "tpu.trace_start"() <{level = 10 : i32, message = "ntc,nsc->nts"}> : () -> ()
      %cst_36 = arith.constant dense<0.000000e+00> : vector<8x32x32xf32>
      %120 = tpu.matmul %85, %102, %cst_36 {dimension_numbers = #tpu.dot_dimension_numbers<[2], [2], [1], [1], [0, 0, 0, 1, 1, 1], [0], [0]>} : vector<8x32x8xf32>, vector<8x32x8xf32>, vector<8x32x32xf32> -> vector<8x32x32xf32>
      "tpu.trace_stop"() : () -> ()
      %cst_37 = arith.constant 0.176776692 : f32
      %121 = vector.broadcast %cst_37 : f32 to vector<8x32x32xf32>
      %122 = arith.mulf %120, %121 : vector<8x32x32xf32>
      %123 = vector.shape_cast %5 : vector<32x32xf32> to vector<1x32x32xf32>
      %124 = vector.broadcast %123 : vector<1x32x32xf32> to vector<8x32x32xf32>
      %125 = arith.addf %122, %124 : vector<8x32x32xf32>
      %cst_38 = arith.constant dense<0xFF800000> : vector<8x32xf32>
      %126 = vector.multi_reduction <maximumf>, %125, %cst_38 [2] : vector<8x32x32xf32> to vector<8x32xf32>
      %127 = vector.shape_cast %126 : vector<8x32xf32> to vector<8x32x1xf32>
      %128 = vector.broadcast %127 : vector<8x32x1xf32> to vector<8x32x32xf32>
      %129 = arith.subf %125, %128 : vector<8x32x32xf32>
      %130 = math.exp %129 : vector<8x32x32xf32>
      %cst_39 = arith.constant dense<0.000000e+00> : vector<8x32xf32>
      %131 = vector.multi_reduction <add>, %130, %cst_39 [2] : vector<8x32x32xf32> to vector<8x32xf32>
      %132 = vector.shape_cast %131 : vector<8x32xf32> to vector<8x32x1xf32>
      %133 = vector.broadcast %132 : vector<8x32x1xf32> to vector<8x32x32xf32>
      %134 = arith.divf %130, %133 : vector<8x32x32xf32>
      "tpu.trace_start"() <{level = 10 : i32, message = "nts,nsc->ntc"}> : () -> ()
      %cst_40 = arith.constant dense<0.000000e+00> : vector<8x32x8xf32>
      %135 = tpu.matmul %134, %119, %cst_40 {dimension_numbers = #tpu.dot_dimension_numbers<[2], [1], [1], [2], [0, 0, 0, 1, 1, 2], [0], [0]>} : vector<8x32x32xf32>, vector<8x32x8xf32>, vector<8x32x8xf32> -> vector<8x32x8xf32>
      "tpu.trace_stop"() : () -> ()
      %136 = vector.extract_strided_slice %135 {offsets = [0, 0, 0], sizes = [1, 32, 8], strides = [1, 1, 1]} : vector<8x32x8xf32> to vector<1x32x8xf32>
      %137 = vector.shape_cast %136 : vector<1x32x8xf32> to vector<32x8xf32>
      %138 = vector.extract_strided_slice %135 {offsets = [1, 0, 0], sizes = [1, 32, 8], strides = [1, 1, 1]} : vector<8x32x8xf32> to vector<1x32x8xf32>
      %139 = vector.shape_cast %138 : vector<1x32x8xf32> to vector<32x8xf32>
      %140 = tpu.concatenate %137, %139 in 0 : vector<32x8xf32>, vector<32x8xf32> -> vector<64x8xf32>
      %141 = vector.extract_strided_slice %135 {offsets = [2, 0, 0], sizes = [1, 32, 8], strides = [1, 1, 1]} : vector<8x32x8xf32> to vector<1x32x8xf32>
      %142 = vector.shape_cast %141 : vector<1x32x8xf32> to vector<32x8xf32>
      %143 = vector.extract_strided_slice %135 {offsets = [3, 0, 0], sizes = [1, 32, 8], strides = [1, 1, 1]} : vector<8x32x8xf32> to vector<1x32x8xf32>
      %144 = vector.shape_cast %143 : vector<1x32x8xf32> to vector<32x8xf32>
      %145 = tpu.concatenate %142, %144 in 0 : vector<32x8xf32>, vector<32x8xf32> -> vector<64x8xf32>
      %146 = vector.extract_strided_slice %135 {offsets = [4, 0, 0], sizes = [1, 32, 8], strides = [1, 1, 1]} : vector<8x32x8xf32> to vector<1x32x8xf32>
      %147 = vector.shape_cast %146 : vector<1x32x8xf32> to vector<32x8xf32>
      %148 = vector.extract_strided_slice %135 {offsets = [5, 0, 0], sizes = [1, 32, 8], strides = [1, 1, 1]} : vector<8x32x8xf32> to vector<1x32x8xf32>
      %149 = vector.shape_cast %148 : vector<1x32x8xf32> to vector<32x8xf32>
      %150 = tpu.concatenate %147, %149 in 0 : vector<32x8xf32>, vector<32x8xf32> -> vector<64x8xf32>
      %151 = vector.extract_strided_slice %135 {offsets = [6, 0, 0], sizes = [1, 32, 8], strides = [1, 1, 1]} : vector<8x32x8xf32> to vector<1x32x8xf32>
      %152 = vector.shape_cast %151 : vector<1x32x8xf32> to vector<32x8xf32>
      %153 = vector.extract_strided_slice %135 {offsets = [7, 0, 0], sizes = [1, 32, 8], strides = [1, 1, 1]} : vector<8x32x8xf32> to vector<1x32x8xf32>
      %154 = vector.shape_cast %153 : vector<1x32x8xf32> to vector<32x8xf32>
      %155 = tpu.concatenate %152, %154 in 0 : vector<32x8xf32>, vector<32x8xf32> -> vector<64x8xf32>
      %156 = tpu.concatenate %140, %145, %150, %155 in 1 : vector<64x8xf32>, vector<64x8xf32>, vector<64x8xf32>, vector<64x8xf32> -> vector<64x32xf32>
      %c0_41 = arith.constant 0 : index
      %c0_42 = arith.constant 0 : index
      %157 = vector.load %arg7[%c0_41, %c0_42] : memref<32x32xf32, #tpu.memory_space<vmem>>, vector<32x32xf32>
      %cst_43 = arith.constant dense<0.000000e+00> : vector<64x32xf32>
      %158 = tpu.matmul %156, %157, %cst_43 {dimension_numbers = #tpu.dot_dimension_numbers<[1], [0], [0], [1], [0, 0, 1, 1], [], []>} : vector<64x32xf32>, vector<32x32xf32>, vector<64x32xf32> -> vector<64x32xf32>
      %c0_44 = arith.constant 0 : index
      %c0_45 = arith.constant 0 : index
      %159 = vector.load %arg8[%c0_44, %c0_45] : memref<1x32xf32, #tpu.memory_space<vmem>>, vector<1x32xf32>
      %160 = vector.broadcast %159 : vector<1x32xf32> to vector<64x32xf32>
      %161 = arith.addf %158, %160 : vector<64x32xf32>
      %162 = arith.addf %arg21, %161 : vector<64x32xf32>
      %c0_46 = arith.constant 0 : index
      %c0_47 = arith.constant 0 : index
      %163 = vector.load %arg9[%c0_46, %c0_47] : memref<1x32xf32, #tpu.memory_space<vmem>>, vector<1x32xf32>
      %c0_48 = arith.constant 0 : index
      %c0_49 = arith.constant 0 : index
      %164 = vector.load %arg10[%c0_48, %c0_49] : memref<1x32xf32, #tpu.memory_space<vmem>>, vector<1x32xf32>
      %cst_50 = arith.constant dense<0.000000e+00> : vector<64xf32>
      %165 = vector.multi_reduction <add>, %162, %cst_50 [1] : vector<64x32xf32> to vector<64xf32>
      %166 = vector.shape_cast %165 : vector<64xf32> to vector<64x1xf32>
      %cst_51 = arith.constant 3.200000e+01 : f32
      %167 = vector.broadcast %cst_51 : f32 to vector<64x1xf32>
      %168 = arith.divf %166, %167 : vector<64x1xf32>
      %169 = vector.broadcast %168 : vector<64x1xf32> to vector<64x32xf32>
      %170 = arith.subf %162, %169 : vector<64x32xf32>
      %171 = arith.mulf %170, %170 : vector<64x32xf32>
      %cst_52 = arith.constant dense<0.000000e+00> : vector<64xf32>
      %172 = vector.multi_reduction <add>, %171, %cst_52 [1] : vector<64x32xf32> to vector<64xf32>
      %173 = vector.shape_cast %172 : vector<64xf32> to vector<64x1xf32>
      %cst_53 = arith.constant 3.200000e+01 : f32
      %174 = vector.broadcast %cst_53 : f32 to vector<64x1xf32>
      %175 = arith.divf %173, %174 : vector<64x1xf32>
      %176 = vector.broadcast %168 : vector<64x1xf32> to vector<64x32xf32>
      %177 = arith.subf %162, %176 : vector<64x32xf32>
      %cst_54 = arith.constant 9.99999974E-6 : f32
      %178 = vector.broadcast %cst_54 : f32 to vector<64x1xf32>
      %179 = arith.addf %175, %178 : vector<64x1xf32>
      %180 = math.rsqrt %179 : vector<64x1xf32>
      %181 = vector.broadcast %180 : vector<64x1xf32> to vector<64x32xf32>
      %182 = arith.mulf %177, %181 : vector<64x32xf32>
      %183 = vector.broadcast %163 : vector<1x32xf32> to vector<64x32xf32>
      %184 = arith.mulf %182, %183 : vector<64x32xf32>
      %185 = vector.broadcast %164 : vector<1x32xf32> to vector<64x32xf32>
      %186 = arith.addf %184, %185 : vector<64x32xf32>
      %c0_55 = arith.constant 0 : index
      %c0_56 = arith.constant 0 : index
      %187 = vector.load %arg11[%c0_55, %c0_56] : memref<32x128xf32, #tpu.memory_space<vmem>>, vector<32x128xf32>
      %cst_57 = arith.constant dense<0.000000e+00> : vector<64x128xf32>
      %188 = tpu.matmul %186, %187, %cst_57 {dimension_numbers = #tpu.dot_dimension_numbers<[1], [0], [0], [1], [0, 0, 1, 1], [], []>} : vector<64x32xf32>, vector<32x128xf32>, vector<64x128xf32> -> vector<64x128xf32>
      %c0_58 = arith.constant 0 : index
      %c0_59 = arith.constant 0 : index
      %189 = vector.load %arg12[%c0_58, %c0_59] : memref<1x128xf32, #tpu.memory_space<vmem>>, vector<1x128xf32>
      %190 = vector.broadcast %189 : vector<1x128xf32> to vector<64x128xf32>
      %191 = arith.addf %188, %190 : vector<64x128xf32>
      %cst_60 = arith.constant 0.000000e+00 : f32
      %192 = vector.broadcast %cst_60 : f32 to vector<64x128xf32>
      %193 = arith.maximumf %191, %192 : vector<64x128xf32>
      %c0_61 = arith.constant 0 : index
      %c0_62 = arith.constant 0 : index
      %194 = vector.load %arg13[%c0_61, %c0_62] : memref<128x32xf32, #tpu.memory_space<vmem>>, vector<128x32xf32>
      %cst_63 = arith.constant dense<0.000000e+00> : vector<64x32xf32>
      %195 = tpu.matmul %193, %194, %cst_63 {dimension_numbers = #tpu.dot_dimension_numbers<[1], [0], [0], [1], [0, 0, 1, 1], [], []>} : vector<64x128xf32>, vector<128x32xf32>, vector<64x32xf32> -> vector<64x32xf32>
      %196 = arith.addf %162, %195 : vector<64x32xf32>
      %c0_64 = arith.constant 0 : index
      %c0_65 = arith.constant 0 : index
      %197 = vector.load %arg14[%c0_64, %c0_65] : memref<1x32xf32, #tpu.memory_space<vmem>>, vector<1x32xf32>
      %198 = vector.broadcast %197 : vector<1x32xf32> to vector<64x32xf32>
      %199 = arith.addf %196, %198 : vector<64x32xf32>
      scf.yield %199 : vector<64x32xf32>
    }
    %c0_2 = arith.constant 0 : index
    %c0_3 = arith.constant 0 : index
    %9 = vector.load %arg15[%c0_2, %c0_3] : memref<1x32xf32, #tpu.memory_space<vmem>>, vector<1x32xf32>
    %c0_4 = arith.constant 0 : index
    %c0_5 = arith.constant 0 : index
    %10 = vector.load %arg16[%c0_4, %c0_5] : memref<1x32xf32, #tpu.memory_space<vmem>>, vector<1x32xf32>
    %cst_6 = arith.constant dense<0.000000e+00> : vector<64xf32>
    %11 = vector.multi_reduction <add>, %8, %cst_6 [1] : vector<64x32xf32> to vector<64xf32>
    %12 = vector.shape_cast %11 : vector<64xf32> to vector<64x1xf32>
    %cst_7 = arith.constant 3.200000e+01 : f32
    %13 = vector.broadcast %cst_7 : f32 to vector<64x1xf32>
    %14 = arith.divf %12, %13 : vector<64x1xf32>
    %15 = vector.broadcast %14 : vector<64x1xf32> to vector<64x32xf32>
    %16 = arith.subf %8, %15 : vector<64x32xf32>
    %17 = arith.mulf %16, %16 : vector<64x32xf32>
    %cst_8 = arith.constant dense<0.000000e+00> : vector<64xf32>
    %18 = vector.multi_reduction <add>, %17, %cst_8 [1] : vector<64x32xf32> to vector<64xf32>
    %19 = vector.shape_cast %18 : vector<64xf32> to vector<64x1xf32>
    %cst_9 = arith.constant 3.200000e+01 : f32
    %20 = vector.broadcast %cst_9 : f32 to vector<64x1xf32>
    %21 = arith.divf %19, %20 : vector<64x1xf32>
    %22 = vector.broadcast %14 : vector<64x1xf32> to vector<64x32xf32>
    %23 = arith.subf %8, %22 : vector<64x32xf32>
    %cst_10 = arith.constant 9.99999974E-6 : f32
    %24 = vector.broadcast %cst_10 : f32 to vector<64x1xf32>
    %25 = arith.addf %21, %24 : vector<64x1xf32>
    %26 = math.rsqrt %25 : vector<64x1xf32>
    %27 = vector.broadcast %26 : vector<64x1xf32> to vector<64x32xf32>
    %28 = arith.mulf %23, %27 : vector<64x32xf32>
    %29 = vector.broadcast %9 : vector<1x32xf32> to vector<64x32xf32>
    %30 = arith.mulf %28, %29 : vector<64x32xf32>
    %31 = vector.broadcast %10 : vector<1x32xf32> to vector<64x32xf32>
    %32 = arith.addf %30, %31 : vector<64x32xf32>
    %c0_11 = arith.constant 0 : index
    %c0_12 = arith.constant 0 : index
    %33 = vector.load %arg17[%c0_11, %c0_12] : memref<32x128xf32, #tpu.memory_space<vmem>>, vector<32x128xf32>
    %cst_13 = arith.constant dense<0.000000e+00> : vector<64x128xf32>
    %34 = tpu.matmul %32, %33, %cst_13 {dimension_numbers = #tpu.dot_dimension_numbers<[1], [0], [0], [1], [0, 0, 1, 1], [], []>} : vector<64x32xf32>, vector<32x128xf32>, vector<64x128xf32> -> vector<64x128xf32>
    %c0_14 = arith.constant 0 : index
    %c0_15 = arith.constant 0 : index
    %35 = vector.load %arg18[%c0_14, %c0_15] : memref<1x128xf32, #tpu.memory_space<vmem>>, vector<1x128xf32>
    %36 = vector.broadcast %35 : vector<1x128xf32> to vector<64x128xf32>
    %37 = arith.addf %34, %36 : vector<64x128xf32>
    %c0_16 = arith.constant 0 : index
    %c0_17 = arith.constant 0 : index
    %38 = vector.load %arg19[%c0_16, %c0_17] : memref<64x128xf32, #tpu.memory_space<vmem>>, vector<64x128xf32>
    tpu.vector_store %arg19[%c0_16, %c0_17], %37 {strides = array<i32>} : memref<64x128xf32, #tpu.memory_space<vmem>>, vector<64x128xf32>,
    return
  }
  func.func @transform_0(%arg0: i32) -> (i32, i32) {
    %c0_i32 = arith.constant 0 : i32
    %c0_i32_0 = arith.constant 0 : i32
    %c0_i32_1 = arith.constant 0 : i32
    return %c0_i32, %c0_i32_0 : i32, i32
  }
  func.func @transform_1(%arg0: i32) -> (i32, i32) {
    %c0_i32 = arith.constant 0 : i32
    %c0_i32_0 = arith.constant 0 : i32
    %c0_i32_1 = arith.constant 0 : i32
    return %c0_i32, %c0_i32_0 : i32, i32
  }
  func.func @transform_2(%arg0: i32) -> (i32, i32) {
    %c0_i32 = arith.constant 0 : i32
    %c0_i32_0 = arith.constant 0 : i32
    %c0_i32_1 = arith.constant 0 : i32
    return %c0_i32, %c0_i32_0 : i32, i32
  }
  func.func @transform_3(%arg0: i32) -> (i32, i32) {
    %c0_i32 = arith.constant 0 : i32
    %c0_i32_0 = arith.constant 0 : i32
    %c0_i32_1 = arith.constant 0 : i32
    return %c0_i32, %c0_i32_0 : i32, i32
  }
  func.func @transform_4(%arg0: i32) -> (i32, i32) {
    %c0_i32 = arith.constant 0 : i32
    %c0_i32_0 = arith.constant 0 : i32
    %c0_i32_1 = arith.constant 0 : i32
    return %c0_i32, %c0_i32_0 : i32, i32
  }
  func.func @transform_5(%arg0: i32) -> (i32, i32) {
    %c0_i32 = arith.constant 0 : i32
    %c0_i32_0 = arith.constant 0 : i32
    %c0_i32_1 = arith.constant 0 : i32
    return %c0_i32, %c0_i32_0 : i32, i32
  }
  func.func @transform_6(%arg0: i32) -> (i32, i32) {
    %c0_i32 = arith.constant 0 : i32
    %c0_i32_0 = arith.constant 0 : i32
    %c0_i32_1 = arith.constant 0 : i32
    return %c0_i32, %c0_i32_0 : i32, i32
  }
  func.func @transform_7(%arg0: i32) -> (i32, i32) {
    %c0_i32 = arith.constant 0 : i32
    %c0_i32_0 = arith.constant 0 : i32
    %c0_i32_1 = arith.constant 0 : i32
    return %c0_i32, %c0_i32_0 : i32, i32
  }
  func.func @transform_8(%arg0: i32) -> (i32, i32) {
    %c0_i32 = arith.constant 0 : i32
    %c0_i32_0 = arith.constant 0 : i32
    %c0_i32_1 = arith.constant 0 : i32
    return %c0_i32, %c0_i32_0 : i32, i32
  }
  func.func @transform_9(%arg0: i32) -> (i32, i32) {
    %c0_i32 = arith.constant 0 : i32
    %c0_i32_0 = arith.constant 0 : i32
    %c0_i32_1 = arith.constant 0 : i32
    return %c0_i32, %c0_i32_0 : i32, i32
  }
  func.func @transform_10(%arg0: i32) -> (i32, i32) {
    %c0_i32 = arith.constant 0 : i32
    %c0_i32_0 = arith.constant 0 : i32
    %c0_i32_1 = arith.constant 0 : i32
    return %c0_i32, %c0_i32_0 : i32, i32
  }
  func.func @transform_11(%arg0: i32) -> (i32, i32) {
    %c0_i32 = arith.constant 0 : i32
    %c0_i32_0 = arith.constant 0 : i32
    %c0_i32_1 = arith.constant 0 : i32
    return %c0_i32, %c0_i32_0 : i32, i32
  }
  func.func @transform_12(%arg0: i32) -> (i32, i32) {
    %c0_i32 = arith.constant 0 : i32
    %c0_i32_0 = arith.constant 0 : i32
    %c0_i32_1 = arith.constant 0 : i32
    return %c0_i32, %c0_i32_0 : i32, i32
  }
  func.func @transform_13(%arg0: i32) -> (i32, i32) {
    %c0_i32 = arith.constant 0 : i32
    %c0_i32_0 = arith.constant 0 : i32
    %c0_i32_1 = arith.constant 0 : i32
    return %c0_i32, %c0_i32_0 : i32, i32
  }
  func.func @transform_14(%arg0: i32) -> (i32, i32) {
    %c0_i32 = arith.constant 0 : i32
    %c0_i32_0 = arith.constant 0 : i32
    %c0_i32_1 = arith.constant 0 : i32
    return %c0_i32, %c0_i32_0 : i32, i32
  }
  func.func @transform_15(%arg0: i32) -> (i32, i32) {
    %c0_i32 = arith.constant 0 : i32
    %c0_i32_0 = arith.constant 0 : i32
    %c0_i32_1 = arith.constant 0 : i32
    return %c0_i32, %c0_i32_0 : i32, i32
  }
  func.func @transform_16(%arg0: i32) -> (i32, i32) {
    %c0_i32 = arith.constant 0 : i32
    %c0_i32_0 = arith.constant 0 : i32
    %c0_i32_1 = arith.constant 0 : i32
    return %c0_i32, %c0_i32_0 : i32, i32
  }
  func.func @transform_17(%arg0: i32) -> (i32, i32) {
    %c0_i32 = arith.constant 0 : i32
    %c0_i32_0 = arith.constant 0 : i32
    %c0_i32_1 = arith.constant 0 : i32
    return %c0_i32, %c0_i32_0 : i32, i32
  }
  func.func @transform_18(%arg0: i32) -> (i32, i32) {
    %c0_i32 = arith.constant 0 : i32
    %c0_i32_0 = arith.constant 0 : i32
    %c0_i32_1 = arith.constant 0 : i32
    return %c0_i32, %c0_i32_0 : i32, i32
  }
}

</mosaic_0001>

<llo_original>
// kernel: tpu_custom_call.1
$region0: #{tpu_custom_call.1}
  #allocation0 [shape = 'u32[]', space=smem, size = 0x4, offset = 0x4, fixed_abs, tag = 'smem constant byte address 0x4 - core index']
  #allocation1 [shape = 'u32[144,128]{1,0:T(1,128)}', space=vmem, size = 0x12000, scoped, tag = 'internal scratch']
  %s0 = inlined_call_operand.vmem [shape: f32[64,32], index: 0, kind: input, shape index: {}]
  %s1 = inlined_call_operand.vmem [shape: f32[1,32], index: 1, kind: input, shape index: {}]
  %s2 = inlined_call_operand.vmem [shape: f32[1,32], index: 2, kind: input, shape index: {}]
  %s3 = inlined_call_operand.vmem [shape: f32[32,32], index: 3, kind: input, shape index: {}]
  %s4 = inlined_call_operand.vmem [shape: f32[32,32], index: 4, kind: input, shape index: {}]
  %s5 = inlined_call_operand.vmem [shape: f32[32,32], index: 5, kind: input, shape index: {}]
  %s6 = inlined_call_operand.vmem [shape: f32[32,32], index: 6, kind: input, shape index: {}]
  %s7 = inlined_call_operand.vmem [shape: f32[1,32], index: 7, kind: input, shape index: {}]
  %s8 = inlined_call_operand.vmem [shape: f32[1,32], index: 8, kind: input, shape index: {}]
  %s9 = inlined_call_operand.vmem [shape: f32[1,32], index: 9, kind: input, shape index: {}]
  %s10 = inlined_call_operand.vmem [shape: f32[32,128], index: 10, kind: input, shape index: {}]
  %s11 = inlined_call_operand.vmem [shape: f32[1,128], index: 11, kind: input, shape index: {}]
  %s12 = inlined_call_operand.vmem [shape: f32[128,32], index: 12, kind: input, shape index: {}]
  %s13 = inlined_call_operand.vmem [shape: f32[1,32], index: 13, kind: input, shape index: {}]
  %s14 = inlined_call_operand.vmem [shape: f32[1,32], index: 14, kind: input, shape index: {}]
  %s15 = inlined_call_operand.vmem [shape: f32[1,32], index: 15, kind: input, shape index: {}]
  %s16 = inlined_call_operand.vmem [shape: f32[32,128], index: 16, kind: input, shape index: {}]
  %s17 = inlined_call_operand.vmem [shape: f32[1,128], index: 17, kind: input, shape index: {}]
  %s18 = inlined_call_operand.hbm [shape: f32[64,128], index: 18, kind: output, shape index: {}]
  %s19 = sld [smem:[#allocation0]]
  $region89: #{tpu_custom_call.1} parent=0
    _
  %s21 = ssub.s32 1, %s19
  %s22 = scalar_select 0, %s21, %s19
  $region1: #{tpu_custom_call.1} parent=0
    #allocation2 [shape = 'u8[32768]{0}', space=vmem, size = 0x8000, scoped, tag = 'output window, operand 0, single buffered']
    #allocation3 [shape = 's32[1]{0}', space=sflag, size = 0x4, scoped, tag = 'scoped memory for tpu_custom_call.1']
    %23 = vsyncpa [#allocation3], 0
    // Predicated region
    $region2: #{tpu_custom_call.1} parent=1 // pred_check
      _
    $region3: #{tpu_custom_call.1} parent=1 // pred_check_branch
      %25 = sbr.rel (0) target = $region5
    $region4: #{tpu_custom_call.1} parent=1 // pred_region
      _
    $region5: #{tpu_custom_call.1} parent=1 // pred_fallthru
      _
    // Predicated region
    $region6: #{tpu_custom_call.1} parent=1 // pred_check
      _
    $region7: #{tpu_custom_call.1} parent=1 // pred_check_branch
      %27 = sbr.rel (0) target = $region9
    $region8: #{tpu_custom_call.1} parent=1 // pred_region
      _
    $region9: #{tpu_custom_call.1} parent=1 // pred_fallthru
      _
    // Predicated region
    $region10: #{tpu_custom_call.1} parent=1 // pred_check
      _
    $region11: #{tpu_custom_call.1} parent=1 // pred_check_branch
      %29 = sbr.rel (0) target = $region13
    $region12: #{tpu_custom_call.1} parent=1 // pred_region
      _
    $region13: #{tpu_custom_call.1} parent=1 // pred_fallthru
      _
    // Predicated region
    $region14: #{tpu_custom_call.1} parent=1 // pred_check
      _
    $region15: #{tpu_custom_call.1} parent=1 // pred_check_branch
      %31 = sbr.rel (0) target = $region17
    $region16: #{tpu_custom_call.1} parent=1 // pred_region
      _
    $region17: #{tpu_custom_call.1} parent=1 // pred_fallthru
      _
    // Predicated region
    $region18: #{tpu_custom_call.1} parent=1 // pred_check
      _
    $region19: #{tpu_custom_call.1} parent=1 // pred_check_branch
      %33 = sbr.rel (0) target = $region21
    $region20: #{tpu_custom_call.1} parent=1 // pred_region
      _
    $region21: #{tpu_custom_call.1} parent=1 // pred_fallthru
      _
    // Predicated region
    $region22: #{tpu_custom_call.1} parent=1 // pred_check
      _
    $region23: #{tpu_custom_call.1} parent=1 // pred_check_branch
      %35 = sbr.rel (0) target = $region25
    $region24: #{tpu_custom_call.1} parent=1 // pred_region
      _
    $region25: #{tpu_custom_call.1} parent=1 // pred_fallthru
      _
    // Predicated region
    $region26: #{tpu_custom_call.1} parent=1 // pred_check
      _
    $region27: #{tpu_custom_call.1} parent=1 // pred_check_branch
      %37 = sbr.rel (0) target = $region29
    $region28: #{tpu_custom_call.1} parent=1 // pred_region
      _
    $region29: #{tpu_custom_call.1} parent=1 // pred_fallthru
      _
    // Predicated region
    $region30: #{tpu_custom_call.1} parent=1 // pred_check
      _
    $region31: #{tpu_custom_call.1} parent=1 // pred_check_branch
      %39 = sbr.rel (0) target = $region33
    $region32: #{tpu_custom_call.1} parent=1 // pred_region
      _
    $region33: #{tpu_custom_call.1} parent=1 // pred_fallthru
      _
    // Predicated region
    $region34: #{tpu_custom_call.1} parent=1 // pred_check
      _
    $region35: #{tpu_custom_call.1} parent=1 // pred_check_branch
      %41 = sbr.rel (0) target = $region37
    $region36: #{tpu_custom_call.1} parent=1 // pred_region
      _
    $region37: #{tpu_custom_call.1} parent=1 // pred_fallthru
      _
    // Predicated region
    $region38: #{tpu_custom_call.1} parent=1 // pred_check
      _
    $region39: #{tpu_custom_call.1} parent=1 // pred_check_branch
      %43 = sbr.rel (0) target = $region41
    $region40: #{tpu_custom_call.1} parent=1 // pred_region
      _
    $region41: #{tpu_custom_call.1} parent=1 // pred_fallthru
      _
    // Predicated region
    $region42: #{tpu_custom_call.1} parent=1 // pred_check
      _
    $region43: #{tpu_custom_call.1} parent=1 // pred_check_branch
      %45 = sbr.rel (0) target = $region45
    $region44: #{tpu_custom_call.1} parent=1 // pred_region
      _
    $region45: #{tpu_custom_call.1} parent=1 // pred_fallthru
      _
    // Predicated region
    $region46: #{tpu_custom_call.1} parent=1 // pred_check
      _
    $region47: #{tpu_custom_call.1} parent=1 // pred_check_branch
      %47 = sbr.rel (0) target = $region49
    $region48: #{tpu_custom_call.1} parent=1 // pred_region
      _
    $region49: #{tpu_custom_call.1} parent=1 // pred_fallthru
      _
    // Predicated region
    $region50: #{tpu_custom_call.1} parent=1 // pred_check
      _
    $region51: #{tpu_custom_call.1} parent=1 // pred_check_branch
      %49 = sbr.rel (0) target = $region53
    $region52: #{tpu_custom_call.1} parent=1 // pred_region
      _
    $region53: #{tpu_custom_call.1} parent=1 // pred_fallthru
      _
    // Predicated region
    $region54: #{tpu_custom_call.1} parent=1 // pred_check
      _
    $region55: #{tpu_custom_call.1} parent=1 // pred_check_branch
      %51 = sbr.rel (0) target = $region57
    $region56: #{tpu_custom_call.1} parent=1 // pred_region
      _
    $region57: #{tpu_custom_call.1} parent=1 // pred_fallthru
      _
    // Predicated region
    $region58: #{tpu_custom_call.1} parent=1 // pred_check
      _
    $region59: #{tpu_custom_call.1} parent=1 // pred_check_branch
      %53 = sbr.rel (0) target = $region61
    $region60: #{tpu_custom_call.1} parent=1 // pred_region
      _
    $region61: #{tpu_custom_call.1} parent=1 // pred_fallthru
      _
    // Predicated region
    $region62: #{tpu_custom_call.1} parent=1 // pred_check
      _
    $region63: #{tpu_custom_call.1} parent=1 // pred_check_branch
      %55 = sbr.rel (0) target = $region65
    $region64: #{tpu_custom_call.1} parent=1 // pred_region
      _
    $region65: #{tpu_custom_call.1} parent=1 // pred_fallthru
      _
    // Predicated region
    $region66: #{tpu_custom_call.1} parent=1 // pred_check
      _
    $region67: #{tpu_custom_call.1} parent=1 // pred_check_branch
      %57 = sbr.rel (0) target = $region69
    $region68: #{tpu_custom_call.1} parent=1 // pred_region
      _
    $region69: #{tpu_custom_call.1} parent=1 // pred_fallthru
      _
    // Predicated region
    $region70: #{tpu_custom_call.1} parent=1 // pred_check
      _
    $region71: #{tpu_custom_call.1} parent=1 // pred_check_branch
      %59 = sbr.rel (0) target = $region73
    $region72: #{tpu_custom_call.1} parent=1 // pred_region
      _
    $region73: #{tpu_custom_call.1} parent=1 // pred_fallthru
      _
    %v60 = vlaneseq
    %v61 = vshrl.u32 %v60, 7
    %v62 = vadd.s32 %v61, 8
    %v63 = vadd.s32 %v61, 16
    %v64 = vadd.s32 %v61, 24
    %v65 = vlaneseq
    %v66 = vand.u32 %v65, 127
    %vm67 = vcmp.ge.s32.totalorder %v61, %v66
    %vm68 = vcmp.ge.s32.totalorder %v62, %v66
    %vm69 = vcmp.ge.s32.totalorder %v63, %v66
    %vm70 = vcmp.ge.s32.totalorder %v64, %v66
    %v71 = vsel %vm67, 0.0, -1e+30
    %v72 = vsel %vm68, 0.0, -1e+30
    %v73 = vsel %vm69, 0.0, -1e+30
    %v74 = vsel %vm70, 0.0, -1e+30
    %v75 = vld [vmem:[%s0] sm:$0xff]
    %v76 = vld [vmem:[%s0 + $0x8] sm:$0xff]
    %v77 = vld [vmem:[%s0 + $0x10] sm:$0xff]
    %v78 = vld [vmem:[%s0 + $0x18] sm:$0xff]
    %v79 = vld [vmem:[%s0 + $0x20] sm:$0xff]
    %v80 = vld [vmem:[%s0 + $0x28] sm:$0xff]
    %v81 = vld [vmem:[%s0 + $0x30] sm:$0xff]
    %v82 = vld [vmem:[%s0 + $0x38] sm:$0xff]
    loop: start=0, step=1, limit=6
    $region74: #{tpu_custom_call.1} parent=1 // loop_pre_header
      _
    $region75: #{tpu_custom_call.1} parent=1 // loop_header
      %s84 = sphi 0, %s88
      %p85 = scmp.ge.s32.totalorder %s84, 6
      %v89 = vphi %v75, %v3465
      %v90 = vphi %v76, %v3466
      %v91 = vphi %v77, %v3467
      %v92 = vphi %v78, %v3468
      %v93 = vphi %v79, %v3469
      %v94 = vphi %v80, %v3470
      %v95 = vphi %v81, %v3471
      %v96 = vphi %v82, %v3472
    $region76: #{tpu_custom_call.1} parent=1 // loop_header_branch
      %87 = sbr.rel (%p85) target = $region80
    $region77: #{tpu_custom_call.1} parent=1 // loop_body
      %v97 = vld [vmem:[%s1] sm:$0x1]
      %v98 = vld [vmem:[%s2] sm:$0x1]
      %vm99 = vcmask 261120
      %v100 = vsel %vm99, %v89, 0.0
      %101 = vadd.xlane.f32.xlu0 %v100
      %v102 = vpop.xlane.xlu0 %101
      %v103 = vsel %vm99, %v90, 0.0
      %104 = vadd.xlane.f32.xlu0 %v103
      %v105 = vpop.xlane.xlu0 %104
      %v106 = vsel %vm99, %v91, 0.0
      %107 = vadd.xlane.f32.xlu0 %v106
      %v108 = vpop.xlane.xlu0 %107
      %v109 = vsel %vm99, %v92, 0.0
      %110 = vadd.xlane.f32.xlu0 %v109
      %v111 = vpop.xlane.xlu0 %110
      %v112 = vsel %vm99, %v93, 0.0
      %113 = vadd.xlane.f32.xlu0 %v112
      %v114 = vpop.xlane.xlu0 %113
      %v115 = vsel %vm99, %v94, 0.0
      %116 = vadd.xlane.f32.xlu0 %v115
      %v117 = vpop.xlane.xlu0 %116
      %v118 = vsel %vm99, %v95, 0.0
      %119 = vadd.xlane.f32.xlu0 %v118
      %v120 = vpop.xlane.xlu0 %119
      %v121 = vsel %vm99, %v96, 0.0
      %122 = vadd.xlane.f32.xlu0 %v121
      %v123 = vpop.xlane.xlu0 %122
      %v124 = vrcp.pop 32.0
      %v125 = vmul.f32 %v102, %v124
      %v126 = vmul.f32 %v105, %v124
      %v127 = vmul.f32 %v108, %v124
      %v128 = vmul.f32 %v111, %v124
      %v129 = vmul.f32 %v114, %v124
      %v130 = vmul.f32 %v117, %v124
      %v131 = vmul.f32 %v120, %v124
      %v132 = vmul.f32 %v123, %v124
      %v133 = vsub.f32 %v89, %v125
      %v134 = vsub.f32 %v90, %v126
      %v135 = vsub.f32 %v91, %v127
      %v136 = vsub.f32 %v92, %v128
      %v137 = vsub.f32 %v93, %v129
      %v138 = vsub.f32 %v94, %v130
      %v139 = vsub.f32 %v95, %v131
      %v140 = vsub.f32 %v96, %v132
      %v141 = vmul.f32 %v133, %v133
      %v142 = vmul.f32 %v134, %v134
      %v143 = vmul.f32 %v135, %v135
      %v144 = vmul.f32 %v136, %v136
      %v145 = vmul.f32 %v137, %v137
      %v146 = vmul.f32 %v138, %v138
      %v147 = vmul.f32 %v139, %v139
      %v148 = vmul.f32 %v140, %v140
      %v149 = vsel %vm99, %v141, 0.0
      %150 = vadd.xlane.f32.xlu0 %v149
      %v151 = vpop.xlane.xlu0 %150
      %v152 = vsel %vm99, %v142, 0.0
      %153 = vadd.xlane.f32.xlu0 %v152
      %v154 = vpop.xlane.xlu0 %153
      %v155 = vsel %vm99, %v143, 0.0
      %156 = vadd.xlane.f32.xlu0 %v155
      %v157 = vpop.xlane.xlu0 %156
      %v158 = vsel %vm99, %v144, 0.0
      %159 = vadd.xlane.f32.xlu0 %v158
      %v160 = vpop.xlane.xlu0 %159
      %v161 = vsel %vm99, %v145, 0.0
      %162 = vadd.xlane.f32.xlu0 %v161
      %v163 = vpop.xlane.xlu0 %162
      %v164 = vsel %vm99, %v146, 0.0
      %165 = vadd.xlane.f32.xlu0 %v164
      %v166 = vpop.xlane.xlu0 %165
      %v167 = vsel %vm99, %v147, 0.0
      %168 = vadd.xlane.f32.xlu0 %v167
      %v169 = vpop.xlane.xlu0 %168
      %v170 = vsel %vm99, %v148, 0.0
      %171 = vadd.xlane.f32.xlu0 %v170
      %v172 = vpop.xlane.xlu0 %171
      %v173 = vmul.f32 %v151, %v124
      %v174 = vmul.f32 %v154, %v124
      %v175 = vmul.f32 %v157, %v124
      %v176 = vmul.f32 %v160, %v124
      %v177 = vmul.f32 %v163, %v124
      %v178 = vmul.f32 %v166, %v124
      %v179 = vmul.f32 %v169, %v124
      %v180 = vmul.f32 %v172, %v124
      %v181 = vadd.f32 %v173, 1e-05
      %v182 = vadd.f32 %v174, 1e-05
      %v183 = vadd.f32 %v175, 1e-05
      %v184 = vadd.f32 %v176, 1e-05
      %v185 = vadd.f32 %v177, 1e-05
      %v186 = vadd.f32 %v178, 1e-05
      %v187 = vadd.f32 %v179, 1e-05
      %v188 = vadd.f32 %v180, 1e-05
      %v189 = vrsqrt.pop %v181
      %v190 = vrsqrt.pop %v182
      %v191 = vrsqrt.pop %v183
      %v192 = vrsqrt.pop %v184
      %v193 = vrsqrt.pop %v185
      %v194 = vrsqrt.pop %v186
      %v195 = vrsqrt.pop %v187
      %v196 = vrsqrt.pop %v188
      %v197 = vmul.f32 %v133, %v189
      %v198 = vmul.f32 %v134, %v190
      %v199 = vmul.f32 %v135, %v191
      %v200 = vmul.f32 %v136, %v192
      %v201 = vmul.f32 %v137, %v193
      %v202 = vmul.f32 %v138, %v194
      %v203 = vmul.f32 %v139, %v195
      %v204 = vmul.f32 %v140, %v196
      %v206 = vlaneseq
      %v207 = vshrl.u32 %v206, 7
      %v208 = vsub.s32 0, %v207
      %v209 = vrot.slane %v97, %v208
      %v211 = vmul.f32 %v197, %v209
      %v212 = vmul.f32 %v198, %v209
      %v213 = vmul.f32 %v199, %v209
      %v214 = vmul.f32 %v200, %v209
      %v215 = vmul.f32 %v201, %v209
      %v216 = vmul.f32 %v202, %v209
      %v217 = vmul.f32 %v203, %v209
      %v218 = vmul.f32 %v204, %v209
      %v220 = vlaneseq
      %v221 = vshrl.u32 %v220, 7
      %v222 = vsub.s32 0, %v221
      %v223 = vrot.slane %v98, %v222
      %v225 = vadd.f32 %v211, %v223
      %v226 = vadd.f32 %v212, %v223
      %v227 = vadd.f32 %v213, %v223
      %v228 = vadd.f32 %v214, %v223
      %v229 = vadd.f32 %v215, %v223
      %v230 = vadd.f32 %v216, %v223
      %v231 = vadd.f32 %v217, %v223
      %v232 = vadd.f32 %v218, %v223
      %v233 = vld [vmem:[%s3] sm:$0xff]
      %v234 = vld [vmem:[%s3 + $0x8] sm:$0xff]
      %v235 = vld [vmem:[%s3 + $0x10] sm:$0xff]
      %v236 = vld [vmem:[%s3 + $0x18] sm:$0xff]
      %v238 = vsel %vm99, %v225, 0
      %v241 = vsel %vm99, %v226, 0
      %v244 = vsel %vm99, %v227, 0
      %v247 = vsel %vm99, %v228, 0
      %v250 = vsel %vm99, %v229, 0
      %v253 = vsel %vm99, %v230, 0
      %v256 = vsel %vm99, %v231, 0
      %v259 = vsel %vm99, %v232, 0
      %261 = vmatprep.subr.mxu0 0.0
      %262 = vmatpush1.msra.mxu0 0.0
      %263 = vmatprep.subr.mxu0 0.0
      %264 = vmatpush1.msra.mxu0 0.0
      %265 = vmatprep.subr.mxu0 0.0
      %266 = vmatpush1.msra.mxu0 0.0
      %267 = vmatprep.subr.mxu0 0.0
      %268 = vmatpush1.msra.mxu0 0.0
      %269 = vmatprep.subr.mxu0 0.0
      %270 = vmatpush1.msra.mxu0 0.0
      %271 = vmatprep.subr.mxu0 0.0
      %272 = vmatpush1.msra.mxu0 0.0
      %273 = vmatprep.subr.mxu0 0.0
      %274 = vmatpush1.msra.mxu0 0.0
      %275 = vmatprep.subr.mxu0 0.0
      %276 = vmatpush1.msra.mxu0 0.0
      %277 = vmatprep.subr.mxu0 0.0
      %278 = vmatpush1.msra.mxu0 0.0
      %279 = vmatprep.subr.mxu0 0.0
      %280 = vmatpush1.msra.mxu0 0.0
      %281 = vmatprep.subr.mxu0 0.0
      %282 = vmatpush1.msra.mxu0 0.0
      %283 = vmatprep.subr.mxu0 0.0
      %284 = vmatpush1.msra.mxu0 0.0
      %285 = vmatprep.subr.mxu0 0.0
      %286 = vmatpush1.msra.mxu0 %v236
      %287 = vmatprep.subr.mxu0 0.0
      %288 = vmatpush1.msra.mxu0 %v235
      %289 = vmatprep.subr.mxu0 0.0
      %290 = vmatpush1.msra.mxu0 %v234
      %291 = vmatprep.subr.mxu0 0.0
      %292 = vmatpush1.msra.mxu0 %v233
      %293 = vmatprep.subr.mxu0 0.0
      %294 = vmatpush2.msra.mxu0 0.0
      %295 = vmatprep.subr.mxu0 0.0
      %296 = vmatpush2.msra.mxu0 0.0
      %297 = vmatprep.subr.mxu0 0.0
      %298 = vmatpush2.msra.mxu0 0.0
      %299 = vmatprep.subr.mxu0 0.0
      %300 = vmatpush2.msra.mxu0 0.0
      %301 = vmatprep.subr.mxu0 0.0
      %302 = vmatpush2.msra.mxu0 0.0
      %303 = vmatprep.subr.mxu0 0.0
      %304 = vmatpush2.msra.mxu0 0.0
      %305 = vmatprep.subr.mxu0 0.0
      %306 = vmatpush2.msra.mxu0 0.0
      %307 = vmatprep.subr.mxu0 0.0
      %308 = vmatpush2.msra.mxu0 0.0
      %309 = vmatprep.subr.mxu0 0.0
      %310 = vmatpush2.msra.mxu0 0.0
      %311 = vmatprep.subr.mxu0 0.0
      %312 = vmatpush2.msra.mxu0 0.0
      %313 = vmatprep.subr.mxu0 0.0
      %314 = vmatpush2.msra.mxu0 0.0
      %315 = vmatprep.subr.mxu0 0.0
      %316 = vmatpush2.msra.mxu0 0.0
      %317 = vmatprep.subr.mxu0 0.0
      %318 = vmatpush2.msra.mxu0 0.0
      %319 = vmatprep.subr.mxu0 0.0
      %320 = vmatpush2.msra.mxu0 0.0
      %321 = vmatprep.subr.mxu0 0.0
      %322 = vmatpush2.msra.mxu0 0.0
      %323 = vmatprep.subr.mxu0 0.0
      %324 = vmatpush2.msra.mxu0 0.0
      %325 = vmatprep.mubr.f32.mxu0 0.0
      %326 = vmatmul.mubr.f32.gmra.mxu0 %v238
      %v327 = vpop.f32.mrf.mxu0
      %v328 = vadd.f32 0.0, %v327
      %v329 = vpop.f32.mrf.mxu0
      %330 = vmatprep.mubr.f32.mxu0 0.0
      %331 = vmatmul.mubr.f32.gmra.mxu0 %v241
      %v332 = vpop.f32.mrf.mxu0
      %v333 = vadd.f32 0.0, %v332
      %v334 = vpop.f32.mrf.mxu0
      %335 = vmatprep.mubr.f32.mxu0 0.0
      %336 = vmatmul.mubr.f32.gmra.mxu0 %v244
      %v337 = vpop.f32.mrf.mxu0
      %v338 = vadd.f32 0.0, %v337
      %v339 = vpop.f32.mrf.mxu0
      %340 = vmatprep.mubr.f32.mxu0 0.0
      %341 = vmatmul.mubr.f32.gmra.mxu0 %v247
      %v342 = vpop.f32.mrf.mxu0
      %v343 = vadd.f32 0.0, %v342
      %v344 = vpop.f32.mrf.mxu0
      %345 = vmatprep.mubr.f32.mxu0 0.0
      %346 = vmatmul.mubr.f32.gmra.mxu0 %v250
      %v347 = vpop.f32.mrf.mxu0
      %v348 = vadd.f32 0.0, %v347
      %v349 = vpop.f32.mrf.mxu0
      %350 = vmatprep.mubr.f32.mxu0 0.0
      %351 = vmatmul.mubr.f32.gmra.mxu0 %v253
      %v352 = vpop.f32.mrf.mxu0
      %v353 = vadd.f32 0.0, %v352
      %v354 = vpop.f32.mrf.mxu0
      %355 = vmatprep.mubr.f32.mxu0 0.0
      %356 = vmatmul.mubr.f32.gmra.mxu0 %v256
      %v357 = vpop.f32.mrf.mxu0
      %v358 = vadd.f32 0.0, %v357
      %v359 = vpop.f32.mrf.mxu0
      %360 = vmatprep.mubr.f32.mxu0 0.0
      %361 = vmatmul.mubr.f32.gmra.mxu0 %v259
      %v362 = vpop.f32.mrf.mxu0
      %v363 = vadd.f32 0.0, %v362
      %v364 = vpop.f32.mrf.mxu0
      %365 = vdwg.mxu0
      %v366 = vld [vmem:[%s4] sm:$0xff]
      %v367 = vld [vmem:[%s4 + $0x8] sm:$0xff]
      %v368 = vld [vmem:[%s4 + $0x10] sm:$0xff]
      %v369 = vld [vmem:[%s4 + $0x18] sm:$0xff]
      %370 = vmatprep.subr.mxu0 0.0
      %371 = vmatpush1.msra.mxu0 0.0
      %372 = vmatprep.subr.mxu0 0.0
      %373 = vmatpush1.msra.mxu0 0.0
      %374 = vmatprep.subr.mxu0 0.0
      %375 = vmatpush1.msra.mxu0 0.0
      %376 = vmatprep.subr.mxu0 0.0
      %377 = vmatpush1.msra.mxu0 0.0
      %378 = vmatprep.subr.mxu0 0.0
      %379 = vmatpush1.msra.mxu0 0.0
      %380 = vmatprep.subr.mxu0 0.0
      %381 = vmatpush1.msra.mxu0 0.0
      %382 = vmatprep.subr.mxu0 0.0
      %383 = vmatpush1.msra.mxu0 0.0
      %384 = vmatprep.subr.mxu0 0.0
      %385 = vmatpush1.msra.mxu0 0.0
      %386 = vmatprep.subr.mxu0 0.0
      %387 = vmatpush1.msra.mxu0 0.0
      %388 = vmatprep.subr.mxu0 0.0
      %389 = vmatpush1.msra.mxu0 0.0
      %390 = vmatprep.subr.mxu0 0.0
      %391 = vmatpush1.msra.mxu0 0.0
      %392 = vmatprep.subr.mxu0 0.0
      %393 = vmatpush1.msra.mxu0 0.0
      %394 = vmatprep.subr.mxu0 0.0
      %395 = vmatpush1.msra.mxu0 %v369
      %396 = vmatprep.subr.mxu0 0.0
      %397 = vmatpush1.msra.mxu0 %v368
      %398 = vmatprep.subr.mxu0 0.0
      %399 = vmatpush1.msra.mxu0 %v367
      %400 = vmatprep.subr.mxu0 0.0
      %401 = vmatpush1.msra.mxu0 %v366
      %402 = vmatprep.subr.mxu0 0.0
      %403 = vmatpush2.msra.mxu0 0.0
      %404 = vmatprep.subr.mxu0 0.0
      %405 = vmatpush2.msra.mxu0 0.0
      %406 = vmatprep.subr.mxu0 0.0
      %407 = vmatpush2.msra.mxu0 0.0
      %408 = vmatprep.subr.mxu0 0.0
      %409 = vmatpush2.msra.mxu0 0.0
      %410 = vmatprep.subr.mxu0 0.0
      %411 = vmatpush2.msra.mxu0 0.0
      %412 = vmatprep.subr.mxu0 0.0
      %413 = vmatpush2.msra.mxu0 0.0
      %414 = vmatprep.subr.mxu0 0.0
      %415 = vmatpush2.msra.mxu0 0.0
      %416 = vmatprep.subr.mxu0 0.0
      %417 = vmatpush2.msra.mxu0 0.0
      %418 = vmatprep.subr.mxu0 0.0
      %419 = vmatpush2.msra.mxu0 0.0
      %420 = vmatprep.subr.mxu0 0.0
      %421 = vmatpush2.msra.mxu0 0.0
      %422 = vmatprep.subr.mxu0 0.0
      %423 = vmatpush2.msra.mxu0 0.0
      %424 = vmatprep.subr.mxu0 0.0
      %425 = vmatpush2.msra.mxu0 0.0
      %426 = vmatprep.subr.mxu0 0.0
      %427 = vmatpush2.msra.mxu0 0.0
      %428 = vmatprep.subr.mxu0 0.0
      %429 = vmatpush2.msra.mxu0 0.0
      %430 = vmatprep.subr.mxu0 0.0
      %431 = vmatpush2.msra.mxu0 0.0
      %432 = vmatprep.subr.mxu0 0.0
      %433 = vmatpush2.msra.mxu0 0.0
      %434 = vmatprep.mubr.f32.mxu0 0.0
      %435 = vmatmul.mubr.f32.gmra.mxu0 %v238
      %v436 = vpop.f32.mrf.mxu0
      %v437 = vadd.f32 0.0, %v436
      %v438 = vpop.f32.mrf.mxu0
      %439 = vmatprep.mubr.f32.mxu0 0.0
      %440 = vmatmul.mubr.f32.gmra.mxu0 %v241
      %v441 = vpop.f32.mrf.mxu0
      %v442 = vadd.f32 0.0, %v441
      %v443 = vpop.f32.mrf.mxu0
      %444 = vmatprep.mubr.f32.mxu0 0.0
      %445 = vmatmul.mubr.f32.gmra.mxu0 %v244
      %v446 = vpop.f32.mrf.mxu0
      %v447 = vadd.f32 0.0, %v446
      %v448 = vpop.f32.mrf.mxu0
      %449 = vmatprep.mubr.f32.mxu0 0.0
      %450 = vmatmul.mubr.f32.gmra.mxu0 %v247
      %v451 = vpop.f32.mrf.mxu0
      %v452 = vadd.f32 0.0, %v451
      %v453 = vpop.f32.mrf.mxu0
      %454 = vmatprep.mubr.f32.mxu0 0.0
      %455 = vmatmul.mubr.f32.gmra.mxu0 %v250
      %v456 = vpop.f32.mrf.mxu0
      %v457 = vadd.f32 0.0, %v456
      %v458 = vpop.f32.mrf.mxu0
      %459 = vmatprep.mubr.f32.mxu0 0.0
      %460 = vmatmul.mubr.f32.gmra.mxu0 %v253
      %v461 = vpop.f32.mrf.mxu0
      %v462 = vadd.f32 0.0, %v461
      %v463 = vpop.f32.mrf.mxu0
      %464 = vmatprep.mubr.f32.mxu0 0.0
      %465 = vmatmul.mubr.f32.gmra.mxu0 %v256
      %v466 = vpop.f32.mrf.mxu0
      %v467 = vadd.f32 0.0, %v466
      %v468 = vpop.f32.mrf.mxu0
      %469 = vmatprep.mubr.f32.mxu0 0.0
      %470 = vmatmul.mubr.f32.gmra.mxu0 %v259
      %v471 = vpop.f32.mrf.mxu0
      %v472 = vadd.f32 0.0, %v471
      %v473 = vpop.f32.mrf.mxu0
      %474 = vdwg.mxu0
      %v475 = vld [vmem:[%s5] sm:$0xff]
      %v476 = vld [vmem:[%s5 + $0x8] sm:$0xff]
      %v477 = vld [vmem:[%s5 + $0x10] sm:$0xff]
      %v478 = vld [vmem:[%s5 + $0x18] sm:$0xff]
      %479 = vmatprep.subr.mxu0 0.0
      %480 = vmatpush1.msra.mxu0 0.0
      %481 = vmatprep.subr.mxu0 0.0
      %482 = vmatpush1.msra.mxu0 0.0
      %483 = vmatprep.subr.mxu0 0.0
      %484 = vmatpush1.msra.mxu0 0.0
      %485 = vmatprep.subr.mxu0 0.0
      %486 = vmatpush1.msra.mxu0 0.0
      %487 = vmatprep.subr.mxu0 0.0
      %488 = vmatpush1.msra.mxu0 0.0
      %489 = vmatprep.subr.mxu0 0.0
      %490 = vmatpush1.msra.mxu0 0.0
      %491 = vmatprep.subr.mxu0 0.0
      %492 = vmatpush1.msra.mxu0 0.0
      %493 = vmatprep.subr.mxu0 0.0
      %494 = vmatpush1.msra.mxu0 0.0
      %495 = vmatprep.subr.mxu0 0.0
      %496 = vmatpush1.msra.mxu0 0.0
      %497 = vmatprep.subr.mxu0 0.0
      %498 = vmatpush1.msra.mxu0 0.0
      %499 = vmatprep.subr.mxu0 0.0
      %500 = vmatpush1.msra.mxu0 0.0
      %501 = vmatprep.subr.mxu0 0.0
      %502 = vmatpush1.msra.mxu0 0.0
      %503 = vmatprep.subr.mxu0 0.0
      %504 = vmatpush1.msra.mxu0 %v478
      %505 = vmatprep.subr.mxu0 0.0
      %506 = vmatpush1.msra.mxu0 %v477
      %507 = vmatprep.subr.mxu0 0.0
      %508 = vmatpush1.msra.mxu0 %v476
      %509 = vmatprep.subr.mxu0 0.0
      %510 = vmatpush1.msra.mxu0 %v475
      %511 = vmatprep.subr.mxu0 0.0
      %512 = vmatpush2.msra.mxu0 0.0
      %513 = vmatprep.subr.mxu0 0.0
      %514 = vmatpush2.msra.mxu0 0.0
      %515 = vmatprep.subr.mxu0 0.0
      %516 = vmatpush2.msra.mxu0 0.0
      %517 = vmatprep.subr.mxu0 0.0
      %518 = vmatpush2.msra.mxu0 0.0
      %519 = vmatprep.subr.mxu0 0.0
      %520 = vmatpush2.msra.mxu0 0.0
      %521 = vmatprep.subr.mxu0 0.0
      %522 = vmatpush2.msra.mxu0 0.0
      %523 = vmatprep.subr.mxu0 0.0
      %524 = vmatpush2.msra.mxu0 0.0
      %525 = vmatprep.subr.mxu0 0.0
      %526 = vmatpush2.msra.mxu0 0.0
      %527 = vmatprep.subr.mxu0 0.0
      %528 = vmatpush2.msra.mxu0 0.0
      %529 = vmatprep.subr.mxu0 0.0
      %530 = vmatpush2.msra.mxu0 0.0
      %531 = vmatprep.subr.mxu0 0.0
      %532 = vmatpush2.msra.mxu0 0.0
      %533 = vmatprep.subr.mxu0 0.0
      %534 = vmatpush2.msra.mxu0 0.0
      %535 = vmatprep.subr.mxu0 0.0
      %536 = vmatpush2.msra.mxu0 0.0
      %537 = vmatprep.subr.mxu0 0.0
      %538 = vmatpush2.msra.mxu0 0.0
      %539 = vmatprep.subr.mxu0 0.0
      %540 = vmatpush2.msra.mxu0 0.0
      %541 = vmatprep.subr.mxu0 0.0
      %542 = vmatpush2.msra.mxu0 0.0
      %543 = vmatprep.mubr.f32.mxu0 0.0
      %544 = vmatmul.mubr.f32.gmra.mxu0 %v238
      %v545 = vpop.f32.mrf.mxu0
      %v546 = vadd.f32 0.0, %v545
      %v547 = vpop.f32.mrf.mxu0
      %548 = vmatprep.mubr.f32.mxu0 0.0
      %549 = vmatmul.mubr.f32.gmra.mxu0 %v241
      %v550 = vpop.f32.mrf.mxu0
      %v551 = vadd.f32 0.0, %v550
      %v552 = vpop.f32.mrf.mxu0
      %553 = vmatprep.mubr.f32.mxu0 0.0
      %554 = vmatmul.mubr.f32.gmra.mxu0 %v244
      %v555 = vpop.f32.mrf.mxu0
      %v556 = vadd.f32 0.0, %v555
      %v557 = vpop.f32.mrf.mxu0
      %558 = vmatprep.mubr.f32.mxu0 0.0
      %559 = vmatmul.mubr.f32.gmra.mxu0 %v247
      %v560 = vpop.f32.mrf.mxu0
      %v561 = vadd.f32 0.0, %v560
      %v562 = vpop.f32.mrf.mxu0
      %563 = vmatprep.mubr.f32.mxu0 0.0
      %564 = vmatmul.mubr.f32.gmra.mxu0 %v250
      %v565 = vpop.f32.mrf.mxu0
      %v566 = vadd.f32 0.0, %v565
      %v567 = vpop.f32.mrf.mxu0
      %568 = vmatprep.mubr.f32.mxu0 0.0
      %569 = vmatmul.mubr.f32.gmra.mxu0 %v253
      %v570 = vpop.f32.mrf.mxu0
      %v571 = vadd.f32 0.0, %v570
      %v572 = vpop.f32.mrf.mxu0
      %573 = vmatprep.mubr.f32.mxu0 0.0
      %574 = vmatmul.mubr.f32.gmra.mxu0 %v256
      %v575 = vpop.f32.mrf.mxu0
      %v576 = vadd.f32 0.0, %v575
      %v577 = vpop.f32.mrf.mxu0
      %578 = vmatprep.mubr.f32.mxu0 0.0
      %579 = vmatmul.mubr.f32.gmra.mxu0 %v259
      %v580 = vpop.f32.mrf.mxu0
      %v581 = vadd.f32 0.0, %v580
      %v582 = vpop.f32.mrf.mxu0
      %583 = vdwg.mxu0
      %588 = vrot.lane.b32.xlu0 %v328, 120
      %v589 = vpop.permute.xlu0 %588
      %590 = vrot.lane.b32.xlu0 %v333, 120
      %v591 = vpop.permute.xlu0 %590
      %592 = vrot.lane.b32.xlu0 %v338, 120
      %v593 = vpop.permute.xlu0 %592
      %594 = vrot.lane.b32.xlu0 %v343, 120
      %v595 = vpop.permute.xlu0 %594
      %600 = vrot.lane.b32.xlu0 %v348, 120
      %v601 = vpop.permute.xlu0 %600
      %602 = vrot.lane.b32.xlu0 %v353, 120
      %v603 = vpop.permute.xlu0 %602
      %604 = vrot.lane.b32.xlu0 %v358, 120
      %v605 = vpop.permute.xlu0 %604
      %606 = vrot.lane.b32.xlu0 %v363, 120
      %v607 = vpop.permute.xlu0 %606
      %608 = vrot.lane.b32.xlu0 %v328, 112
      %v609 = vpop.permute.xlu0 %608
      %610 = vrot.lane.b32.xlu0 %v333, 112
      %v611 = vpop.permute.xlu0 %610
      %612 = vrot.lane.b32.xlu0 %v338, 112
      %v613 = vpop.permute.xlu0 %612
      %614 = vrot.lane.b32.xlu0 %v343, 112
      %v615 = vpop.permute.xlu0 %614
      %616 = vrot.lane.b32.xlu0 %v348, 112
      %v617 = vpop.permute.xlu0 %616
      %618 = vrot.lane.b32.xlu0 %v353, 112
      %v619 = vpop.permute.xlu0 %618
      %620 = vrot.lane.b32.xlu0 %v358, 112
      %v621 = vpop.permute.xlu0 %620
      %622 = vrot.lane.b32.xlu0 %v363, 112
      %v623 = vpop.permute.xlu0 %622
      %624 = vrot.lane.b32.xlu0 %v328, 104
      %v625 = vpop.permute.xlu0 %624
      %626 = vrot.lane.b32.xlu0 %v333, 104
      %v627 = vpop.permute.xlu0 %626
      %628 = vrot.lane.b32.xlu0 %v338, 104
      %v629 = vpop.permute.xlu0 %628
      %630 = vrot.lane.b32.xlu0 %v343, 104
      %v631 = vpop.permute.xlu0 %630
      %632 = vrot.lane.b32.xlu0 %v348, 104
      %v633 = vpop.permute.xlu0 %632
      %634 = vrot.lane.b32.xlu0 %v353, 104
      %v635 = vpop.permute.xlu0 %634
      %636 = vrot.lane.b32.xlu0 %v358, 104
      %v637 = vpop.permute.xlu0 %636
      %638 = vrot.lane.b32.xlu0 %v363, 104
      %v639 = vpop.permute.xlu0 %638
      %644 = vrot.lane.b32.xlu0 %v437, 120
      %v645 = vpop.permute.xlu0 %644
      %646 = vrot.lane.b32.xlu0 %v442, 120
      %v647 = vpop.permute.xlu0 %646
      %648 = vrot.lane.b32.xlu0 %v447, 120
      %v649 = vpop.permute.xlu0 %648
      %650 = vrot.lane.b32.xlu0 %v452, 120
      %v651 = vpop.permute.xlu0 %650
      %656 = vrot.lane.b32.xlu0 %v457, 120
      %v657 = vpop.permute.xlu0 %656
      %658 = vrot.lane.b32.xlu0 %v462, 120
      %v659 = vpop.permute.xlu0 %658
      %660 = vrot.lane.b32.xlu0 %v467, 120
      %v661 = vpop.permute.xlu0 %660
      %662 = vrot.lane.b32.xlu0 %v472, 120
      %v663 = vpop.permute.xlu0 %662
      %664 = vrot.lane.b32.xlu0 %v437, 112
      %v665 = vpop.permute.xlu0 %664
      %666 = vrot.lane.b32.xlu0 %v442, 112
      %v667 = vpop.permute.xlu0 %666
      %668 = vrot.lane.b32.xlu0 %v447, 112
      %v669 = vpop.permute.xlu0 %668
      %670 = vrot.lane.b32.xlu0 %v452, 112
      %v671 = vpop.permute.xlu0 %670
      %672 = vrot.lane.b32.xlu0 %v457, 112
      %v673 = vpop.permute.xlu0 %672
      %674 = vrot.lane.b32.xlu0 %v462, 112
      %v675 = vpop.permute.xlu0 %674
      %676 = vrot.lane.b32.xlu0 %v467, 112
      %v677 = vpop.permute.xlu0 %676
      %678 = vrot.lane.b32.xlu0 %v472, 112
      %v679 = vpop.permute.xlu0 %678
      %680 = vrot.lane.b32.xlu0 %v437, 104
      %v681 = vpop.permute.xlu0 %680
      %682 = vrot.lane.b32.xlu0 %v442, 104
      %v683 = vpop.permute.xlu0 %682
      %684 = vrot.lane.b32.xlu0 %v447, 104
      %v685 = vpop.permute.xlu0 %684
      %686 = vrot.lane.b32.xlu0 %v452, 104
      %v687 = vpop.permute.xlu0 %686
      %688 = vrot.lane.b32.xlu0 %v457, 104
      %v689 = vpop.permute.xlu0 %688
      %690 = vrot.lane.b32.xlu0 %v462, 104
      %v691 = vpop.permute.xlu0 %690
      %692 = vrot.lane.b32.xlu0 %v467, 104
      %v693 = vpop.permute.xlu0 %692
      %694 = vrot.lane.b32.xlu0 %v472, 104
      %v695 = vpop.permute.xlu0 %694
      %700 = vrot.lane.b32.xlu0 %v546, 120
      %v701 = vpop.permute.xlu0 %700
      %702 = vrot.lane.b32.xlu0 %v551, 120
      %v703 = vpop.permute.xlu0 %702
      %704 = vrot.lane.b32.xlu0 %v556, 120
      %v705 = vpop.permute.xlu0 %704
      %706 = vrot.lane.b32.xlu0 %v561, 120
      %v707 = vpop.permute.xlu0 %706
      %716 = vrot.lane.b32.xlu0 %v566, 120
      %v717 = vpop.permute.xlu0 %716
      %718 = vrot.lane.b32.xlu0 %v571, 120
      %v719 = vpop.permute.xlu0 %718
      %720 = vrot.lane.b32.xlu0 %v576, 120
      %v721 = vpop.permute.xlu0 %720
      %722 = vrot.lane.b32.xlu0 %v581, 120
      %v723 = vpop.permute.xlu0 %722
      %728 = vrot.lane.b32.xlu0 %v546, 112
      %v729 = vpop.permute.xlu0 %728
      %730 = vrot.lane.b32.xlu0 %v551, 112
      %v731 = vpop.permute.xlu0 %730
      %732 = vrot.lane.b32.xlu0 %v556, 112
      %v733 = vpop.permute.xlu0 %732
      %734 = vrot.lane.b32.xlu0 %v561, 112
      %v735 = vpop.permute.xlu0 %734
      %740 = vrot.lane.b32.xlu0 %v566, 112
      %v741 = vpop.permute.xlu0 %740
      %742 = vrot.lane.b32.xlu0 %v571, 112
      %v743 = vpop.permute.xlu0 %742
      %744 = vrot.lane.b32.xlu0 %v576, 112
      %v745 = vpop.permute.xlu0 %744
      %746 = vrot.lane.b32.xlu0 %v581, 112
      %v747 = vpop.permute.xlu0 %746
      %752 = vrot.lane.b32.xlu0 %v546, 104
      %v753 = vpop.permute.xlu0 %752
      %754 = vrot.lane.b32.xlu0 %v551, 104
      %v755 = vpop.permute.xlu0 %754
      %756 = vrot.lane.b32.xlu0 %v556, 104
      %v757 = vpop.permute.xlu0 %756
      %758 = vrot.lane.b32.xlu0 %v561, 104
      %v759 = vpop.permute.xlu0 %758
      %764 = vrot.lane.b32.xlu0 %v566, 104
      %v765 = vpop.permute.xlu0 %764
      %766 = vrot.lane.b32.xlu0 %v571, 104
      %v767 = vpop.permute.xlu0 %766
      %768 = vrot.lane.b32.xlu0 %v576, 104
      %v769 = vpop.permute.xlu0 %768
      %770 = vrot.lane.b32.xlu0 %v581, 104
      %v771 = vpop.permute.xlu0 %770
      %vm776 = vcmask 64512
      %v777 = vsel %vm776, %v328, 0
      %v779 = vsel %vm776, %v333, 0
      %v781 = vsel %vm776, %v338, 0
      %v783 = vsel %vm776, %v343, 0
      %v785 = vsel %vm776, %v437, 0
      %v787 = vsel %vm776, %v442, 0
      %v789 = vsel %vm776, %v447, 0
      %v791 = vsel %vm776, %v452, 0
      %793 = vmatprep.subr.mxu0 0.0
      %794 = vmatpush1.xpose.msra.mxu0 0.0
      %795 = vmatprep.subr.mxu0 0.0
      %796 = vmatpush1.xpose.msra.mxu0 0.0
      %797 = vmatprep.subr.mxu0 0.0
      %798 = vmatpush1.xpose.msra.mxu0 0.0
      %799 = vmatprep.subr.mxu0 0.0
      %800 = vmatpush1.xpose.msra.mxu0 0.0
      %801 = vmatprep.subr.mxu0 0.0
      %802 = vmatpush1.xpose.msra.mxu0 0.0
      %803 = vmatprep.subr.mxu0 0.0
      %804 = vmatpush1.xpose.msra.mxu0 0.0
      %805 = vmatprep.subr.mxu0 0.0
      %806 = vmatpush1.xpose.msra.mxu0 0.0
      %807 = vmatprep.subr.mxu0 0.0
      %808 = vmatpush1.xpose.msra.mxu0 0.0
      %809 = vmatprep.subr.mxu0 0.0
      %810 = vmatpush1.xpose.msra.mxu0 0.0
      %811 = vmatprep.subr.mxu0 0.0
      %812 = vmatpush1.xpose.msra.mxu0 0.0
      %813 = vmatprep.subr.mxu0 0.0
      %814 = vmatpush1.xpose.msra.mxu0 0.0
      %815 = vmatprep.subr.mxu0 0.0
      %816 = vmatpush1.xpose.msra.mxu0 0.0
      %817 = vmatprep.subr.mxu0 0.0
      %818 = vmatpush1.xpose.msra.mxu0 %v791
      %819 = vmatprep.subr.mxu0 0.0
      %820 = vmatpush1.xpose.msra.mxu0 %v789
      %821 = vmatprep.subr.mxu0 0.0
      %822 = vmatpush1.xpose.msra.mxu0 %v787
      %823 = vmatprep.subr.mxu0 0.0
      %824 = vmatpush1.xpose.msra.mxu0 %v785
      %825 = vmatprep.subr.mxu0 0.0
      %826 = vmatpush2.xpose.msra.mxu0 0.0
      %827 = vmatprep.subr.mxu0 0.0
      %828 = vmatpush2.xpose.msra.mxu0 0.0
      %829 = vmatprep.subr.mxu0 0.0
      %830 = vmatpush2.xpose.msra.mxu0 0.0
      %831 = vmatprep.subr.mxu0 0.0
      %832 = vmatpush2.xpose.msra.mxu0 0.0
      %833 = vmatprep.subr.mxu0 0.0
      %834 = vmatpush2.xpose.msra.mxu0 0.0
      %835 = vmatprep.subr.mxu0 0.0
      %836 = vmatpush2.xpose.msra.mxu0 0.0
      %837 = vmatprep.subr.mxu0 0.0
      %838 = vmatpush2.xpose.msra.mxu0 0.0
      %839 = vmatprep.subr.mxu0 0.0
      %840 = vmatpush2.xpose.msra.mxu0 0.0
      %841 = vmatprep.subr.mxu0 0.0
      %842 = vmatpush2.xpose.msra.mxu0 0.0
      %843 = vmatprep.subr.mxu0 0.0
      %844 = vmatpush2.xpose.msra.mxu0 0.0
      %845 = vmatprep.subr.mxu0 0.0
      %846 = vmatpush2.xpose.msra.mxu0 0.0
      %847 = vmatprep.subr.mxu0 0.0
      %848 = vmatpush2.xpose.msra.mxu0 0.0
      %849 = vmatprep.subr.mxu0 0.0
      %850 = vmatpush2.xpose.msra.mxu0 0.0
      %851 = vmatprep.subr.mxu0 0.0
      %852 = vmatpush2.xpose.msra.mxu0 0.0
      %853 = vmatprep.subr.mxu0 0.0
      %854 = vmatpush2.xpose.msra.mxu0 0.0
      %855 = vmatprep.subr.mxu0 0.0
      %856 = vmatpush2.xpose.msra.mxu0 0.0
      %857 = vmatprep.mubr.f32.mxu0 0.0
      %858 = vmatmul.mubr.f32.gmra.mxu0 %v777
      %v859 = vpop.f32.mrf.mxu0
      %v860 = vadd.f32 0.0, %v859
      %v861 = vpop.f32.mrf.mxu0
      %862 = vmatprep.mubr.f32.mxu0 0.0
      %863 = vmatmul.mubr.f32.gmra.mxu0 %v779
      %v864 = vpop.f32.mrf.mxu0
      %v865 = vadd.f32 0.0, %v864
      %v866 = vpop.f32.mrf.mxu0
      %867 = vmatprep.mubr.f32.mxu0 0.0
      %868 = vmatmul.mubr.f32.gmra.mxu0 %v781
      %v869 = vpop.f32.mrf.mxu0
      %v870 = vadd.f32 0.0, %v869
      %v871 = vpop.f32.mrf.mxu0
      %872 = vmatprep.mubr.f32.mxu0 0.0
      %873 = vmatmul.mubr.f32.gmra.mxu0 %v783
      %v874 = vpop.f32.mrf.mxu0
      %v875 = vadd.f32 0.0, %v874
      %v876 = vpop.f32.mrf.mxu0
      %877 = vdwg.mxu0
      %v878 = vsel %vm776, %v348, 0
      %v880 = vsel %vm776, %v353, 0
      %v882 = vsel %vm776, %v358, 0
      %v884 = vsel %vm776, %v363, 0
      %v886 = vsel %vm776, %v457, 0
      %v888 = vsel %vm776, %v462, 0
      %v890 = vsel %vm776, %v467, 0
      %v892 = vsel %vm776, %v472, 0
      %894 = vmatprep.subr.mxu0 0.0
      %895 = vmatpush1.xpose.msra.mxu0 0.0
      %896 = vmatprep.subr.mxu0 0.0
      %897 = vmatpush1.xpose.msra.mxu0 0.0
      %898 = vmatprep.subr.mxu0 0.0
      %899 = vmatpush1.xpose.msra.mxu0 0.0
      %900 = vmatprep.subr.mxu0 0.0
      %901 = vmatpush1.xpose.msra.mxu0 0.0
      %902 = vmatprep.subr.mxu0 0.0
      %903 = vmatpush1.xpose.msra.mxu0 0.0
      %904 = vmatprep.subr.mxu0 0.0
      %905 = vmatpush1.xpose.msra.mxu0 0.0
      %906 = vmatprep.subr.mxu0 0.0
      %907 = vmatpush1.xpose.msra.mxu0 0.0
      %908 = vmatprep.subr.mxu0 0.0
      %909 = vmatpush1.xpose.msra.mxu0 0.0
      %910 = vmatprep.subr.mxu0 0.0
      %911 = vmatpush1.xpose.msra.mxu0 0.0
      %912 = vmatprep.subr.mxu0 0.0
      %913 = vmatpush1.xpose.msra.mxu0 0.0
      %914 = vmatprep.subr.mxu0 0.0
      %915 = vmatpush1.xpose.msra.mxu0 0.0
      %916 = vmatprep.subr.mxu0 0.0
      %917 = vmatpush1.xpose.msra.mxu0 0.0
      %918 = vmatprep.subr.mxu0 0.0
      %919 = vmatpush1.xpose.msra.mxu0 %v892
      %920 = vmatprep.subr.mxu0 0.0
      %921 = vmatpush1.xpose.msra.mxu0 %v890
      %922 = vmatprep.subr.mxu0 0.0
      %923 = vmatpush1.xpose.msra.mxu0 %v888
      %924 = vmatprep.subr.mxu0 0.0
      %925 = vmatpush1.xpose.msra.mxu0 %v886
      %926 = vmatprep.subr.mxu0 0.0
      %927 = vmatpush2.xpose.msra.mxu0 0.0
      %928 = vmatprep.subr.mxu0 0.0
      %929 = vmatpush2.xpose.msra.mxu0 0.0
      %930 = vmatprep.subr.mxu0 0.0
      %931 = vmatpush2.xpose.msra.mxu0 0.0
      %932 = vmatprep.subr.mxu0 0.0
      %933 = vmatpush2.xpose.msra.mxu0 0.0
      %934 = vmatprep.subr.mxu0 0.0
      %935 = vmatpush2.xpose.msra.mxu0 0.0
      %936 = vmatprep.subr.mxu0 0.0
      %937 = vmatpush2.xpose.msra.mxu0 0.0
      %938 = vmatprep.subr.mxu0 0.0
      %939 = vmatpush2.xpose.msra.mxu0 0.0
      %940 = vmatprep.subr.mxu0 0.0
      %941 = vmatpush2.xpose.msra.mxu0 0.0
      %942 = vmatprep.subr.mxu0 0.0
      %943 = vmatpush2.xpose.msra.mxu0 0.0
      %944 = vmatprep.subr.mxu0 0.0
      %945 = vmatpush2.xpose.msra.mxu0 0.0
      %946 = vmatprep.subr.mxu0 0.0
      %947 = vmatpush2.xpose.msra.mxu0 0.0
      %948 = vmatprep.subr.mxu0 0.0
      %949 = vmatpush2.xpose.msra.mxu0 0.0
      %950 = vmatprep.subr.mxu0 0.0
      %951 = vmatpush2.xpose.msra.mxu0 0.0
      %952 = vmatprep.subr.mxu0 0.0
      %953 = vmatpush2.xpose.msra.mxu0 0.0
      %954 = vmatprep.subr.mxu0 0.0
      %955 = vmatpush2.xpose.msra.mxu0 0.0
      %956 = vmatprep.subr.mxu0 0.0
      %957 = vmatpush2.xpose.msra.mxu0 0.0
      %958 = vmatprep.mubr.f32.mxu0 0.0
      %959 = vmatmul.mubr.f32.gmra.mxu0 %v878
      %v960 = vpop.f32.mrf.mxu0
      %v961 = vadd.f32 0.0, %v960
      %v962 = vpop.f32.mrf.mxu0
      %963 = vmatprep.mubr.f32.mxu0 0.0
      %964 = vmatmul.mubr.f32.gmra.mxu0 %v880
      %v965 = vpop.f32.mrf.mxu0
      %v966 = vadd.f32 0.0, %v965
      %v967 = vpop.f32.mrf.mxu0
      %968 = vmatprep.mubr.f32.mxu0 0.0
      %969 = vmatmul.mubr.f32.gmra.mxu0 %v882
      %v970 = vpop.f32.mrf.mxu0
      %v971 = vadd.f32 0.0, %v970
      %v972 = vpop.f32.mrf.mxu0
      %973 = vmatprep.mubr.f32.mxu0 0.0
      %974 = vmatmul.mubr.f32.gmra.mxu0 %v884
      %v975 = vpop.f32.mrf.mxu0
      %v976 = vadd.f32 0.0, %v975
      %v977 = vpop.f32.mrf.mxu0
      %978 = vdwg.mxu0
      %v979 = vsel %vm776, %v589, 0
      %v981 = vsel %vm776, %v591, 0
      %v983 = vsel %vm776, %v593, 0
      %v985 = vsel %vm776, %v595, 0
      %v987 = vsel %vm776, %v645, 0
      %v989 = vsel %vm776, %v647, 0
      %v991 = vsel %vm776, %v649, 0
      %v993 = vsel %vm776, %v651, 0
      %995 = vmatprep.subr.mxu0 0.0
      %996 = vmatpush1.xpose.msra.mxu0 0.0
      %997 = vmatprep.subr.mxu0 0.0
      %998 = vmatpush1.xpose.msra.mxu0 0.0
      %999 = vmatprep.subr.mxu0 0.0
      %1000 = vmatpush1.xpose.msra.mxu0 0.0
      %1001 = vmatprep.subr.mxu0 0.0
      %1002 = vmatpush1.xpose.msra.mxu0 0.0
      %1003 = vmatprep.subr.mxu0 0.0
      %1004 = vmatpush1.xpose.msra.mxu0 0.0
      %1005 = vmatprep.subr.mxu0 0.0
      %1006 = vmatpush1.xpose.msra.mxu0 0.0
      %1007 = vmatprep.subr.mxu0 0.0
      %1008 = vmatpush1.xpose.msra.mxu0 0.0
      %1009 = vmatprep.subr.mxu0 0.0
      %1010 = vmatpush1.xpose.msra.mxu0 0.0
      %1011 = vmatprep.subr.mxu0 0.0
      %1012 = vmatpush1.xpose.msra.mxu0 0.0
      %1013 = vmatprep.subr.mxu0 0.0
      %1014 = vmatpush1.xpose.msra.mxu0 0.0
      %1015 = vmatprep.subr.mxu0 0.0
      %1016 = vmatpush1.xpose.msra.mxu0 0.0
      %1017 = vmatprep.subr.mxu0 0.0
      %1018 = vmatpush1.xpose.msra.mxu0 0.0
      %1019 = vmatprep.subr.mxu0 0.0
      %1020 = vmatpush1.xpose.msra.mxu0 %v993
      %1021 = vmatprep.subr.mxu0 0.0
      %1022 = vmatpush1.xpose.msra.mxu0 %v991
      %1023 = vmatprep.subr.mxu0 0.0
      %1024 = vmatpush1.xpose.msra.mxu0 %v989
      %1025 = vmatprep.subr.mxu0 0.0
      %1026 = vmatpush1.xpose.msra.mxu0 %v987
      %1027 = vmatprep.subr.mxu0 0.0
      %1028 = vmatpush2.xpose.msra.mxu0 0.0
      %1029 = vmatprep.subr.mxu0 0.0
      %1030 = vmatpush2.xpose.msra.mxu0 0.0
      %1031 = vmatprep.subr.mxu0 0.0
      %1032 = vmatpush2.xpose.msra.mxu0 0.0
      %1033 = vmatprep.subr.mxu0 0.0
      %1034 = vmatpush2.xpose.msra.mxu0 0.0
      %1035 = vmatprep.subr.mxu0 0.0
      %1036 = vmatpush2.xpose.msra.mxu0 0.0
      %1037 = vmatprep.subr.mxu0 0.0
      %1038 = vmatpush2.xpose.msra.mxu0 0.0
      %1039 = vmatprep.subr.mxu0 0.0
      %1040 = vmatpush2.xpose.msra.mxu0 0.0
      %1041 = vmatprep.subr.mxu0 0.0
      %1042 = vmatpush2.xpose.msra.mxu0 0.0
      %1043 = vmatprep.subr.mxu0 0.0
      %1044 = vmatpush2.xpose.msra.mxu0 0.0
      %1045 = vmatprep.subr.mxu0 0.0
      %1046 = vmatpush2.xpose.msra.mxu0 0.0
      %1047 = vmatprep.subr.mxu0 0.0
      %1048 = vmatpush2.xpose.msra.mxu0 0.0
      %1049 = vmatprep.subr.mxu0 0.0
      %1050 = vmatpush2.xpose.msra.mxu0 0.0
      %1051 = vmatprep.subr.mxu0 0.0
      %1052 = vmatpush2.xpose.msra.mxu0 0.0
      %1053 = vmatprep.subr.mxu0 0.0
      %1054 = vmatpush2.xpose.msra.mxu0 0.0
      %1055 = vmatprep.subr.mxu0 0.0
      %1056 = vmatpush2.xpose.msra.mxu0 0.0
      %1057 = vmatprep.subr.mxu0 0.0
      %1058 = vmatpush2.xpose.msra.mxu0 0.0
      %1059 = vmatprep.mubr.f32.mxu0 0.0
      %1060 = vmatmul.mubr.f32.gmra.mxu0 %v979
      %v1061 = vpop.f32.mrf.mxu0
      %v1062 = vadd.f32 0.0, %v1061
      %v1063 = vpop.f32.mrf.mxu0
      %1064 = vmatprep.mubr.f32.mxu0 0.0
      %1065 = vmatmul.mubr.f32.gmra.mxu0 %v981
      %v1066 = vpop.f32.mrf.mxu0
      %v1067 = vadd.f32 0.0, %v1066
      %v1068 = vpop.f32.mrf.mxu0
      %1069 = vmatprep.mubr.f32.mxu0 0.0
      %1070 = vmatmul.mubr.f32.gmra.mxu0 %v983
      %v1071 = vpop.f32.mrf.mxu0
      %v1072 = vadd.f32 0.0, %v1071
      %v1073 = vpop.f32.mrf.mxu0
      %1074 = vmatprep.mubr.f32.mxu0 0.0
      %1075 = vmatmul.mubr.f32.gmra.mxu0 %v985
      %v1076 = vpop.f32.mrf.mxu0
      %v1077 = vadd.f32 0.0, %v1076
      %v1078 = vpop.f32.mrf.mxu0
      %1079 = vdwg.mxu0
      %v1080 = vsel %vm776, %v601, 0
      %v1082 = vsel %vm776, %v603, 0
      %v1084 = vsel %vm776, %v605, 0
      %v1086 = vsel %vm776, %v607, 0
      %v1088 = vsel %vm776, %v657, 0
      %v1090 = vsel %vm776, %v659, 0
      %v1092 = vsel %vm776, %v661, 0
      %v1094 = vsel %vm776, %v663, 0
      %1096 = vmatprep.subr.mxu0 0.0
      %1097 = vmatpush1.xpose.msra.mxu0 0.0
      %1098 = vmatprep.subr.mxu0 0.0
      %1099 = vmatpush1.xpose.msra.mxu0 0.0
      %1100 = vmatprep.subr.mxu0 0.0
      %1101 = vmatpush1.xpose.msra.mxu0 0.0
      %1102 = vmatprep.subr.mxu0 0.0
      %1103 = vmatpush1.xpose.msra.mxu0 0.0
      %1104 = vmatprep.subr.mxu0 0.0
      %1105 = vmatpush1.xpose.msra.mxu0 0.0
      %1106 = vmatprep.subr.mxu0 0.0
      %1107 = vmatpush1.xpose.msra.mxu0 0.0
      %1108 = vmatprep.subr.mxu0 0.0
      %1109 = vmatpush1.xpose.msra.mxu0 0.0
      %1110 = vmatprep.subr.mxu0 0.0
      %1111 = vmatpush1.xpose.msra.mxu0 0.0
      %1112 = vmatprep.subr.mxu0 0.0
      %1113 = vmatpush1.xpose.msra.mxu0 0.0
      %1114 = vmatprep.subr.mxu0 0.0
      %1115 = vmatpush1.xpose.msra.mxu0 0.0
      %1116 = vmatprep.subr.mxu0 0.0
      %1117 = vmatpush1.xpose.msra.mxu0 0.0
      %1118 = vmatprep.subr.mxu0 0.0
      %1119 = vmatpush1.xpose.msra.mxu0 0.0
      %1120 = vmatprep.subr.mxu0 0.0
      %1121 = vmatpush1.xpose.msra.mxu0 %v1094
      %1122 = vmatprep.subr.mxu0 0.0
      %1123 = vmatpush1.xpose.msra.mxu0 %v1092
      %1124 = vmatprep.subr.mxu0 0.0
      %1125 = vmatpush1.xpose.msra.mxu0 %v1090
      %1126 = vmatprep.subr.mxu0 0.0
      %1127 = vmatpush1.xpose.msra.mxu0 %v1088
      %1128 = vmatprep.subr.mxu0 0.0
      %1129 = vmatpush2.xpose.msra.mxu0 0.0
      %1130 = vmatprep.subr.mxu0 0.0
      %1131 = vmatpush2.xpose.msra.mxu0 0.0
      %1132 = vmatprep.subr.mxu0 0.0
      %1133 = vmatpush2.xpose.msra.mxu0 0.0
      %1134 = vmatprep.subr.mxu0 0.0
      %1135 = vmatpush2.xpose.msra.mxu0 0.0
      %1136 = vmatprep.subr.mxu0 0.0
      %1137 = vmatpush2.xpose.msra.mxu0 0.0
      %1138 = vmatprep.subr.mxu0 0.0
      %1139 = vmatpush2.xpose.msra.mxu0 0.0
      %1140 = vmatprep.subr.mxu0 0.0
      %1141 = vmatpush2.xpose.msra.mxu0 0.0
      %1142 = vmatprep.subr.mxu0 0.0
      %1143 = vmatpush2.xpose.msra.mxu0 0.0
      %1144 = vmatprep.subr.mxu0 0.0
      %1145 = vmatpush2.xpose.msra.mxu0 0.0
      %1146 = vmatprep.subr.mxu0 0.0
      %1147 = vmatpush2.xpose.msra.mxu0 0.0
      %1148 = vmatprep.subr.mxu0 0.0
      %1149 = vmatpush2.xpose.msra.mxu0 0.0
      %1150 = vmatprep.subr.mxu0 0.0
      %1151 = vmatpush2.xpose.msra.mxu0 0.0
      %1152 = vmatprep.subr.mxu0 0.0
      %1153 = vmatpush2.xpose.msra.mxu0 0.0
      %1154 = vmatprep.subr.mxu0 0.0
      %1155 = vmatpush2.xpose.msra.mxu0 0.0
      %1156 = vmatprep.subr.mxu0 0.0
      %1157 = vmatpush2.xpose.msra.mxu0 0.0
      %1158 = vmatprep.subr.mxu0 0.0
      %1159 = vmatpush2.xpose.msra.mxu0 0.0
      %1160 = vmatprep.mubr.f32.mxu0 0.0
      %1161 = vmatmul.mubr.f32.gmra.mxu0 %v1080
      %v1162 = vpop.f32.mrf.mxu0
      %v1163 = vadd.f32 0.0, %v1162
      %v1164 = vpop.f32.mrf.mxu0
      %1165 = vmatprep.mubr.f32.mxu0 0.0
      %1166 = vmatmul.mubr.f32.gmra.mxu0 %v1082
      %v1167 = vpop.f32.mrf.mxu0
      %v1168 = vadd.f32 0.0, %v1167
      %v1169 = vpop.f32.mrf.mxu0
      %1170 = vmatprep.mubr.f32.mxu0 0.0
      %1171 = vmatmul.mubr.f32.gmra.mxu0 %v1084
      %v1172 = vpop.f32.mrf.mxu0
      %v1173 = vadd.f32 0.0, %v1172
      %v1174 = vpop.f32.mrf.mxu0
      %1175 = vmatprep.mubr.f32.mxu0 0.0
      %1176 = vmatmul.mubr.f32.gmra.mxu0 %v1086
      %v1177 = vpop.f32.mrf.mxu0
      %v1178 = vadd.f32 0.0, %v1177
      %v1179 = vpop.f32.mrf.mxu0
      %1180 = vdwg.mxu0
      %v1181 = vsel %vm776, %v609, 0
      %v1183 = vsel %vm776, %v611, 0
      %v1185 = vsel %vm776, %v613, 0
      %v1187 = vsel %vm776, %v615, 0
      %v1189 = vsel %vm776, %v665, 0
      %v1191 = vsel %vm776, %v667, 0
      %v1193 = vsel %vm776, %v669, 0
      %v1195 = vsel %vm776, %v671, 0
      %1197 = vmatprep.subr.mxu0 0.0
      %1198 = vmatpush1.xpose.msra.mxu0 0.0
      %1199 = vmatprep.subr.mxu0 0.0
      %1200 = vmatpush1.xpose.msra.mxu0 0.0
      %1201 = vmatprep.subr.mxu0 0.0
      %1202 = vmatpush1.xpose.msra.mxu0 0.0
      %1203 = vmatprep.subr.mxu0 0.0
      %1204 = vmatpush1.xpose.msra.mxu0 0.0
      %1205 = vmatprep.subr.mxu0 0.0
      %1206 = vmatpush1.xpose.msra.mxu0 0.0
      %1207 = vmatprep.subr.mxu0 0.0
      %1208 = vmatpush1.xpose.msra.mxu0 0.0
      %1209 = vmatprep.subr.mxu0 0.0
      %1210 = vmatpush1.xpose.msra.mxu0 0.0
      %1211 = vmatprep.subr.mxu0 0.0
      %1212 = vmatpush1.xpose.msra.mxu0 0.0
      %1213 = vmatprep.subr.mxu0 0.0
      %1214 = vmatpush1.xpose.msra.mxu0 0.0
      %1215 = vmatprep.subr.mxu0 0.0
      %1216 = vmatpush1.xpose.msra.mxu0 0.0
      %1217 = vmatprep.subr.mxu0 0.0
      %1218 = vmatpush1.xpose.msra.mxu0 0.0
      %1219 = vmatprep.subr.mxu0 0.0
      %1220 = vmatpush1.xpose.msra.mxu0 0.0
      %1221 = vmatprep.subr.mxu0 0.0
      %1222 = vmatpush1.xpose.msra.mxu0 %v1195
      %1223 = vmatprep.subr.mxu0 0.0
      %1224 = vmatpush1.xpose.msra.mxu0 %v1193
      %1225 = vmatprep.subr.mxu0 0.0
      %1226 = vmatpush1.xpose.msra.mxu0 %v1191
      %1227 = vmatprep.subr.mxu0 0.0
      %1228 = vmatpush1.xpose.msra.mxu0 %v1189
      %1229 = vmatprep.subr.mxu0 0.0
      %1230 = vmatpush2.xpose.msra.mxu0 0.0
      %1231 = vmatprep.subr.mxu0 0.0
      %1232 = vmatpush2.xpose.msra.mxu0 0.0
      %1233 = vmatprep.subr.mxu0 0.0
      %1234 = vmatpush2.xpose.msra.mxu0 0.0
      %1235 = vmatprep.subr.mxu0 0.0
      %1236 = vmatpush2.xpose.msra.mxu0 0.0
      %1237 = vmatprep.subr.mxu0 0.0
      %1238 = vmatpush2.xpose.msra.mxu0 0.0
      %1239 = vmatprep.subr.mxu0 0.0
      %1240 = vmatpush2.xpose.msra.mxu0 0.0
      %1241 = vmatprep.subr.mxu0 0.0
      %1242 = vmatpush2.xpose.msra.mxu0 0.0
      %1243 = vmatprep.subr.mxu0 0.0
      %1244 = vmatpush2.xpose.msra.mxu0 0.0
      %1245 = vmatprep.subr.mxu0 0.0
      %1246 = vmatpush2.xpose.msra.mxu0 0.0
      %1247 = vmatprep.subr.mxu0 0.0
      %1248 = vmatpush2.xpose.msra.mxu0 0.0
      %1249 = vmatprep.subr.mxu0 0.0
      %1250 = vmatpush2.xpose.msra.mxu0 0.0
      %1251 = vmatprep.subr.mxu0 0.0
      %1252 = vmatpush2.xpose.msra.mxu0 0.0
      %1253 = vmatprep.subr.mxu0 0.0
      %1254 = vmatpush2.xpose.msra.mxu0 0.0
      %1255 = vmatprep.subr.mxu0 0.0
      %1256 = vmatpush2.xpose.msra.mxu0 0.0
      %1257 = vmatprep.subr.mxu0 0.0
      %1258 = vmatpush2.xpose.msra.mxu0 0.0
      %1259 = vmatprep.subr.mxu0 0.0
      %1260 = vmatpush2.xpose.msra.mxu0 0.0
      %1261 = vmatprep.mubr.f32.mxu0 0.0
      %1262 = vmatmul.mubr.f32.gmra.mxu0 %v1181
      %v1263 = vpop.f32.mrf.mxu0
      %v1264 = vadd.f32 0.0, %v1263
      %v1265 = vpop.f32.mrf.mxu0
      %1266 = vmatprep.mubr.f32.mxu0 0.0
      %1267 = vmatmul.mubr.f32.gmra.mxu0 %v1183
      %v1268 = vpop.f32.mrf.mxu0
      %v1269 = vadd.f32 0.0, %v1268
      %v1270 = vpop.f32.mrf.mxu0
      %1271 = vmatprep.mubr.f32.mxu0 0.0
      %1272 = vmatmul.mubr.f32.gmra.mxu0 %v1185
      %v1273 = vpop.f32.mrf.mxu0
      %v1274 = vadd.f32 0.0, %v1273
      %v1275 = vpop.f32.mrf.mxu0
      %1276 = vmatprep.mubr.f32.mxu0 0.0
      %1277 = vmatmul.mubr.f32.gmra.mxu0 %v1187
      %v1278 = vpop.f32.mrf.mxu0
      %v1279 = vadd.f32 0.0, %v1278
      %v1280 = vpop.f32.mrf.mxu0
      %1281 = vdwg.mxu0
      %v1282 = vsel %vm776, %v617, 0
      %v1284 = vsel %vm776, %v619, 0
      %v1286 = vsel %vm776, %v621, 0
      %v1288 = vsel %vm776, %v623, 0
      %v1290 = vsel %vm776, %v673, 0
      %v1292 = vsel %vm776, %v675, 0
      %v1294 = vsel %vm776, %v677, 0
      %v1296 = vsel %vm776, %v679, 0
      %1298 = vmatprep.subr.mxu0 0.0
      %1299 = vmatpush1.xpose.msra.mxu0 0.0
      %1300 = vmatprep.subr.mxu0 0.0
      %1301 = vmatpush1.xpose.msra.mxu0 0.0
      %1302 = vmatprep.subr.mxu0 0.0
      %1303 = vmatpush1.xpose.msra.mxu0 0.0
      %1304 = vmatprep.subr.mxu0 0.0
      %1305 = vmatpush1.xpose.msra.mxu0 0.0
      %1306 = vmatprep.subr.mxu0 0.0
      %1307 = vmatpush1.xpose.msra.mxu0 0.0
      %1308 = vmatprep.subr.mxu0 0.0
      %1309 = vmatpush1.xpose.msra.mxu0 0.0
      %1310 = vmatprep.subr.mxu0 0.0
      %1311 = vmatpush1.xpose.msra.mxu0 0.0
      %1312 = vmatprep.subr.mxu0 0.0
      %1313 = vmatpush1.xpose.msra.mxu0 0.0
      %1314 = vmatprep.subr.mxu0 0.0
      %1315 = vmatpush1.xpose.msra.mxu0 0.0
      %1316 = vmatprep.subr.mxu0 0.0
      %1317 = vmatpush1.xpose.msra.mxu0 0.0
      %1318 = vmatprep.subr.mxu0 0.0
      %1319 = vmatpush1.xpose.msra.mxu0 0.0
      %1320 = vmatprep.subr.mxu0 0.0
      %1321 = vmatpush1.xpose.msra.mxu0 0.0
      %1322 = vmatprep.subr.mxu0 0.0
      %1323 = vmatpush1.xpose.msra.mxu0 %v1296
      %1324 = vmatprep.subr.mxu0 0.0
      %1325 = vmatpush1.xpose.msra.mxu0 %v1294
      %1326 = vmatprep.subr.mxu0 0.0
      %1327 = vmatpush1.xpose.msra.mxu0 %v1292
      %1328 = vmatprep.subr.mxu0 0.0
      %1329 = vmatpush1.xpose.msra.mxu0 %v1290
      %1330 = vmatprep.subr.mxu0 0.0
      %1331 = vmatpush2.xpose.msra.mxu0 0.0
      %1332 = vmatprep.subr.mxu0 0.0
      %1333 = vmatpush2.xpose.msra.mxu0 0.0
      %1334 = vmatprep.subr.mxu0 0.0
      %1335 = vmatpush2.xpose.msra.mxu0 0.0
      %1336 = vmatprep.subr.mxu0 0.0
      %1337 = vmatpush2.xpose.msra.mxu0 0.0
      %1338 = vmatprep.subr.mxu0 0.0
      %1339 = vmatpush2.xpose.msra.mxu0 0.0
      %1340 = vmatprep.subr.mxu0 0.0
      %1341 = vmatpush2.xpose.msra.mxu0 0.0
      %1342 = vmatprep.subr.mxu0 0.0
      %1343 = vmatpush2.xpose.msra.mxu0 0.0
      %1344 = vmatprep.subr.mxu0 0.0
      %1345 = vmatpush2.xpose.msra.mxu0 0.0
      %1346 = vmatprep.subr.mxu0 0.0
      %1347 = vmatpush2.xpose.msra.mxu0 0.0
      %1348 = vmatprep.subr.mxu0 0.0
      %1349 = vmatpush2.xpose.msra.mxu0 0.0
      %1350 = vmatprep.subr.mxu0 0.0
      %1351 = vmatpush2.xpose.msra.mxu0 0.0
      %1352 = vmatprep.subr.mxu0 0.0
      %1353 = vmatpush2.xpose.msra.mxu0 0.0
      %1354 = vmatprep.subr.mxu0 0.0
      %1355 = vmatpush2.xpose.msra.mxu0 0.0
      %1356 = vmatprep.subr.mxu0 0.0
      %1357 = vmatpush2.xpose.msra.mxu0 0.0
      %1358 = vmatprep.subr.mxu0 0.0
      %1359 = vmatpush2.xpose.msra.mxu0 0.0
      %1360 = vmatprep.subr.mxu0 0.0
      %1361 = vmatpush2.xpose.msra.mxu0 0.0
      %1362 = vmatprep.mubr.f32.mxu0 0.0
      %1363 = vmatmul.mubr.f32.gmra.mxu0 %v1282
      %v1364 = vpop.f32.mrf.mxu0
      %v1365 = vadd.f32 0.0, %v1364
      %v1366 = vpop.f32.mrf.mxu0
      %1367 = vmatprep.mubr.f32.mxu0 0.0
      %1368 = vmatmul.mubr.f32.gmra.mxu0 %v1284
      %v1369 = vpop.f32.mrf.mxu0
      %v1370 = vadd.f32 0.0, %v1369
      %v1371 = vpop.f32.mrf.mxu0
      %1372 = vmatprep.mubr.f32.mxu0 0.0
      %1373 = vmatmul.mubr.f32.gmra.mxu0 %v1286
      %v1374 = vpop.f32.mrf.mxu0
      %v1375 = vadd.f32 0.0, %v1374
      %v1376 = vpop.f32.mrf.mxu0
      %1377 = vmatprep.mubr.f32.mxu0 0.0
      %1378 = vmatmul.mubr.f32.gmra.mxu0 %v1288
      %v1379 = vpop.f32.mrf.mxu0
      %v1380 = vadd.f32 0.0, %v1379
      %v1381 = vpop.f32.mrf.mxu0
      %1382 = vdwg.mxu0
      %v1383 = vsel %vm776, %v625, 0
      %v1385 = vsel %vm776, %v627, 0
      %v1387 = vsel %vm776, %v629, 0
      %v1389 = vsel %vm776, %v631, 0
      %v1391 = vsel %vm776, %v681, 0
      %v1393 = vsel %vm776, %v683, 0
      %v1395 = vsel %vm776, %v685, 0
      %v1397 = vsel %vm776, %v687, 0
      %1399 = vmatprep.subr.mxu0 0.0
      %1400 = vmatpush1.xpose.msra.mxu0 0.0
      %1401 = vmatprep.subr.mxu0 0.0
      %1402 = vmatpush1.xpose.msra.mxu0 0.0
      %1403 = vmatprep.subr.mxu0 0.0
      %1404 = vmatpush1.xpose.msra.mxu0 0.0
      %1405 = vmatprep.subr.mxu0 0.0
      %1406 = vmatpush1.xpose.msra.mxu0 0.0
      %1407 = vmatprep.subr.mxu0 0.0
      %1408 = vmatpush1.xpose.msra.mxu0 0.0
      %1409 = vmatprep.subr.mxu0 0.0
      %1410 = vmatpush1.xpose.msra.mxu0 0.0
      %1411 = vmatprep.subr.mxu0 0.0
      %1412 = vmatpush1.xpose.msra.mxu0 0.0
      %1413 = vmatprep.subr.mxu0 0.0
      %1414 = vmatpush1.xpose.msra.mxu0 0.0
      %1415 = vmatprep.subr.mxu0 0.0
      %1416 = vmatpush1.xpose.msra.mxu0 0.0
      %1417 = vmatprep.subr.mxu0 0.0
      %1418 = vmatpush1.xpose.msra.mxu0 0.0
      %1419 = vmatprep.subr.mxu0 0.0
      %1420 = vmatpush1.xpose.msra.mxu0 0.0
      %1421 = vmatprep.subr.mxu0 0.0
      %1422 = vmatpush1.xpose.msra.mxu0 0.0
      %1423 = vmatprep.subr.mxu0 0.0
      %1424 = vmatpush1.xpose.msra.mxu0 %v1397
      %1425 = vmatprep.subr.mxu0 0.0
      %1426 = vmatpush1.xpose.msra.mxu0 %v1395
      %1427 = vmatprep.subr.mxu0 0.0
      %1428 = vmatpush1.xpose.msra.mxu0 %v1393
      %1429 = vmatprep.subr.mxu0 0.0
      %1430 = vmatpush1.xpose.msra.mxu0 %v1391
      %1431 = vmatprep.subr.mxu0 0.0
      %1432 = vmatpush2.xpose.msra.mxu0 0.0
      %1433 = vmatprep.subr.mxu0 0.0
      %1434 = vmatpush2.xpose.msra.mxu0 0.0
      %1435 = vmatprep.subr.mxu0 0.0
      %1436 = vmatpush2.xpose.msra.mxu0 0.0
      %1437 = vmatprep.subr.mxu0 0.0
      %1438 = vmatpush2.xpose.msra.mxu0 0.0
      %1439 = vmatprep.subr.mxu0 0.0
      %1440 = vmatpush2.xpose.msra.mxu0 0.0
      %1441 = vmatprep.subr.mxu0 0.0
      %1442 = vmatpush2.xpose.msra.mxu0 0.0
      %1443 = vmatprep.subr.mxu0 0.0
      %1444 = vmatpush2.xpose.msra.mxu0 0.0
      %1445 = vmatprep.subr.mxu0 0.0
      %1446 = vmatpush2.xpose.msra.mxu0 0.0
      %1447 = vmatprep.subr.mxu0 0.0
      %1448 = vmatpush2.xpose.msra.mxu0 0.0
      %1449 = vmatprep.subr.mxu0 0.0
      %1450 = vmatpush2.xpose.msra.mxu0 0.0
      %1451 = vmatprep.subr.mxu0 0.0
      %1452 = vmatpush2.xpose.msra.mxu0 0.0
      %1453 = vmatprep.subr.mxu0 0.0
      %1454 = vmatpush2.xpose.msra.mxu0 0.0
      %1455 = vmatprep.subr.mxu0 0.0
      %1456 = vmatpush2.xpose.msra.mxu0 0.0
      %1457 = vmatprep.subr.mxu0 0.0
      %1458 = vmatpush2.xpose.msra.mxu0 0.0
      %1459 = vmatprep.subr.mxu0 0.0
      %1460 = vmatpush2.xpose.msra.mxu0 0.0
      %1461 = vmatprep.subr.mxu0 0.0
      %1462 = vmatpush2.xpose.msra.mxu0 0.0
      %1463 = vmatprep.mubr.f32.mxu0 0.0
      %1464 = vmatmul.mubr.f32.gmra.mxu0 %v1383
      %v1465 = vpop.f32.mrf.mxu0
      %v1466 = vadd.f32 0.0, %v1465
      %v1467 = vpop.f32.mrf.mxu0
      %1468 = vmatprep.mubr.f32.mxu0 0.0
      %1469 = vmatmul.mubr.f32.gmra.mxu0 %v1385
      %v1470 = vpop.f32.mrf.mxu0
      %v1471 = vadd.f32 0.0, %v1470
      %v1472 = vpop.f32.mrf.mxu0
      %1473 = vmatprep.mubr.f32.mxu0 0.0
      %1474 = vmatmul.mubr.f32.gmra.mxu0 %v1387
      %v1475 = vpop.f32.mrf.mxu0
      %v1476 = vadd.f32 0.0, %v1475
      %v1477 = vpop.f32.mrf.mxu0
      %1478 = vmatprep.mubr.f32.mxu0 0.0
      %1479 = vmatmul.mubr.f32.gmra.mxu0 %v1389
      %v1480 = vpop.f32.mrf.mxu0
      %v1481 = vadd.f32 0.0, %v1480
      %v1482 = vpop.f32.mrf.mxu0
      %1483 = vdwg.mxu0
      %v1484 = vsel %vm776, %v633, 0
      %v1486 = vsel %vm776, %v635, 0
      %v1488 = vsel %vm776, %v637, 0
      %v1490 = vsel %vm776, %v639, 0
      %v1492 = vsel %vm776, %v689, 0
      %v1494 = vsel %vm776, %v691, 0
      %v1496 = vsel %vm776, %v693, 0
      %v1498 = vsel %vm776, %v695, 0
      %1500 = vmatprep.subr.mxu0 0.0
      %1501 = vmatpush1.xpose.msra.mxu0 0.0
      %1502 = vmatprep.subr.mxu0 0.0
      %1503 = vmatpush1.xpose.msra.mxu0 0.0
      %1504 = vmatprep.subr.mxu0 0.0
      %1505 = vmatpush1.xpose.msra.mxu0 0.0
      %1506 = vmatprep.subr.mxu0 0.0
      %1507 = vmatpush1.xpose.msra.mxu0 0.0
      %1508 = vmatprep.subr.mxu0 0.0
      %1509 = vmatpush1.xpose.msra.mxu0 0.0
      %1510 = vmatprep.subr.mxu0 0.0
      %1511 = vmatpush1.xpose.msra.mxu0 0.0
      %1512 = vmatprep.subr.mxu0 0.0
      %1513 = vmatpush1.xpose.msra.mxu0 0.0
      %1514 = vmatprep.subr.mxu0 0.0
      %1515 = vmatpush1.xpose.msra.mxu0 0.0
      %1516 = vmatprep.subr.mxu0 0.0
      %1517 = vmatpush1.xpose.msra.mxu0 0.0
      %1518 = vmatprep.subr.mxu0 0.0
      %1519 = vmatpush1.xpose.msra.mxu0 0.0
      %1520 = vmatprep.subr.mxu0 0.0
      %1521 = vmatpush1.xpose.msra.mxu0 0.0
      %1522 = vmatprep.subr.mxu0 0.0
      %1523 = vmatpush1.xpose.msra.mxu0 0.0
      %1524 = vmatprep.subr.mxu0 0.0
      %1525 = vmatpush1.xpose.msra.mxu0 %v1498
      %1526 = vmatprep.subr.mxu0 0.0
      %1527 = vmatpush1.xpose.msra.mxu0 %v1496
      %1528 = vmatprep.subr.mxu0 0.0
      %1529 = vmatpush1.xpose.msra.mxu0 %v1494
      %1530 = vmatprep.subr.mxu0 0.0
      %1531 = vmatpush1.xpose.msra.mxu0 %v1492
      %1532 = vmatprep.subr.mxu0 0.0
      %1533 = vmatpush2.xpose.msra.mxu0 0.0
      %1534 = vmatprep.subr.mxu0 0.0
      %1535 = vmatpush2.xpose.msra.mxu0 0.0
      %1536 = vmatprep.subr.mxu0 0.0
      %1537 = vmatpush2.xpose.msra.mxu0 0.0
      %1538 = vmatprep.subr.mxu0 0.0
      %1539 = vmatpush2.xpose.msra.mxu0 0.0
      %1540 = vmatprep.subr.mxu0 0.0
      %1541 = vmatpush2.xpose.msra.mxu0 0.0
      %1542 = vmatprep.subr.mxu0 0.0
      %1543 = vmatpush2.xpose.msra.mxu0 0.0
      %1544 = vmatprep.subr.mxu0 0.0
      %1545 = vmatpush2.xpose.msra.mxu0 0.0
      %1546 = vmatprep.subr.mxu0 0.0
      %1547 = vmatpush2.xpose.msra.mxu0 0.0
      %1548 = vmatprep.subr.mxu0 0.0
      %1549 = vmatpush2.xpose.msra.mxu0 0.0
      %1550 = vmatprep.subr.mxu0 0.0
      %1551 = vmatpush2.xpose.msra.mxu0 0.0
      %1552 = vmatprep.subr.mxu0 0.0
      %1553 = vmatpush2.xpose.msra.mxu0 0.0
      %1554 = vmatprep.subr.mxu0 0.0
      %1555 = vmatpush2.xpose.msra.mxu0 0.0
      %1556 = vmatprep.subr.mxu0 0.0
      %1557 = vmatpush2.xpose.msra.mxu0 0.0
      %1558 = vmatprep.subr.mxu0 0.0
      %1559 = vmatpush2.xpose.msra.mxu0 0.0
      %1560 = vmatprep.subr.mxu0 0.0
      %1561 = vmatpush2.xpose.msra.mxu0 0.0
      %1562 = vmatprep.subr.mxu0 0.0
      %1563 = vmatpush2.xpose.msra.mxu0 0.0
      %1564 = vmatprep.mubr.f32.mxu0 0.0
      %1565 = vmatmul.mubr.f32.gmra.mxu0 %v1484
      %v1566 = vpop.f32.mrf.mxu0
      %v1567 = vadd.f32 0.0, %v1566
      %v1568 = vpop.f32.mrf.mxu0
      %1569 = vmatprep.mubr.f32.mxu0 0.0
      %1570 = vmatmul.mubr.f32.gmra.mxu0 %v1486
      %v1571 = vpop.f32.mrf.mxu0
      %v1572 = vadd.f32 0.0, %v1571
      %v1573 = vpop.f32.mrf.mxu0
      %1574 = vmatprep.mubr.f32.mxu0 0.0
      %1575 = vmatmul.mubr.f32.gmra.mxu0 %v1488
      %v1576 = vpop.f32.mrf.mxu0
      %v1577 = vadd.f32 0.0, %v1576
      %v1578 = vpop.f32.mrf.mxu0
      %1579 = vmatprep.mubr.f32.mxu0 0.0
      %1580 = vmatmul.mubr.f32.gmra.mxu0 %v1490
      %v1581 = vpop.f32.mrf.mxu0
      %v1582 = vadd.f32 0.0, %v1581
      %v1583 = vpop.f32.mrf.mxu0
      %1584 = vdwg.mxu0
      %v1585 = vmul.f32 %v860, 0.17677669
      %v1586 = vmul.f32 %v865, 0.17677669
      %v1587 = vmul.f32 %v870, 0.17677669
      %v1588 = vmul.f32 %v875, 0.17677669
      %v1589 = vmul.f32 %v961, 0.17677669
      %v1590 = vmul.f32 %v966, 0.17677669
      %v1591 = vmul.f32 %v971, 0.17677669
      %v1592 = vmul.f32 %v976, 0.17677669
      %v1593 = vmul.f32 %v1062, 0.17677669
      %v1594 = vmul.f32 %v1067, 0.17677669
      %v1595 = vmul.f32 %v1072, 0.17677669
      %v1596 = vmul.f32 %v1077, 0.17677669
      %v1597 = vmul.f32 %v1163, 0.17677669
      %v1598 = vmul.f32 %v1168, 0.17677669
      %v1599 = vmul.f32 %v1173, 0.17677669
      %v1600 = vmul.f32 %v1178, 0.17677669
      %v1601 = vmul.f32 %v1264, 0.17677669
      %v1602 = vmul.f32 %v1269, 0.17677669
      %v1603 = vmul.f32 %v1274, 0.17677669
      %v1604 = vmul.f32 %v1279, 0.17677669
      %v1605 = vmul.f32 %v1365, 0.17677669
      %v1606 = vmul.f32 %v1370, 0.17677669
      %v1607 = vmul.f32 %v1375, 0.17677669
      %v1608 = vmul.f32 %v1380, 0.17677669
      %v1609 = vmul.f32 %v1466, 0.17677669
      %v1610 = vmul.f32 %v1471, 0.17677669
      %v1611 = vmul.f32 %v1476, 0.17677669
      %v1612 = vmul.f32 %v1481, 0.17677669
      %v1613 = vmul.f32 %v1567, 0.17677669
      %v1614 = vmul.f32 %v1572, 0.17677669
      %v1615 = vmul.f32 %v1577, 0.17677669
      %v1616 = vmul.f32 %v1582, 0.17677669
      %v1617 = vadd.f32 %v1585, %v71
      %v1618 = vadd.f32 %v1586, %v72
      %v1619 = vadd.f32 %v1587, %v73
      %v1620 = vadd.f32 %v1588, %v74
      %v1621 = vadd.f32 %v1589, %v71
      %v1622 = vadd.f32 %v1590, %v72
      %v1623 = vadd.f32 %v1591, %v73
      %v1624 = vadd.f32 %v1592, %v74
      %v1625 = vadd.f32 %v1593, %v71
      %v1626 = vadd.f32 %v1594, %v72
      %v1627 = vadd.f32 %v1595, %v73
      %v1628 = vadd.f32 %v1596, %v74
      %v1629 = vadd.f32 %v1597, %v71
      %v1630 = vadd.f32 %v1598, %v72
      %v1631 = vadd.f32 %v1599, %v73
      %v1632 = vadd.f32 %v1600, %v74
      %v1633 = vadd.f32 %v1601, %v71
      %v1634 = vadd.f32 %v1602, %v72
      %v1635 = vadd.f32 %v1603, %v73
      %v1636 = vadd.f32 %v1604, %v74
      %v1637 = vadd.f32 %v1605, %v71
      %v1638 = vadd.f32 %v1606, %v72
      %v1639 = vadd.f32 %v1607, %v73
      %v1640 = vadd.f32 %v1608, %v74
      %v1641 = vadd.f32 %v1609, %v71
      %v1642 = vadd.f32 %v1610, %v72
      %v1643 = vadd.f32 %v1611, %v73
      %v1644 = vadd.f32 %v1612, %v74
      %v1645 = vadd.f32 %v1613, %v71
      %v1646 = vadd.f32 %v1614, %v72
      %v1647 = vadd.f32 %v1615, %v73
      %v1648 = vadd.f32 %v1616, %v74
      %v1649 = vsel %vm99, %v1617, -inf
      %1650 = vmax.xlane.f32.xlu0 %v1649
      %v1651 = vpop.xlane.xlu0 %1650
      %v1652 = vsel %vm99, %v1618, -inf
      %1653 = vmax.xlane.f32.xlu0 %v1652
      %v1654 = vpop.xlane.xlu0 %1653
      %v1655 = vsel %vm99, %v1619, -inf
      %1656 = vmax.xlane.f32.xlu0 %v1655
      %v1657 = vpop.xlane.xlu0 %1656
      %v1658 = vsel %vm99, %v1620, -inf
      %1659 = vmax.xlane.f32.xlu0 %v1658
      %v1660 = vpop.xlane.xlu0 %1659
      %v1661 = vsel %vm99, %v1621, -inf
      %1662 = vmax.xlane.f32.xlu0 %v1661
      %v1663 = vpop.xlane.xlu0 %1662
      %v1664 = vsel %vm99, %v1622, -inf
      %1665 = vmax.xlane.f32.xlu0 %v1664
      %v1666 = vpop.xlane.xlu0 %1665
      %v1667 = vsel %vm99, %v1623, -inf
      %1668 = vmax.xlane.f32.xlu0 %v1667
      %v1669 = vpop.xlane.xlu0 %1668
      %v1670 = vsel %vm99, %v1624, -inf
      %1671 = vmax.xlane.f32.xlu0 %v1670
      %v1672 = vpop.xlane.xlu0 %1671
      %v1673 = vsel %vm99, %v1625, -inf
      %1674 = vmax.xlane.f32.xlu0 %v1673
      %v1675 = vpop.xlane.xlu0 %1674
      %v1676 = vsel %vm99, %v1626, -inf
      %1677 = vmax.xlane.f32.xlu0 %v1676
      %v1678 = vpop.xlane.xlu0 %1677
      %v1679 = vsel %vm99, %v1627, -inf
      %1680 = vmax.xlane.f32.xlu0 %v1679
      %v1681 = vpop.xlane.xlu0 %1680
      %v1682 = vsel %vm99, %v1628, -inf
      %1683 = vmax.xlane.f32.xlu0 %v1682
      %v1684 = vpop.xlane.xlu0 %1683
      %v1685 = vsel %vm99, %v1629, -inf
      %1686 = vmax.xlane.f32.xlu0 %v1685
      %v1687 = vpop.xlane.xlu0 %1686
      %v1688 = vsel %vm99, %v1630, -inf
      %1689 = vmax.xlane.f32.xlu0 %v1688
      %v1690 = vpop.xlane.xlu0 %1689
      %v1691 = vsel %vm99, %v1631, -inf
      %1692 = vmax.xlane.f32.xlu0 %v1691
      %v1693 = vpop.xlane.xlu0 %1692
      %v1694 = vsel %vm99, %v1632, -inf
      %1695 = vmax.xlane.f32.xlu0 %v1694
      %v1696 = vpop.xlane.xlu0 %1695
      %v1697 = vsel %vm99, %v1633, -inf
      %1698 = vmax.xlane.f32.xlu0 %v1697
      %v1699 = vpop.xlane.xlu0 %1698
      %v1700 = vsel %vm99, %v1634, -inf
      %1701 = vmax.xlane.f32.xlu0 %v1700
      %v1702 = vpop.xlane.xlu0 %1701
      %v1703 = vsel %vm99, %v1635, -inf
      %1704 = vmax.xlane.f32.xlu0 %v1703
      %v1705 = vpop.xlane.xlu0 %1704
      %v1706 = vsel %vm99, %v1636, -inf
      %1707 = vmax.xlane.f32.xlu0 %v1706
      %v1708 = vpop.xlane.xlu0 %1707
      %v1709 = vsel %vm99, %v1637, -inf
      %1710 = vmax.xlane.f32.xlu0 %v1709
      %v1711 = vpop.xlane.xlu0 %1710
      %v1712 = vsel %vm99, %v1638, -inf
      %1713 = vmax.xlane.f32.xlu0 %v1712
      %v1714 = vpop.xlane.xlu0 %1713
      %v1715 = vsel %vm99, %v1639, -inf
      %1716 = vmax.xlane.f32.xlu0 %v1715
      %v1717 = vpop.xlane.xlu0 %1716
      %v1718 = vsel %vm99, %v1640, -inf
      %1719 = vmax.xlane.f32.xlu0 %v1718
      %v1720 = vpop.xlane.xlu0 %1719
      %v1721 = vsel %vm99, %v1641, -inf
      %1722 = vmax.xlane.f32.xlu0 %v1721
      %v1723 = vpop.xlane.xlu0 %1722
      %v1724 = vsel %vm99, %v1642, -inf
      %1725 = vmax.xlane.f32.xlu0 %v1724
      %v1726 = vpop.xlane.xlu0 %1725
      %v1727 = vsel %vm99, %v1643, -inf
      %1728 = vmax.xlane.f32.xlu0 %v1727
      %v1729 = vpop.xlane.xlu0 %1728
      %v1730 = vsel %vm99, %v1644, -inf
      %1731 = vmax.xlane.f32.xlu0 %v1730
      %v1732 = vpop.xlane.xlu0 %1731
      %v1733 = vsel %vm99, %v1645, -inf
      %1734 = vmax.xlane.f32.xlu0 %v1733
      %v1735 = vpop.xlane.xlu0 %1734
      %v1736 = vsel %vm99, %v1646, -inf
      %1737 = vmax.xlane.f32.xlu0 %v1736
      %v1738 = vpop.xlane.xlu0 %1737
      %v1739 = vsel %vm99, %v1647, -inf
      %1740 = vmax.xlane.f32.xlu0 %v1739
      %v1741 = vpop.xlane.xlu0 %1740
      %v1742 = vsel %vm99, %v1648, -inf
      %1743 = vmax.xlane.f32.xlu0 %v1742
      %v1744 = vpop.xlane.xlu0 %1743
      %v1745 = vsub.f32 %v1617, %v1651
      %v1746 = vsub.f32 %v1618, %v1654
      %v1747 = vsub.f32 %v1619, %v1657
      %v1748 = vsub.f32 %v1620, %v1660
      %v1749 = vsub.f32 %v1621, %v1663
      %v1750 = vsub.f32 %v1622, %v1666
      %v1751 = vsub.f32 %v1623, %v1669
      %v1752 = vsub.f32 %v1624, %v1672
      %v1753 = vsub.f32 %v1625, %v1675
      %v1754 = vsub.f32 %v1626, %v1678
      %v1755 = vsub.f32 %v1627, %v1681
      %v1756 = vsub.f32 %v1628, %v1684
      %v1757 = vsub.f32 %v1629, %v1687
      %v1758 = vsub.f32 %v1630, %v1690
      %v1759 = vsub.f32 %v1631, %v1693
      %v1760 = vsub.f32 %v1632, %v1696
      %v1761 = vsub.f32 %v1633, %v1699
      %v1762 = vsub.f32 %v1634, %v1702
      %v1763 = vsub.f32 %v1635, %v1705
      %v1764 = vsub.f32 %v1636, %v1708
      %v1765 = vsub.f32 %v1637, %v1711
      %v1766 = vsub.f32 %v1638, %v1714
      %v1767 = vsub.f32 %v1639, %v1717
      %v1768 = vsub.f32 %v1640, %v1720
      %v1769 = vsub.f32 %v1641, %v1723
      %v1770 = vsub.f32 %v1642, %v1726
      %v1771 = vsub.f32 %v1643, %v1729
      %v1772 = vsub.f32 %v1644, %v1732
      %v1773 = vsub.f32 %v1645, %v1735
      %v1774 = vsub.f32 %v1646, %v1738
      %v1775 = vsub.f32 %v1647, %v1741
      %v1776 = vsub.f32 %v1648, %v1744
      %v1777 = vmul.f32 %v1745, 1.442695
      %v1778 = vpow.pop %v1777
      %v1779 = vmul.f32 %v1746, 1.442695
      %v1780 = vpow.pop %v1779
      %v1781 = vmul.f32 %v1747, 1.442695
      %v1782 = vpow.pop %v1781
      %v1783 = vmul.f32 %v1748, 1.442695
      %v1784 = vpow.pop %v1783
      %v1785 = vmul.f32 %v1749, 1.442695
      %v1786 = vpow.pop %v1785
      %v1787 = vmul.f32 %v1750, 1.442695
      %v1788 = vpow.pop %v1787
      %v1789 = vmul.f32 %v1751, 1.442695
      %v1790 = vpow.pop %v1789
      %v1791 = vmul.f32 %v1752, 1.442695
      %v1792 = vpow.pop %v1791
      %v1793 = vmul.f32 %v1753, 1.442695
      %v1794 = vpow.pop %v1793
      %v1795 = vmul.f32 %v1754, 1.442695
      %v1796 = vpow.pop %v1795
      %v1797 = vmul.f32 %v1755, 1.442695
      %v1798 = vpow.pop %v1797
      %v1799 = vmul.f32 %v1756, 1.442695
      %v1800 = vpow.pop %v1799
      %v1801 = vmul.f32 %v1757, 1.442695
      %v1802 = vpow.pop %v1801
      %v1803 = vmul.f32 %v1758, 1.442695
      %v1804 = vpow.pop %v1803
      %v1805 = vmul.f32 %v1759, 1.442695
      %v1806 = vpow.pop %v1805
      %v1807 = vmul.f32 %v1760, 1.442695
      %v1808 = vpow.pop %v1807
      %v1809 = vmul.f32 %v1761, 1.442695
      %v1810 = vpow.pop %v1809
      %v1811 = vmul.f32 %v1762, 1.442695
      %v1812 = vpow.pop %v1811
      %v1813 = vmul.f32 %v1763, 1.442695
      %v1814 = vpow.pop %v1813
      %v1815 = vmul.f32 %v1764, 1.442695
      %v1816 = vpow.pop %v1815
      %v1817 = vmul.f32 %v1765, 1.442695
      %v1818 = vpow.pop %v1817
      %v1819 = vmul.f32 %v1766, 1.442695
      %v1820 = vpow.pop %v1819
      %v1821 = vmul.f32 %v1767, 1.442695
      %v1822 = vpow.pop %v1821
      %v1823 = vmul.f32 %v1768, 1.442695
      %v1824 = vpow.pop %v1823
      %v1825 = vmul.f32 %v1769, 1.442695
      %v1826 = vpow.pop %v1825
      %v1827 = vmul.f32 %v1770, 1.442695
      %v1828 = vpow.pop %v1827
      %v1829 = vmul.f32 %v1771, 1.442695
      %v1830 = vpow.pop %v1829
      %v1831 = vmul.f32 %v1772, 1.442695
      %v1832 = vpow.pop %v1831
      %v1833 = vmul.f32 %v1773, 1.442695
      %v1834 = vpow.pop %v1833
      %v1835 = vmul.f32 %v1774, 1.442695
      %v1836 = vpow.pop %v1835
      %v1837 = vmul.f32 %v1775, 1.442695
      %v1838 = vpow.pop %v1837
      %v1839 = vmul.f32 %v1776, 1.442695
      %v1840 = vpow.pop %v1839
      %v1841 = vsel %vm99, %v1778, 0.0
      %1842 = vadd.xlane.f32.xlu0 %v1841
      %v1843 = vpop.xlane.xlu0 %1842
      %v1844 = vsel %vm99, %v1780, 0.0
      %1845 = vadd.xlane.f32.xlu0 %v1844
      %v1846 = vpop.xlane.xlu0 %1845
      %v1847 = vsel %vm99, %v1782, 0.0
      %1848 = vadd.xlane.f32.xlu0 %v1847
      %v1849 = vpop.xlane.xlu0 %1848
      %v1850 = vsel %vm99, %v1784, 0.0
      %1851 = vadd.xlane.f32.xlu0 %v1850
      %v1852 = vpop.xlane.xlu0 %1851
      %v1853 = vsel %vm99, %v1786, 0.0
      %1854 = vadd.xlane.f32.xlu0 %v1853
      %v1855 = vpop.xlane.xlu0 %1854
      %v1856 = vsel %vm99, %v1788, 0.0
      %1857 = vadd.xlane.f32.xlu0 %v1856
      %v1858 = vpop.xlane.xlu0 %1857
      %v1859 = vsel %vm99, %v1790, 0.0
      %1860 = vadd.xlane.f32.xlu0 %v1859
      %v1861 = vpop.xlane.xlu0 %1860
      %v1862 = vsel %vm99, %v1792, 0.0
      %1863 = vadd.xlane.f32.xlu0 %v1862
      %v1864 = vpop.xlane.xlu0 %1863
      %v1865 = vsel %vm99, %v1794, 0.0
      %1866 = vadd.xlane.f32.xlu0 %v1865
      %v1867 = vpop.xlane.xlu0 %1866
      %v1868 = vsel %vm99, %v1796, 0.0
      %1869 = vadd.xlane.f32.xlu0 %v1868
      %v1870 = vpop.xlane.xlu0 %1869
      %v1871 = vsel %vm99, %v1798, 0.0
      %1872 = vadd.xlane.f32.xlu0 %v1871
      %v1873 = vpop.xlane.xlu0 %1872
      %v1874 = vsel %vm99, %v1800, 0.0
      %1875 = vadd.xlane.f32.xlu0 %v1874
      %v1876 = vpop.xlane.xlu0 %1875
      %v1877 = vsel %vm99, %v1802, 0.0
      %1878 = vadd.xlane.f32.xlu0 %v1877
      %v1879 = vpop.xlane.xlu0 %1878
      %v1880 = vsel %vm99, %v1804, 0.0
      %1881 = vadd.xlane.f32.xlu0 %v1880
      %v1882 = vpop.xlane.xlu0 %1881
      %v1883 = vsel %vm99, %v1806, 0.0
      %1884 = vadd.xlane.f32.xlu0 %v1883
      %v1885 = vpop.xlane.xlu0 %1884
      %v1886 = vsel %vm99, %v1808, 0.0
      %1887 = vadd.xlane.f32.xlu0 %v1886
      %v1888 = vpop.xlane.xlu0 %1887
      %v1889 = vsel %vm99, %v1810, 0.0
      %1890 = vadd.xlane.f32.xlu0 %v1889
      %v1891 = vpop.xlane.xlu0 %1890
      %v1892 = vsel %vm99, %v1812, 0.0
      %1893 = vadd.xlane.f32.xlu0 %v1892
      %v1894 = vpop.xlane.xlu0 %1893
      %v1895 = vsel %vm99, %v1814, 0.0
      %1896 = vadd.xlane.f32.xlu0 %v1895
      %v1897 = vpop.xlane.xlu0 %1896
      %v1898 = vsel %vm99, %v1816, 0.0
      %1899 = vadd.xlane.f32.xlu0 %v1898
      %v1900 = vpop.xlane.xlu0 %1899
      %v1901 = vsel %vm99, %v1818, 0.0
      %1902 = vadd.xlane.f32.xlu0 %v1901
      %v1903 = vpop.xlane.xlu0 %1902
      %v1904 = vsel %vm99, %v1820, 0.0
      %1905 = vadd.xlane.f32.xlu0 %v1904
      %v1906 = vpop.xlane.xlu0 %1905
      %v1907 = vsel %vm99, %v1822, 0.0
      %1908 = vadd.xlane.f32.xlu0 %v1907
      %v1909 = vpop.xlane.xlu0 %1908
      %v1910 = vsel %vm99, %v1824, 0.0
      %1911 = vadd.xlane.f32.xlu0 %v1910
      %v1912 = vpop.xlane.xlu0 %1911
      %v1913 = vsel %vm99, %v1826, 0.0
      %1914 = vadd.xlane.f32.xlu0 %v1913
      %v1915 = vpop.xlane.xlu0 %1914
      %v1916 = vsel %vm99, %v1828, 0.0
      %1917 = vadd.xlane.f32.xlu0 %v1916
      %v1918 = vpop.xlane.xlu0 %1917
      %v1919 = vsel %vm99, %v1830, 0.0
      %1920 = vadd.xlane.f32.xlu0 %v1919
      %v1921 = vpop.xlane.xlu0 %1920
      %v1922 = vsel %vm99, %v1832, 0.0
      %1923 = vadd.xlane.f32.xlu0 %v1922
      %v1924 = vpop.xlane.xlu0 %1923
      %v1925 = vsel %vm99, %v1834, 0.0
      %1926 = vadd.xlane.f32.xlu0 %v1925
      %v1927 = vpop.xlane.xlu0 %1926
      %v1928 = vsel %vm99, %v1836, 0.0
      %1929 = vadd.xlane.f32.xlu0 %v1928
      %v1930 = vpop.xlane.xlu0 %1929
      %v1931 = vsel %vm99, %v1838, 0.0
      %1932 = vadd.xlane.f32.xlu0 %v1931
      %v1933 = vpop.xlane.xlu0 %1932
      %v1934 = vsel %vm99, %v1840, 0.0
      %1935 = vadd.xlane.f32.xlu0 %v1934
      %v1936 = vpop.xlane.xlu0 %1935
      %v1937 = vrcp.pop %v1843
      %v1938 = vmul.f32 %v1778, %v1937
      %v1939 = vrcp.pop %v1846
      %v1940 = vmul.f32 %v1780, %v1939
      %v1941 = vrcp.pop %v1849
      %v1942 = vmul.f32 %v1782, %v1941
      %v1943 = vrcp.pop %v1852
      %v1944 = vmul.f32 %v1784, %v1943
      %v1945 = vrcp.pop %v1855
      %v1946 = vmul.f32 %v1786, %v1945
      %v1947 = vrcp.pop %v1858
      %v1948 = vmul.f32 %v1788, %v1947
      %v1949 = vrcp.pop %v1861
      %v1950 = vmul.f32 %v1790, %v1949
      %v1951 = vrcp.pop %v1864
      %v1952 = vmul.f32 %v1792, %v1951
      %v1953 = vrcp.pop %v1867
      %v1954 = vmul.f32 %v1794, %v1953
      %v1955 = vrcp.pop %v1870
      %v1956 = vmul.f32 %v1796, %v1955
      %v1957 = vrcp.pop %v1873
      %v1958 = vmul.f32 %v1798, %v1957
      %v1959 = vrcp.pop %v1876
      %v1960 = vmul.f32 %v1800, %v1959
      %v1961 = vrcp.pop %v1879
      %v1962 = vmul.f32 %v1802, %v1961
      %v1963 = vrcp.pop %v1882
      %v1964 = vmul.f32 %v1804, %v1963
      %v1965 = vrcp.pop %v1885
      %v1966 = vmul.f32 %v1806, %v1965
      %v1967 = vrcp.pop %v1888
      %v1968 = vmul.f32 %v1808, %v1967
      %v1969 = vrcp.pop %v1891
      %v1970 = vmul.f32 %v1810, %v1969
      %v1971 = vrcp.pop %v1894
      %v1972 = vmul.f32 %v1812, %v1971
      %v1973 = vrcp.pop %v1897
      %v1974 = vmul.f32 %v1814, %v1973
      %v1975 = vrcp.pop %v1900
      %v1976 = vmul.f32 %v1816, %v1975
      %v1977 = vrcp.pop %v1903
      %v1978 = vmul.f32 %v1818, %v1977
      %v1979 = vrcp.pop %v1906
      %v1980 = vmul.f32 %v1820, %v1979
      %v1981 = vrcp.pop %v1909
      %v1982 = vmul.f32 %v1822, %v1981
      %v1983 = vrcp.pop %v1912
      %v1984 = vmul.f32 %v1824, %v1983
      %v1985 = vrcp.pop %v1915
      %v1986 = vmul.f32 %v1826, %v1985
      %v1987 = vrcp.pop %v1918
      %v1988 = vmul.f32 %v1828, %v1987
      %v1989 = vrcp.pop %v1921
      %v1990 = vmul.f32 %v1830, %v1989
      %v1991 = vrcp.pop %v1924
      %v1992 = vmul.f32 %v1832, %v1991
      %v1993 = vrcp.pop %v1927
      %v1994 = vmul.f32 %v1834, %v1993
      %v1995 = vrcp.pop %v1930
      %v1996 = vmul.f32 %v1836, %v1995
      %v1997 = vrcp.pop %v1933
      %v1998 = vmul.f32 %v1838, %v1997
      %v1999 = vrcp.pop %v1936
      %v2000 = vmul.f32 %v1840, %v1999
      %v2002 = vsel %vm99, %v1938, 0
      %v2005 = vsel %vm99, %v1940, 0
      %v2008 = vsel %vm99, %v1942, 0
      %v2011 = vsel %vm99, %v1944, 0
      %2013 = vmatprep.subr.mxu0 0.0
      %2014 = vmatpush1.msra.mxu0 0.0
      %2015 = vmatprep.subr.mxu0 0.0
      %2016 = vmatpush1.msra.mxu0 0.0
      %2017 = vmatprep.subr.mxu0 0.0
      %2018 = vmatpush1.msra.mxu0 0.0
      %2019 = vmatprep.subr.mxu0 0.0
      %2020 = vmatpush1.msra.mxu0 0.0
      %2021 = vmatprep.subr.mxu0 0.0
      %2022 = vmatpush1.msra.mxu0 0.0
      %2023 = vmatprep.subr.mxu0 0.0
      %2024 = vmatpush1.msra.mxu0 0.0
      %2025 = vmatprep.subr.mxu0 0.0
      %2026 = vmatpush1.msra.mxu0 0.0
      %2027 = vmatprep.subr.mxu0 0.0
      %2028 = vmatpush1.msra.mxu0 0.0
      %2029 = vmatprep.subr.mxu0 0.0
      %2030 = vmatpush1.msra.mxu0 0.0
      %2031 = vmatprep.subr.mxu0 0.0
      %2032 = vmatpush1.msra.mxu0 0.0
      %2033 = vmatprep.subr.mxu0 0.0
      %2034 = vmatpush1.msra.mxu0 0.0
      %2035 = vmatprep.subr.mxu0 0.0
      %2036 = vmatpush1.msra.mxu0 0.0
      %2037 = vmatprep.subr.mxu0 0.0
      %2038 = vmatpush1.msra.mxu0 %v561
      %2039 = vmatprep.subr.mxu0 0.0
      %2040 = vmatpush1.msra.mxu0 %v556
      %2041 = vmatprep.subr.mxu0 0.0
      %2042 = vmatpush1.msra.mxu0 %v551
      %2043 = vmatprep.subr.mxu0 0.0
      %2044 = vmatpush1.msra.mxu0 %v546
      %2045 = vmatprep.subr.mxu0 0.0
      %2046 = vmatpush2.msra.mxu0 0.0
      %2047 = vmatprep.subr.mxu0 0.0
      %2048 = vmatpush2.msra.mxu0 0.0
      %2049 = vmatprep.subr.mxu0 0.0
      %2050 = vmatpush2.msra.mxu0 0.0
      %2051 = vmatprep.subr.mxu0 0.0
      %2052 = vmatpush2.msra.mxu0 0.0
      %2053 = vmatprep.subr.mxu0 0.0
      %2054 = vmatpush2.msra.mxu0 0.0
      %2055 = vmatprep.subr.mxu0 0.0
      %2056 = vmatpush2.msra.mxu0 0.0
      %2057 = vmatprep.subr.mxu0 0.0
      %2058 = vmatpush2.msra.mxu0 0.0
      %2059 = vmatprep.subr.mxu0 0.0
      %2060 = vmatpush2.msra.mxu0 0.0
      %2061 = vmatprep.subr.mxu0 0.0
      %2062 = vmatpush2.msra.mxu0 0.0
      %2063 = vmatprep.subr.mxu0 0.0
      %2064 = vmatpush2.msra.mxu0 0.0
      %2065 = vmatprep.subr.mxu0 0.0
      %2066 = vmatpush2.msra.mxu0 0.0
      %2067 = vmatprep.subr.mxu0 0.0
      %2068 = vmatpush2.msra.mxu0 0.0
      %2069 = vmatprep.subr.mxu0 0.0
      %2070 = vmatpush2.msra.mxu0 0.0
      %2071 = vmatprep.subr.mxu0 0.0
      %2072 = vmatpush2.msra.mxu0 0.0
      %2073 = vmatprep.subr.mxu0 0.0
      %2074 = vmatpush2.msra.mxu0 0.0
      %2075 = vmatprep.subr.mxu0 0.0
      %2076 = vmatpush2.msra.mxu0 0.0
      %2077 = vmatprep.mubr.f32.mxu0 0.0
      %2078 = vmatmul.mubr.f32.gmra.mxu0 %v2002
      %v2079 = vpop.f32.mrf.mxu0
      %v2080 = vadd.f32 0.0, %v2079
      %v2081 = vpop.f32.mrf.mxu0
      %2082 = vmatprep.mubr.f32.mxu0 0.0
      %2083 = vmatmul.mubr.f32.gmra.mxu0 %v2005
      %v2084 = vpop.f32.mrf.mxu0
      %v2085 = vadd.f32 0.0, %v2084
      %v2086 = vpop.f32.mrf.mxu0
      %2087 = vmatprep.mubr.f32.mxu0 0.0
      %2088 = vmatmul.mubr.f32.gmra.mxu0 %v2008
      %v2089 = vpop.f32.mrf.mxu0
      %v2090 = vadd.f32 0.0, %v2089
      %v2091 = vpop.f32.mrf.mxu0
      %2092 = vmatprep.mubr.f32.mxu0 0.0
      %2093 = vmatmul.mubr.f32.gmra.mxu0 %v2011
      %v2094 = vpop.f32.mrf.mxu0
      %v2095 = vadd.f32 0.0, %v2094
      %v2096 = vpop.f32.mrf.mxu0
      %2097 = vdwg.mxu0
      %v2099 = vsel %vm99, %v1946, 0
      %v2102 = vsel %vm99, %v1948, 0
      %v2105 = vsel %vm99, %v1950, 0
      %v2108 = vsel %vm99, %v1952, 0
      %2110 = vmatprep.subr.mxu0 0.0
      %2111 = vmatpush1.msra.mxu0 0.0
      %2112 = vmatprep.subr.mxu0 0.0
      %2113 = vmatpush1.msra.mxu0 0.0
      %2114 = vmatprep.subr.mxu0 0.0
      %2115 = vmatpush1.msra.mxu0 0.0
      %2116 = vmatprep.subr.mxu0 0.0
      %2117 = vmatpush1.msra.mxu0 0.0
      %2118 = vmatprep.subr.mxu0 0.0
      %2119 = vmatpush1.msra.mxu0 0.0
      %2120 = vmatprep.subr.mxu0 0.0
      %2121 = vmatpush1.msra.mxu0 0.0
      %2122 = vmatprep.subr.mxu0 0.0
      %2123 = vmatpush1.msra.mxu0 0.0
      %2124 = vmatprep.subr.mxu0 0.0
      %2125 = vmatpush1.msra.mxu0 0.0
      %2126 = vmatprep.subr.mxu0 0.0
      %2127 = vmatpush1.msra.mxu0 0.0
      %2128 = vmatprep.subr.mxu0 0.0
      %2129 = vmatpush1.msra.mxu0 0.0
      %2130 = vmatprep.subr.mxu0 0.0
      %2131 = vmatpush1.msra.mxu0 0.0
      %2132 = vmatprep.subr.mxu0 0.0
      %2133 = vmatpush1.msra.mxu0 0.0
      %2134 = vmatprep.subr.mxu0 0.0
      %2135 = vmatpush1.msra.mxu0 %v581
      %2136 = vmatprep.subr.mxu0 0.0
      %2137 = vmatpush1.msra.mxu0 %v576
      %2138 = vmatprep.subr.mxu0 0.0
      %2139 = vmatpush1.msra.mxu0 %v571
      %2140 = vmatprep.subr.mxu0 0.0
      %2141 = vmatpush1.msra.mxu0 %v566
      %2142 = vmatprep.subr.mxu0 0.0
      %2143 = vmatpush2.msra.mxu0 0.0
      %2144 = vmatprep.subr.mxu0 0.0
      %2145 = vmatpush2.msra.mxu0 0.0
      %2146 = vmatprep.subr.mxu0 0.0
      %2147 = vmatpush2.msra.mxu0 0.0
      %2148 = vmatprep.subr.mxu0 0.0
      %2149 = vmatpush2.msra.mxu0 0.0
      %2150 = vmatprep.subr.mxu0 0.0
      %2151 = vmatpush2.msra.mxu0 0.0
      %2152 = vmatprep.subr.mxu0 0.0
      %2153 = vmatpush2.msra.mxu0 0.0
      %2154 = vmatprep.subr.mxu0 0.0
      %2155 = vmatpush2.msra.mxu0 0.0
      %2156 = vmatprep.subr.mxu0 0.0
      %2157 = vmatpush2.msra.mxu0 0.0
      %2158 = vmatprep.subr.mxu0 0.0
      %2159 = vmatpush2.msra.mxu0 0.0
      %2160 = vmatprep.subr.mxu0 0.0
      %2161 = vmatpush2.msra.mxu0 0.0
      %2162 = vmatprep.subr.mxu0 0.0
      %2163 = vmatpush2.msra.mxu0 0.0
      %2164 = vmatprep.subr.mxu0 0.0
      %2165 = vmatpush2.msra.mxu0 0.0
      %2166 = vmatprep.subr.mxu0 0.0
      %2167 = vmatpush2.msra.mxu0 0.0
      %2168 = vmatprep.subr.mxu0 0.0
      %2169 = vmatpush2.msra.mxu0 0.0
      %2170 = vmatprep.subr.mxu0 0.0
      %2171 = vmatpush2.msra.mxu0 0.0
      %2172 = vmatprep.subr.mxu0 0.0
      %2173 = vmatpush2.msra.mxu0 0.0
      %2174 = vmatprep.mubr.f32.mxu0 0.0
      %2175 = vmatmul.mubr.f32.gmra.mxu0 %v2099
      %v2176 = vpop.f32.mrf.mxu0
      %v2177 = vadd.f32 0.0, %v2176
      %v2178 = vpop.f32.mrf.mxu0
      %2179 = vmatprep.mubr.f32.mxu0 0.0
      %2180 = vmatmul.mubr.f32.gmra.mxu0 %v2102
      %v2181 = vpop.f32.mrf.mxu0
      %v2182 = vadd.f32 0.0, %v2181
      %v2183 = vpop.f32.mrf.mxu0
      %2184 = vmatprep.mubr.f32.mxu0 0.0
      %2185 = vmatmul.mubr.f32.gmra.mxu0 %v2105
      %v2186 = vpop.f32.mrf.mxu0
      %v2187 = vadd.f32 0.0, %v2186
      %v2188 = vpop.f32.mrf.mxu0
      %2189 = vmatprep.mubr.f32.mxu0 0.0
      %2190 = vmatmul.mubr.f32.gmra.mxu0 %v2108
      %v2191 = vpop.f32.mrf.mxu0
      %v2192 = vadd.f32 0.0, %v2191
      %v2193 = vpop.f32.mrf.mxu0
      %2194 = vdwg.mxu0
      %v2196 = vsel %vm99, %v1954, 0
      %v2199 = vsel %vm99, %v1956, 0
      %v2202 = vsel %vm99, %v1958, 0
      %v2205 = vsel %vm99, %v1960, 0
      %2207 = vmatprep.subr.mxu0 0.0
      %2208 = vmatpush1.msra.mxu0 0.0
      %2209 = vmatprep.subr.mxu0 0.0
      %2210 = vmatpush1.msra.mxu0 0.0
      %2211 = vmatprep.subr.mxu0 0.0
      %2212 = vmatpush1.msra.mxu0 0.0
      %2213 = vmatprep.subr.mxu0 0.0
      %2214 = vmatpush1.msra.mxu0 0.0
      %2215 = vmatprep.subr.mxu0 0.0
      %2216 = vmatpush1.msra.mxu0 0.0
      %2217 = vmatprep.subr.mxu0 0.0
      %2218 = vmatpush1.msra.mxu0 0.0
      %2219 = vmatprep.subr.mxu0 0.0
      %2220 = vmatpush1.msra.mxu0 0.0
      %2221 = vmatprep.subr.mxu0 0.0
      %2222 = vmatpush1.msra.mxu0 0.0
      %2223 = vmatprep.subr.mxu0 0.0
      %2224 = vmatpush1.msra.mxu0 0.0
      %2225 = vmatprep.subr.mxu0 0.0
      %2226 = vmatpush1.msra.mxu0 0.0
      %2227 = vmatprep.subr.mxu0 0.0
      %2228 = vmatpush1.msra.mxu0 0.0
      %2229 = vmatprep.subr.mxu0 0.0
      %2230 = vmatpush1.msra.mxu0 0.0
      %2231 = vmatprep.subr.mxu0 0.0
      %2232 = vmatpush1.msra.mxu0 %v707
      %2233 = vmatprep.subr.mxu0 0.0
      %2234 = vmatpush1.msra.mxu0 %v705
      %2235 = vmatprep.subr.mxu0 0.0
      %2236 = vmatpush1.msra.mxu0 %v703
      %2237 = vmatprep.subr.mxu0 0.0
      %2238 = vmatpush1.msra.mxu0 %v701
      %2239 = vmatprep.subr.mxu0 0.0
      %2240 = vmatpush2.msra.mxu0 0.0
      %2241 = vmatprep.subr.mxu0 0.0
      %2242 = vmatpush2.msra.mxu0 0.0
      %2243 = vmatprep.subr.mxu0 0.0
      %2244 = vmatpush2.msra.mxu0 0.0
      %2245 = vmatprep.subr.mxu0 0.0
      %2246 = vmatpush2.msra.mxu0 0.0
      %2247 = vmatprep.subr.mxu0 0.0
      %2248 = vmatpush2.msra.mxu0 0.0
      %2249 = vmatprep.subr.mxu0 0.0
      %2250 = vmatpush2.msra.mxu0 0.0
      %2251 = vmatprep.subr.mxu0 0.0
      %2252 = vmatpush2.msra.mxu0 0.0
      %2253 = vmatprep.subr.mxu0 0.0
      %2254 = vmatpush2.msra.mxu0 0.0
      %2255 = vmatprep.subr.mxu0 0.0
      %2256 = vmatpush2.msra.mxu0 0.0
      %2257 = vmatprep.subr.mxu0 0.0
      %2258 = vmatpush2.msra.mxu0 0.0
      %2259 = vmatprep.subr.mxu0 0.0
      %2260 = vmatpush2.msra.mxu0 0.0
      %2261 = vmatprep.subr.mxu0 0.0
      %2262 = vmatpush2.msra.mxu0 0.0
      %2263 = vmatprep.subr.mxu0 0.0
      %2264 = vmatpush2.msra.mxu0 0.0
      %2265 = vmatprep.subr.mxu0 0.0
      %2266 = vmatpush2.msra.mxu0 0.0
      %2267 = vmatprep.subr.mxu0 0.0
      %2268 = vmatpush2.msra.mxu0 0.0
      %2269 = vmatprep.subr.mxu0 0.0
      %2270 = vmatpush2.msra.mxu0 0.0
      %2271 = vmatprep.mubr.f32.mxu0 0.0
      %2272 = vmatmul.mubr.f32.gmra.mxu0 %v2196
      %v2273 = vpop.f32.mrf.mxu0
      %v2274 = vadd.f32 0.0, %v2273
      %v2275 = vpop.f32.mrf.mxu0
      %2276 = vmatprep.mubr.f32.mxu0 0.0
      %2277 = vmatmul.mubr.f32.gmra.mxu0 %v2199
      %v2278 = vpop.f32.mrf.mxu0
      %v2279 = vadd.f32 0.0, %v2278
      %v2280 = vpop.f32.mrf.mxu0
      %2281 = vmatprep.mubr.f32.mxu0 0.0
      %2282 = vmatmul.mubr.f32.gmra.mxu0 %v2202
      %v2283 = vpop.f32.mrf.mxu0
      %v2284 = vadd.f32 0.0, %v2283
      %v2285 = vpop.f32.mrf.mxu0
      %2286 = vmatprep.mubr.f32.mxu0 0.0
      %2287 = vmatmul.mubr.f32.gmra.mxu0 %v2205
      %v2288 = vpop.f32.mrf.mxu0
      %v2289 = vadd.f32 0.0, %v2288
      %v2290 = vpop.f32.mrf.mxu0
      %2291 = vdwg.mxu0
      %v2293 = vsel %vm99, %v1962, 0
      %v2296 = vsel %vm99, %v1964, 0
      %v2299 = vsel %vm99, %v1966, 0
      %v2302 = vsel %vm99, %v1968, 0
      %2304 = vmatprep.subr.mxu0 0.0
      %2305 = vmatpush1.msra.mxu0 0.0
      %2306 = vmatprep.subr.mxu0 0.0
      %2307 = vmatpush1.msra.mxu0 0.0
      %2308 = vmatprep.subr.mxu0 0.0
      %2309 = vmatpush1.msra.mxu0 0.0
      %2310 = vmatprep.subr.mxu0 0.0
      %2311 = vmatpush1.msra.mxu0 0.0
      %2312 = vmatprep.subr.mxu0 0.0
      %2313 = vmatpush1.msra.mxu0 0.0
      %2314 = vmatprep.subr.mxu0 0.0
      %2315 = vmatpush1.msra.mxu0 0.0
      %2316 = vmatprep.subr.mxu0 0.0
      %2317 = vmatpush1.msra.mxu0 0.0
      %2318 = vmatprep.subr.mxu0 0.0
      %2319 = vmatpush1.msra.mxu0 0.0
      %2320 = vmatprep.subr.mxu0 0.0
      %2321 = vmatpush1.msra.mxu0 0.0
      %2322 = vmatprep.subr.mxu0 0.0
      %2323 = vmatpush1.msra.mxu0 0.0
      %2324 = vmatprep.subr.mxu0 0.0
      %2325 = vmatpush1.msra.mxu0 0.0
      %2326 = vmatprep.subr.mxu0 0.0
      %2327 = vmatpush1.msra.mxu0 0.0
      %2328 = vmatprep.subr.mxu0 0.0
      %2329 = vmatpush1.msra.mxu0 %v723
      %2330 = vmatprep.subr.mxu0 0.0
      %2331 = vmatpush1.msra.mxu0 %v721
      %2332 = vmatprep.subr.mxu0 0.0
      %2333 = vmatpush1.msra.mxu0 %v719
      %2334 = vmatprep.subr.mxu0 0.0
      %2335 = vmatpush1.msra.mxu0 %v717
      %2336 = vmatprep.subr.mxu0 0.0
      %2337 = vmatpush2.msra.mxu0 0.0
      %2338 = vmatprep.subr.mxu0 0.0
      %2339 = vmatpush2.msra.mxu0 0.0
      %2340 = vmatprep.subr.mxu0 0.0
      %2341 = vmatpush2.msra.mxu0 0.0
      %2342 = vmatprep.subr.mxu0 0.0
      %2343 = vmatpush2.msra.mxu0 0.0
      %2344 = vmatprep.subr.mxu0 0.0
      %2345 = vmatpush2.msra.mxu0 0.0
      %2346 = vmatprep.subr.mxu0 0.0
      %2347 = vmatpush2.msra.mxu0 0.0
      %2348 = vmatprep.subr.mxu0 0.0
      %2349 = vmatpush2.msra.mxu0 0.0
      %2350 = vmatprep.subr.mxu0 0.0
      %2351 = vmatpush2.msra.mxu0 0.0
      %2352 = vmatprep.subr.mxu0 0.0
      %2353 = vmatpush2.msra.mxu0 0.0
      %2354 = vmatprep.subr.mxu0 0.0
      %2355 = vmatpush2.msra.mxu0 0.0
      %2356 = vmatprep.subr.mxu0 0.0
      %2357 = vmatpush2.msra.mxu0 0.0
      %2358 = vmatprep.subr.mxu0 0.0
      %2359 = vmatpush2.msra.mxu0 0.0
      %2360 = vmatprep.subr.mxu0 0.0
      %2361 = vmatpush2.msra.mxu0 0.0
      %2362 = vmatprep.subr.mxu0 0.0
      %2363 = vmatpush2.msra.mxu0 0.0
      %2364 = vmatprep.subr.mxu0 0.0
      %2365 = vmatpush2.msra.mxu0 0.0
      %2366 = vmatprep.subr.mxu0 0.0
      %2367 = vmatpush2.msra.mxu0 0.0
      %2368 = vmatprep.mubr.f32.mxu0 0.0
      %2369 = vmatmul.mubr.f32.gmra.mxu0 %v2293
      %v2370 = vpop.f32.mrf.mxu0
      %v2371 = vadd.f32 0.0, %v2370
      %v2372 = vpop.f32.mrf.mxu0
      %2373 = vmatprep.mubr.f32.mxu0 0.0
      %2374 = vmatmul.mubr.f32.gmra.mxu0 %v2296
      %v2375 = vpop.f32.mrf.mxu0
      %v2376 = vadd.f32 0.0, %v2375
      %v2377 = vpop.f32.mrf.mxu0
      %2378 = vmatprep.mubr.f32.mxu0 0.0
      %2379 = vmatmul.mubr.f32.gmra.mxu0 %v2299
      %v2380 = vpop.f32.mrf.mxu0
      %v2381 = vadd.f32 0.0, %v2380
      %v2382 = vpop.f32.mrf.mxu0
      %2383 = vmatprep.mubr.f32.mxu0 0.0
      %2384 = vmatmul.mubr.f32.gmra.mxu0 %v2302
      %v2385 = vpop.f32.mrf.mxu0
      %v2386 = vadd.f32 0.0, %v2385
      %v2387 = vpop.f32.mrf.mxu0
      %2388 = vdwg.mxu0
      %v2390 = vsel %vm99, %v1970, 0
      %v2393 = vsel %vm99, %v1972, 0
      %v2396 = vsel %vm99, %v1974, 0
      %v2399 = vsel %vm99, %v1976, 0
      %2401 = vmatprep.subr.mxu0 0.0
      %2402 = vmatpush1.msra.mxu0 0.0
      %2403 = vmatprep.subr.mxu0 0.0
      %2404 = vmatpush1.msra.mxu0 0.0
      %2405 = vmatprep.subr.mxu0 0.0
      %2406 = vmatpush1.msra.mxu0 0.0
      %2407 = vmatprep.subr.mxu0 0.0
      %2408 = vmatpush1.msra.mxu0 0.0
      %2409 = vmatprep.subr.mxu0 0.0
      %2410 = vmatpush1.msra.mxu0 0.0
      %2411 = vmatprep.subr.mxu0 0.0
      %2412 = vmatpush1.msra.mxu0 0.0
      %2413 = vmatprep.subr.mxu0 0.0
      %2414 = vmatpush1.msra.mxu0 0.0
      %2415 = vmatprep.subr.mxu0 0.0
      %2416 = vmatpush1.msra.mxu0 0.0
      %2417 = vmatprep.subr.mxu0 0.0
      %2418 = vmatpush1.msra.mxu0 0.0
      %2419 = vmatprep.subr.mxu0 0.0
      %2420 = vmatpush1.msra.mxu0 0.0
      %2421 = vmatprep.subr.mxu0 0.0
      %2422 = vmatpush1.msra.mxu0 0.0
      %2423 = vmatprep.subr.mxu0 0.0
      %2424 = vmatpush1.msra.mxu0 0.0
      %2425 = vmatprep.subr.mxu0 0.0
      %2426 = vmatpush1.msra.mxu0 %v735
      %2427 = vmatprep.subr.mxu0 0.0
      %2428 = vmatpush1.msra.mxu0 %v733
      %2429 = vmatprep.subr.mxu0 0.0
      %2430 = vmatpush1.msra.mxu0 %v731
      %2431 = vmatprep.subr.mxu0 0.0
      %2432 = vmatpush1.msra.mxu0 %v729
      %2433 = vmatprep.subr.mxu0 0.0
      %2434 = vmatpush2.msra.mxu0 0.0
      %2435 = vmatprep.subr.mxu0 0.0
      %2436 = vmatpush2.msra.mxu0 0.0
      %2437 = vmatprep.subr.mxu0 0.0
      %2438 = vmatpush2.msra.mxu0 0.0
      %2439 = vmatprep.subr.mxu0 0.0
      %2440 = vmatpush2.msra.mxu0 0.0
      %2441 = vmatprep.subr.mxu0 0.0
      %2442 = vmatpush2.msra.mxu0 0.0
      %2443 = vmatprep.subr.mxu0 0.0
      %2444 = vmatpush2.msra.mxu0 0.0
      %2445 = vmatprep.subr.mxu0 0.0
      %2446 = vmatpush2.msra.mxu0 0.0
      %2447 = vmatprep.subr.mxu0 0.0
      %2448 = vmatpush2.msra.mxu0 0.0
      %2449 = vmatprep.subr.mxu0 0.0
      %2450 = vmatpush2.msra.mxu0 0.0
      %2451 = vmatprep.subr.mxu0 0.0
      %2452 = vmatpush2.msra.mxu0 0.0
      %2453 = vmatprep.subr.mxu0 0.0
      %2454 = vmatpush2.msra.mxu0 0.0
      %2455 = vmatprep.subr.mxu0 0.0
      %2456 = vmatpush2.msra.mxu0 0.0
      %2457 = vmatprep.subr.mxu0 0.0
      %2458 = vmatpush2.msra.mxu0 0.0
      %2459 = vmatprep.subr.mxu0 0.0
      %2460 = vmatpush2.msra.mxu0 0.0
      %2461 = vmatprep.subr.mxu0 0.0
      %2462 = vmatpush2.msra.mxu0 0.0
      %2463 = vmatprep.subr.mxu0 0.0
      %2464 = vmatpush2.msra.mxu0 0.0
      %2465 = vmatprep.mubr.f32.mxu0 0.0
      %2466 = vmatmul.mubr.f32.gmra.mxu0 %v2390
      %v2467 = vpop.f32.mrf.mxu0
      %v2468 = vadd.f32 0.0, %v2467
      %v2469 = vpop.f32.mrf.mxu0
      %2470 = vmatprep.mubr.f32.mxu0 0.0
      %2471 = vmatmul.mubr.f32.gmra.mxu0 %v2393
      %v2472 = vpop.f32.mrf.mxu0
      %v2473 = vadd.f32 0.0, %v2472
      %v2474 = vpop.f32.mrf.mxu0
      %2475 = vmatprep.mubr.f32.mxu0 0.0
      %2476 = vmatmul.mubr.f32.gmra.mxu0 %v2396
      %v2477 = vpop.f32.mrf.mxu0
      %v2478 = vadd.f32 0.0, %v2477
      %v2479 = vpop.f32.mrf.mxu0
      %2480 = vmatprep.mubr.f32.mxu0 0.0
      %2481 = vmatmul.mubr.f32.gmra.mxu0 %v2399
      %v2482 = vpop.f32.mrf.mxu0
      %v2483 = vadd.f32 0.0, %v2482
      %v2484 = vpop.f32.mrf.mxu0
      %2485 = vdwg.mxu0
      %v2487 = vsel %vm99, %v1978, 0
      %v2490 = vsel %vm99, %v1980, 0
      %v2493 = vsel %vm99, %v1982, 0
      %v2496 = vsel %vm99, %v1984, 0
      %2498 = vmatprep.subr.mxu0 0.0
      %2499 = vmatpush1.msra.mxu0 0.0
      %2500 = vmatprep.subr.mxu0 0.0
      %2501 = vmatpush1.msra.mxu0 0.0
      %2502 = vmatprep.subr.mxu0 0.0
      %2503 = vmatpush1.msra.mxu0 0.0
      %2504 = vmatprep.subr.mxu0 0.0
      %2505 = vmatpush1.msra.mxu0 0.0
      %2506 = vmatprep.subr.mxu0 0.0
      %2507 = vmatpush1.msra.mxu0 0.0
      %2508 = vmatprep.subr.mxu0 0.0
      %2509 = vmatpush1.msra.mxu0 0.0
      %2510 = vmatprep.subr.mxu0 0.0
      %2511 = vmatpush1.msra.mxu0 0.0
      %2512 = vmatprep.subr.mxu0 0.0
      %2513 = vmatpush1.msra.mxu0 0.0
      %2514 = vmatprep.subr.mxu0 0.0
      %2515 = vmatpush1.msra.mxu0 0.0
      %2516 = vmatprep.subr.mxu0 0.0
      %2517 = vmatpush1.msra.mxu0 0.0
      %2518 = vmatprep.subr.mxu0 0.0
      %2519 = vmatpush1.msra.mxu0 0.0
      %2520 = vmatprep.subr.mxu0 0.0
      %2521 = vmatpush1.msra.mxu0 0.0
      %2522 = vmatprep.subr.mxu0 0.0
      %2523 = vmatpush1.msra.mxu0 %v747
      %2524 = vmatprep.subr.mxu0 0.0
      %2525 = vmatpush1.msra.mxu0 %v745
      %2526 = vmatprep.subr.mxu0 0.0
      %2527 = vmatpush1.msra.mxu0 %v743
      %2528 = vmatprep.subr.mxu0 0.0
      %2529 = vmatpush1.msra.mxu0 %v741
      %2530 = vmatprep.subr.mxu0 0.0
      %2531 = vmatpush2.msra.mxu0 0.0
      %2532 = vmatprep.subr.mxu0 0.0
      %2533 = vmatpush2.msra.mxu0 0.0
      %2534 = vmatprep.subr.mxu0 0.0
      %2535 = vmatpush2.msra.mxu0 0.0
      %2536 = vmatprep.subr.mxu0 0.0
      %2537 = vmatpush2.msra.mxu0 0.0
      %2538 = vmatprep.subr.mxu0 0.0
      %2539 = vmatpush2.msra.mxu0 0.0
      %2540 = vmatprep.subr.mxu0 0.0
      %2541 = vmatpush2.msra.mxu0 0.0
      %2542 = vmatprep.subr.mxu0 0.0
      %2543 = vmatpush2.msra.mxu0 0.0
      %2544 = vmatprep.subr.mxu0 0.0
      %2545 = vmatpush2.msra.mxu0 0.0
      %2546 = vmatprep.subr.mxu0 0.0
      %2547 = vmatpush2.msra.mxu0 0.0
      %2548 = vmatprep.subr.mxu0 0.0
      %2549 = vmatpush2.msra.mxu0 0.0
      %2550 = vmatprep.subr.mxu0 0.0
      %2551 = vmatpush2.msra.mxu0 0.0
      %2552 = vmatprep.subr.mxu0 0.0
      %2553 = vmatpush2.msra.mxu0 0.0
      %2554 = vmatprep.subr.mxu0 0.0
      %2555 = vmatpush2.msra.mxu0 0.0
      %2556 = vmatprep.subr.mxu0 0.0
      %2557 = vmatpush2.msra.mxu0 0.0
      %2558 = vmatprep.subr.mxu0 0.0
      %2559 = vmatpush2.msra.mxu0 0.0
      %2560 = vmatprep.subr.mxu0 0.0
      %2561 = vmatpush2.msra.mxu0 0.0
      %2562 = vmatprep.mubr.f32.mxu0 0.0
      %2563 = vmatmul.mubr.f32.gmra.mxu0 %v2487
      %v2564 = vpop.f32.mrf.mxu0
      %v2565 = vadd.f32 0.0, %v2564
      %v2566 = vpop.f32.mrf.mxu0
      %2567 = vmatprep.mubr.f32.mxu0 0.0
      %2568 = vmatmul.mubr.f32.gmra.mxu0 %v2490
      %v2569 = vpop.f32.mrf.mxu0
      %v2570 = vadd.f32 0.0, %v2569
      %v2571 = vpop.f32.mrf.mxu0
      %2572 = vmatprep.mubr.f32.mxu0 0.0
      %2573 = vmatmul.mubr.f32.gmra.mxu0 %v2493
      %v2574 = vpop.f32.mrf.mxu0
      %v2575 = vadd.f32 0.0, %v2574
      %v2576 = vpop.f32.mrf.mxu0
      %2577 = vmatprep.mubr.f32.mxu0 0.0
      %2578 = vmatmul.mubr.f32.gmra.mxu0 %v2496
      %v2579 = vpop.f32.mrf.mxu0
      %v2580 = vadd.f32 0.0, %v2579
      %v2581 = vpop.f32.mrf.mxu0
      %2582 = vdwg.mxu0
      %v2584 = vsel %vm99, %v1986, 0
      %v2587 = vsel %vm99, %v1988, 0
      %v2590 = vsel %vm99, %v1990, 0
      %v2593 = vsel %vm99, %v1992, 0
      %2595 = vmatprep.subr.mxu0 0.0
      %2596 = vmatpush1.msra.mxu0 0.0
      %2597 = vmatprep.subr.mxu0 0.0
      %2598 = vmatpush1.msra.mxu0 0.0
      %2599 = vmatprep.subr.mxu0 0.0
      %2600 = vmatpush1.msra.mxu0 0.0
      %2601 = vmatprep.subr.mxu0 0.0
      %2602 = vmatpush1.msra.mxu0 0.0
      %2603 = vmatprep.subr.mxu0 0.0
      %2604 = vmatpush1.msra.mxu0 0.0
      %2605 = vmatprep.subr.mxu0 0.0
      %2606 = vmatpush1.msra.mxu0 0.0
      %2607 = vmatprep.subr.mxu0 0.0
      %2608 = vmatpush1.msra.mxu0 0.0
      %2609 = vmatprep.subr.mxu0 0.0
      %2610 = vmatpush1.msra.mxu0 0.0
      %2611 = vmatprep.subr.mxu0 0.0
      %2612 = vmatpush1.msra.mxu0 0.0
      %2613 = vmatprep.subr.mxu0 0.0
      %2614 = vmatpush1.msra.mxu0 0.0
      %2615 = vmatprep.subr.mxu0 0.0
      %2616 = vmatpush1.msra.mxu0 0.0
      %2617 = vmatprep.subr.mxu0 0.0
      %2618 = vmatpush1.msra.mxu0 0.0
      %2619 = vmatprep.subr.mxu0 0.0
      %2620 = vmatpush1.msra.mxu0 %v759
      %2621 = vmatprep.subr.mxu0 0.0
      %2622 = vmatpush1.msra.mxu0 %v757
      %2623 = vmatprep.subr.mxu0 0.0
      %2624 = vmatpush1.msra.mxu0 %v755
      %2625 = vmatprep.subr.mxu0 0.0
      %2626 = vmatpush1.msra.mxu0 %v753
      %2627 = vmatprep.subr.mxu0 0.0
      %2628 = vmatpush2.msra.mxu0 0.0
      %2629 = vmatprep.subr.mxu0 0.0
      %2630 = vmatpush2.msra.mxu0 0.0
      %2631 = vmatprep.subr.mxu0 0.0
      %2632 = vmatpush2.msra.mxu0 0.0
      %2633 = vmatprep.subr.mxu0 0.0
      %2634 = vmatpush2.msra.mxu0 0.0
      %2635 = vmatprep.subr.mxu0 0.0
      %2636 = vmatpush2.msra.mxu0 0.0
      %2637 = vmatprep.subr.mxu0 0.0
      %2638 = vmatpush2.msra.mxu0 0.0
      %2639 = vmatprep.subr.mxu0 0.0
      %2640 = vmatpush2.msra.mxu0 0.0
      %2641 = vmatprep.subr.mxu0 0.0
      %2642 = vmatpush2.msra.mxu0 0.0
      %2643 = vmatprep.subr.mxu0 0.0
      %2644 = vmatpush2.msra.mxu0 0.0
      %2645 = vmatprep.subr.mxu0 0.0
      %2646 = vmatpush2.msra.mxu0 0.0
      %2647 = vmatprep.subr.mxu0 0.0
      %2648 = vmatpush2.msra.mxu0 0.0
      %2649 = vmatprep.subr.mxu0 0.0
      %2650 = vmatpush2.msra.mxu0 0.0
      %2651 = vmatprep.subr.mxu0 0.0
      %2652 = vmatpush2.msra.mxu0 0.0
      %2653 = vmatprep.subr.mxu0 0.0
      %2654 = vmatpush2.msra.mxu0 0.0
      %2655 = vmatprep.subr.mxu0 0.0
      %2656 = vmatpush2.msra.mxu0 0.0
      %2657 = vmatprep.subr.mxu0 0.0
      %2658 = vmatpush2.msra.mxu0 0.0
      %2659 = vmatprep.mubr.f32.mxu0 0.0
      %2660 = vmatmul.mubr.f32.gmra.mxu0 %v2584
      %v2661 = vpop.f32.mrf.mxu0
      %v2662 = vadd.f32 0.0, %v2661
      %v2663 = vpop.f32.mrf.mxu0
      %2664 = vmatprep.mubr.f32.mxu0 0.0
      %2665 = vmatmul.mubr.f32.gmra.mxu0 %v2587
      %v2666 = vpop.f32.mrf.mxu0
      %v2667 = vadd.f32 0.0, %v2666
      %v2668 = vpop.f32.mrf.mxu0
      %2669 = vmatprep.mubr.f32.mxu0 0.0
      %2670 = vmatmul.mubr.f32.gmra.mxu0 %v2590
      %v2671 = vpop.f32.mrf.mxu0
      %v2672 = vadd.f32 0.0, %v2671
      %v2673 = vpop.f32.mrf.mxu0
      %2674 = vmatprep.mubr.f32.mxu0 0.0
      %2675 = vmatmul.mubr.f32.gmra.mxu0 %v2593
      %v2676 = vpop.f32.mrf.mxu0
      %v2677 = vadd.f32 0.0, %v2676
      %v2678 = vpop.f32.mrf.mxu0
      %2679 = vdwg.mxu0
      %v2681 = vsel %vm99, %v1994, 0
      %v2684 = vsel %vm99, %v1996, 0
      %v2687 = vsel %vm99, %v1998, 0
      %v2690 = vsel %vm99, %v2000, 0
      %2692 = vmatprep.subr.mxu0 0.0
      %2693 = vmatpush1.msra.mxu0 0.0
      %2694 = vmatprep.subr.mxu0 0.0
      %2695 = vmatpush1.msra.mxu0 0.0
      %2696 = vmatprep.subr.mxu0 0.0
      %2697 = vmatpush1.msra.mxu0 0.0
      %2698 = vmatprep.subr.mxu0 0.0
      %2699 = vmatpush1.msra.mxu0 0.0
      %2700 = vmatprep.subr.mxu0 0.0
      %2701 = vmatpush1.msra.mxu0 0.0
      %2702 = vmatprep.subr.mxu0 0.0
      %2703 = vmatpush1.msra.mxu0 0.0
      %2704 = vmatprep.subr.mxu0 0.0
      %2705 = vmatpush1.msra.mxu0 0.0
      %2706 = vmatprep.subr.mxu0 0.0
      %2707 = vmatpush1.msra.mxu0 0.0
      %2708 = vmatprep.subr.mxu0 0.0
      %2709 = vmatpush1.msra.mxu0 0.0
      %2710 = vmatprep.subr.mxu0 0.0
      %2711 = vmatpush1.msra.mxu0 0.0
      %2712 = vmatprep.subr.mxu0 0.0
      %2713 = vmatpush1.msra.mxu0 0.0
      %2714 = vmatprep.subr.mxu0 0.0
      %2715 = vmatpush1.msra.mxu0 0.0
      %2716 = vmatprep.subr.mxu0 0.0
      %2717 = vmatpush1.msra.mxu0 %v771
      %2718 = vmatprep.subr.mxu0 0.0
      %2719 = vmatpush1.msra.mxu0 %v769
      %2720 = vmatprep.subr.mxu0 0.0
      %2721 = vmatpush1.msra.mxu0 %v767
      %2722 = vmatprep.subr.mxu0 0.0
      %2723 = vmatpush1.msra.mxu0 %v765
      %2724 = vmatprep.subr.mxu0 0.0
      %2725 = vmatpush2.msra.mxu0 0.0
      %2726 = vmatprep.subr.mxu0 0.0
      %2727 = vmatpush2.msra.mxu0 0.0
      %2728 = vmatprep.subr.mxu0 0.0
      %2729 = vmatpush2.msra.mxu0 0.0
      %2730 = vmatprep.subr.mxu0 0.0
      %2731 = vmatpush2.msra.mxu0 0.0
      %2732 = vmatprep.subr.mxu0 0.0
      %2733 = vmatpush2.msra.mxu0 0.0
      %2734 = vmatprep.subr.mxu0 0.0
      %2735 = vmatpush2.msra.mxu0 0.0
      %2736 = vmatprep.subr.mxu0 0.0
      %2737 = vmatpush2.msra.mxu0 0.0
      %2738 = vmatprep.subr.mxu0 0.0
      %2739 = vmatpush2.msra.mxu0 0.0
      %2740 = vmatprep.subr.mxu0 0.0
      %2741 = vmatpush2.msra.mxu0 0.0
      %2742 = vmatprep.subr.mxu0 0.0
      %2743 = vmatpush2.msra.mxu0 0.0
      %2744 = vmatprep.subr.mxu0 0.0
      %2745 = vmatpush2.msra.mxu0 0.0
      %2746 = vmatprep.subr.mxu0 0.0
      %2747 = vmatpush2.msra.mxu0 0.0
      %2748 = vmatprep.subr.mxu0 0.0
      %2749 = vmatpush2.msra.mxu0 0.0
      %2750 = vmatprep.subr.mxu0 0.0
      %2751 = vmatpush2.msra.mxu0 0.0
      %2752 = vmatprep.subr.mxu0 0.0
      %2753 = vmatpush2.msra.mxu0 0.0
      %2754 = vmatprep.subr.mxu0 0.0
      %2755 = vmatpush2.msra.mxu0 0.0
      %2756 = vmatprep.mubr.f32.mxu0 0.0
      %2757 = vmatmul.mubr.f32.gmra.mxu0 %v2681
      %v2758 = vpop.f32.mrf.mxu0
      %v2759 = vadd.f32 0.0, %v2758
      %v2760 = vpop.f32.mrf.mxu0
      %2761 = vmatprep.mubr.f32.mxu0 0.0
      %2762 = vmatmul.mubr.f32.gmra.mxu0 %v2684
      %v2763 = vpop.f32.mrf.mxu0
      %v2764 = vadd.f32 0.0, %v2763
      %v2765 = vpop.f32.mrf.mxu0
      %2766 = vmatprep.mubr.f32.mxu0 0.0
      %2767 = vmatmul.mubr.f32.gmra.mxu0 %v2687
      %v2768 = vpop.f32.mrf.mxu0
      %v2769 = vadd.f32 0.0, %v2768
      %v2770 = vpop.f32.mrf.mxu0
      %2771 = vmatprep.mubr.f32.mxu0 0.0
      %2772 = vmatmul.mubr.f32.gmra.mxu0 %v2690
      %v2773 = vpop.f32.mrf.mxu0
      %v2774 = vadd.f32 0.0, %v2773
      %v2775 = vpop.f32.mrf.mxu0
      %2776 = vdwg.mxu0
      %2785 = vrot.lane.b32.xlu0 %v2274, 8
      %v2786 = vpop.permute.xlu0 %2785
      %2787 = vrot.lane.b32.xlu0 %v2279, 8
      %v2788 = vpop.permute.xlu0 %2787
      %2789 = vrot.lane.b32.xlu0 %v2284, 8
      %v2790 = vpop.permute.xlu0 %2789
      %2791 = vrot.lane.b32.xlu0 %v2289, 8
      %v2792 = vpop.permute.xlu0 %2791
      %2793 = vrot.lane.b32.xlu0 %v2371, 8
      %v2794 = vpop.permute.xlu0 %2793
      %2795 = vrot.lane.b32.xlu0 %v2376, 8
      %v2796 = vpop.permute.xlu0 %2795
      %2797 = vrot.lane.b32.xlu0 %v2381, 8
      %v2798 = vpop.permute.xlu0 %2797
      %2799 = vrot.lane.b32.xlu0 %v2386, 8
      %v2800 = vpop.permute.xlu0 %2799
      %2817 = vrot.lane.b32.xlu0 %v2468, 16
      %v2818 = vpop.permute.xlu0 %2817
      %2819 = vrot.lane.b32.xlu0 %v2473, 16
      %v2820 = vpop.permute.xlu0 %2819
      %2821 = vrot.lane.b32.xlu0 %v2478, 16
      %v2822 = vpop.permute.xlu0 %2821
      %2823 = vrot.lane.b32.xlu0 %v2483, 16
      %v2824 = vpop.permute.xlu0 %2823
      %2825 = vrot.lane.b32.xlu0 %v2565, 16
      %v2826 = vpop.permute.xlu0 %2825
      %2827 = vrot.lane.b32.xlu0 %v2570, 16
      %v2828 = vpop.permute.xlu0 %2827
      %2829 = vrot.lane.b32.xlu0 %v2575, 16
      %v2830 = vpop.permute.xlu0 %2829
      %2831 = vrot.lane.b32.xlu0 %v2580, 16
      %v2832 = vpop.permute.xlu0 %2831
      %2849 = vrot.lane.b32.xlu0 %v2662, 24
      %v2850 = vpop.permute.xlu0 %2849
      %2851 = vrot.lane.b32.xlu0 %v2667, 24
      %v2852 = vpop.permute.xlu0 %2851
      %2853 = vrot.lane.b32.xlu0 %v2672, 24
      %v2854 = vpop.permute.xlu0 %2853
      %2855 = vrot.lane.b32.xlu0 %v2677, 24
      %v2856 = vpop.permute.xlu0 %2855
      %2857 = vrot.lane.b32.xlu0 %v2759, 24
      %v2858 = vpop.permute.xlu0 %2857
      %2859 = vrot.lane.b32.xlu0 %v2764, 24
      %v2860 = vpop.permute.xlu0 %2859
      %2861 = vrot.lane.b32.xlu0 %v2769, 24
      %v2862 = vpop.permute.xlu0 %2861
      %2863 = vrot.lane.b32.xlu0 %v2774, 24
      %v2864 = vpop.permute.xlu0 %2863
      %v2873 = vsel %vm776, %v2080, %v2786
      %v2874 = vsel %vm776, %v2085, %v2788
      %v2875 = vsel %vm776, %v2090, %v2790
      %v2876 = vsel %vm776, %v2095, %v2792
      %v2877 = vsel %vm776, %v2177, %v2794
      %v2878 = vsel %vm776, %v2182, %v2796
      %v2879 = vsel %vm776, %v2187, %v2798
      %v2880 = vsel %vm776, %v2192, %v2800
      %vm2881 = vcmask 130048
      %v2882 = vsel %vm2881, %v2873, %v2818
      %v2883 = vsel %vm2881, %v2874, %v2820
      %v2884 = vsel %vm2881, %v2875, %v2822
      %v2885 = vsel %vm2881, %v2876, %v2824
      %v2886 = vsel %vm2881, %v2877, %v2826
      %v2887 = vsel %vm2881, %v2878, %v2828
      %v2888 = vsel %vm2881, %v2879, %v2830
      %v2889 = vsel %vm2881, %v2880, %v2832
      %vm2890 = vcmask 195584
      %v2891 = vsel %vm2890, %v2882, %v2850
      %v2892 = vsel %vm2890, %v2883, %v2852
      %v2893 = vsel %vm2890, %v2884, %v2854
      %v2894 = vsel %vm2890, %v2885, %v2856
      %v2895 = vsel %vm2890, %v2886, %v2858
      %v2896 = vsel %vm2890, %v2887, %v2860
      %v2897 = vsel %vm2890, %v2888, %v2862
      %v2898 = vsel %vm2890, %v2889, %v2864
      %v2899 = vld [vmem:[%s6] sm:$0xff]
      %v2900 = vld [vmem:[%s6 + $0x8] sm:$0xff]
      %v2901 = vld [vmem:[%s6 + $0x10] sm:$0xff]
      %v2902 = vld [vmem:[%s6 + $0x18] sm:$0xff]
      %v2903 = vld [vmem:[%s7] sm:$0x1]
      %v2905 = vlaneseq
      %v2906 = vshrl.u32 %v2905, 7
      %v2907 = vsub.s32 0, %v2906
      %v2908 = vrot.slane %v2903, %v2907
      %v2911 = vsel %vm99, %v2891, 0
      %v2914 = vsel %vm99, %v2892, 0
      %v2917 = vsel %vm99, %v2893, 0
      %v2920 = vsel %vm99, %v2894, 0
      %v2923 = vsel %vm99, %v2895, 0
      %v2926 = vsel %vm99, %v2896, 0
      %v2929 = vsel %vm99, %v2897, 0
      %v2932 = vsel %vm99, %v2898, 0
      %2934 = vmatprep.subr.mxu0 0.0
      %2935 = vmatpush1.msra.mxu0 0.0
      %2936 = vmatprep.subr.mxu0 0.0
      %2937 = vmatpush1.msra.mxu0 0.0
      %2938 = vmatprep.subr.mxu0 0.0
      %2939 = vmatpush1.msra.mxu0 0.0
      %2940 = vmatprep.subr.mxu0 0.0
      %2941 = vmatpush1.msra.mxu0 0.0
      %2942 = vmatprep.subr.mxu0 0.0
      %2943 = vmatpush1.msra.mxu0 0.0
      %2944 = vmatprep.subr.mxu0 0.0
      %2945 = vmatpush1.msra.mxu0 0.0
      %2946 = vmatprep.subr.mxu0 0.0
      %2947 = vmatpush1.msra.mxu0 0.0
      %2948 = vmatprep.subr.mxu0 0.0
      %2949 = vmatpush1.msra.mxu0 0.0
      %2950 = vmatprep.subr.mxu0 0.0
      %2951 = vmatpush1.msra.mxu0 0.0
      %2952 = vmatprep.subr.mxu0 0.0
      %2953 = vmatpush1.msra.mxu0 0.0
      %2954 = vmatprep.subr.mxu0 0.0
      %2955 = vmatpush1.msra.mxu0 0.0
      %2956 = vmatprep.subr.mxu0 0.0
      %2957 = vmatpush1.msra.mxu0 0.0
      %2958 = vmatprep.subr.mxu0 0.0
      %2959 = vmatpush1.msra.mxu0 %v2902
      %2960 = vmatprep.subr.mxu0 0.0
      %2961 = vmatpush1.msra.mxu0 %v2901
      %2962 = vmatprep.subr.mxu0 0.0
      %2963 = vmatpush1.msra.mxu0 %v2900
      %2964 = vmatprep.subr.mxu0 0.0
      %2965 = vmatpush1.msra.mxu0 %v2899
      %2966 = vmatprep.subr.mxu0 0.0
      %2967 = vmatpush2.msra.mxu0 0.0
      %2968 = vmatprep.subr.mxu0 0.0
      %2969 = vmatpush2.msra.mxu0 0.0
      %2970 = vmatprep.subr.mxu0 0.0
      %2971 = vmatpush2.msra.mxu0 0.0
      %2972 = vmatprep.subr.mxu0 0.0
      %2973 = vmatpush2.msra.mxu0 0.0
      %2974 = vmatprep.subr.mxu0 0.0
      %2975 = vmatpush2.msra.mxu0 0.0
      %2976 = vmatprep.subr.mxu0 0.0
      %2977 = vmatpush2.msra.mxu0 0.0
      %2978 = vmatprep.subr.mxu0 0.0
      %2979 = vmatpush2.msra.mxu0 0.0
      %2980 = vmatprep.subr.mxu0 0.0
      %2981 = vmatpush2.msra.mxu0 0.0
      %2982 = vmatprep.subr.mxu0 0.0
      %2983 = vmatpush2.msra.mxu0 0.0
      %2984 = vmatprep.subr.mxu0 0.0
      %2985 = vmatpush2.msra.mxu0 0.0
      %2986 = vmatprep.subr.mxu0 0.0
      %2987 = vmatpush2.msra.mxu0 0.0
      %2988 = vmatprep.subr.mxu0 0.0
      %2989 = vmatpush2.msra.mxu0 0.0
      %2990 = vmatprep.subr.mxu0 0.0
      %2991 = vmatpush2.msra.mxu0 0.0
      %2992 = vmatprep.subr.mxu0 0.0
      %2993 = vmatpush2.msra.mxu0 0.0
      %2994 = vmatprep.subr.mxu0 0.0
      %2995 = vmatpush2.msra.mxu0 0.0
      %2996 = vmatprep.subr.mxu0 0.0
      %2997 = vmatpush2.msra.mxu0 0.0
      %2998 = vmatprep.mubr.f32.mxu0 0.0
      %2999 = vmatmul.mubr.f32.gmra.mxu0 %v2911
      %v3000 = vpop.f32.mrf.mxu0
      %v3001 = vadd.f32 %v2908, %v3000
      %v3002 = vpop.f32.mrf.mxu0
      %3003 = vmatprep.mubr.f32.mxu0 0.0
      %3004 = vmatmul.mubr.f32.gmra.mxu0 %v2914
      %v3005 = vpop.f32.mrf.mxu0
      %v3006 = vadd.f32 %v2908, %v3005
      %v3007 = vpop.f32.mrf.mxu0
      %3008 = vmatprep.mubr.f32.mxu0 0.0
      %3009 = vmatmul.mubr.f32.gmra.mxu0 %v2917
      %v3010 = vpop.f32.mrf.mxu0
      %v3011 = vadd.f32 %v2908, %v3010
      %v3012 = vpop.f32.mrf.mxu0
      %3013 = vmatprep.mubr.f32.mxu0 0.0
      %3014 = vmatmul.mubr.f32.gmra.mxu0 %v2920
      %v3015 = vpop.f32.mrf.mxu0
      %v3016 = vadd.f32 %v2908, %v3015
      %v3017 = vpop.f32.mrf.mxu0
      %3018 = vmatprep.mubr.f32.mxu0 0.0
      %3019 = vmatmul.mubr.f32.gmra.mxu0 %v2923
      %v3020 = vpop.f32.mrf.mxu0
      %v3021 = vadd.f32 %v2908, %v3020
      %v3022 = vpop.f32.mrf.mxu0
      %3023 = vmatprep.mubr.f32.mxu0 0.0
      %3024 = vmatmul.mubr.f32.gmra.mxu0 %v2926
      %v3025 = vpop.f32.mrf.mxu0
      %v3026 = vadd.f32 %v2908, %v3025
      %v3027 = vpop.f32.mrf.mxu0
      %3028 = vmatprep.mubr.f32.mxu0 0.0
      %3029 = vmatmul.mubr.f32.gmra.mxu0 %v2929
      %v3030 = vpop.f32.mrf.mxu0
      %v3031 = vadd.f32 %v2908, %v3030
      %v3032 = vpop.f32.mrf.mxu0
      %3033 = vmatprep.mubr.f32.mxu0 0.0
      %3034 = vmatmul.mubr.f32.gmra.mxu0 %v2932
      %v3035 = vpop.f32.mrf.mxu0
      %v3036 = vadd.f32 %v2908, %v3035
      %v3037 = vpop.f32.mrf.mxu0
      %3038 = vdwg.mxu0
      %v3039 = vadd.f32 %v89, %v3001
      %v3040 = vadd.f32 %v90, %v3006
      %v3041 = vadd.f32 %v91, %v3011
      %v3042 = vadd.f32 %v92, %v3016
      %v3043 = vadd.f32 %v93, %v3021
      %v3044 = vadd.f32 %v94, %v3026
      %v3045 = vadd.f32 %v95, %v3031
      %v3046 = vadd.f32 %v96, %v3036
      %v3047 = vld [vmem:[%s8] sm:$0x1]
      %v3048 = vld [vmem:[%s9] sm:$0x1]
      %v3049 = vsel %vm99, %v3039, 0.0
      %3050 = vadd.xlane.f32.xlu0 %v3049
      %v3051 = vpop.xlane.xlu0 %3050
      %v3052 = vsel %vm99, %v3040, 0.0
      %3053 = vadd.xlane.f32.xlu0 %v3052
      %v3054 = vpop.xlane.xlu0 %3053
      %v3055 = vsel %vm99, %v3041, 0.0
      %3056 = vadd.xlane.f32.xlu0 %v3055
      %v3057 = vpop.xlane.xlu0 %3056
      %v3058 = vsel %vm99, %v3042, 0.0
      %3059 = vadd.xlane.f32.xlu0 %v3058
      %v3060 = vpop.xlane.xlu0 %3059
      %v3061 = vsel %vm99, %v3043, 0.0
      %3062 = vadd.xlane.f32.xlu0 %v3061
      %v3063 = vpop.xlane.xlu0 %3062
      %v3064 = vsel %vm99, %v3044, 0.0
      %3065 = vadd.xlane.f32.xlu0 %v3064
      %v3066 = vpop.xlane.xlu0 %3065
      %v3067 = vsel %vm99, %v3045, 0.0
      %3068 = vadd.xlane.f32.xlu0 %v3067
      %v3069 = vpop.xlane.xlu0 %3068
      %v3070 = vsel %vm99, %v3046, 0.0
      %3071 = vadd.xlane.f32.xlu0 %v3070
      %v3072 = vpop.xlane.xlu0 %3071
      %v3073 = vmul.f32 %v3051, %v124
      %v3074 = vmul.f32 %v3054, %v124
      %v3075 = vmul.f32 %v3057, %v124
      %v3076 = vmul.f32 %v3060, %v124
      %v3077 = vmul.f32 %v3063, %v124
      %v3078 = vmul.f32 %v3066, %v124
      %v3079 = vmul.f32 %v3069, %v124
      %v3080 = vmul.f32 %v3072, %v124
      %v3081 = vsub.f32 %v3039, %v3073
      %v3082 = vsub.f32 %v3040, %v3074
      %v3083 = vsub.f32 %v3041, %v3075
      %v3084 = vsub.f32 %v3042, %v3076
      %v3085 = vsub.f32 %v3043, %v3077
      %v3086 = vsub.f32 %v3044, %v3078
      %v3087 = vsub.f32 %v3045, %v3079
      %v3088 = vsub.f32 %v3046, %v3080
      %v3089 = vmul.f32 %v3081, %v3081
      %v3090 = vmul.f32 %v3082, %v3082
      %v3091 = vmul.f32 %v3083, %v3083
      %v3092 = vmul.f32 %v3084, %v3084
      %v3093 = vmul.f32 %v3085, %v3085
      %v3094 = vmul.f32 %v3086, %v3086
      %v3095 = vmul.f32 %v3087, %v3087
      %v3096 = vmul.f32 %v3088, %v3088
      %v3097 = vsel %vm99, %v3089, 0.0
      %3098 = vadd.xlane.f32.xlu0 %v3097
      %v3099 = vpop.xlane.xlu0 %3098
      %v3100 = vsel %vm99, %v3090, 0.0
      %3101 = vadd.xlane.f32.xlu0 %v3100
      %v3102 = vpop.xlane.xlu0 %3101
      %v3103 = vsel %vm99, %v3091, 0.0
      %3104 = vadd.xlane.f32.xlu0 %v3103
      %v3105 = vpop.xlane.xlu0 %3104
      %v3106 = vsel %vm99, %v3092, 0.0
      %3107 = vadd.xlane.f32.xlu0 %v3106
      %v3108 = vpop.xlane.xlu0 %3107
      %v3109 = vsel %vm99, %v3093, 0.0
      %3110 = vadd.xlane.f32.xlu0 %v3109
      %v3111 = vpop.xlane.xlu0 %3110
      %v3112 = vsel %vm99, %v3094, 0.0
      %3113 = vadd.xlane.f32.xlu0 %v3112
      %v3114 = vpop.xlane.xlu0 %3113
      %v3115 = vsel %vm99, %v3095, 0.0
      %3116 = vadd.xlane.f32.xlu0 %v3115
      %v3117 = vpop.xlane.xlu0 %3116
      %v3118 = vsel %vm99, %v3096, 0.0
      %3119 = vadd.xlane.f32.xlu0 %v3118
      %v3120 = vpop.xlane.xlu0 %3119
      %v3121 = vmul.f32 %v3099, %v124
      %v3122 = vmul.f32 %v3102, %v124
      %v3123 = vmul.f32 %v3105, %v124
      %v3124 = vmul.f32 %v3108, %v124
      %v3125 = vmul.f32 %v3111, %v124
      %v3126 = vmul.f32 %v3114, %v124
      %v3127 = vmul.f32 %v3117, %v124
      %v3128 = vmul.f32 %v3120, %v124
      %v3129 = vadd.f32 %v3121, 1e-05
      %v3130 = vadd.f32 %v3122, 1e-05
      %v3131 = vadd.f32 %v3123, 1e-05
      %v3132 = vadd.f32 %v3124, 1e-05
      %v3133 = vadd.f32 %v3125, 1e-05
      %v3134 = vadd.f32 %v3126, 1e-05
      %v3135 = vadd.f32 %v3127, 1e-05
      %v3136 = vadd.f32 %v3128, 1e-05
      %v3137 = vrsqrt.pop %v3129
      %v3138 = vrsqrt.pop %v3130
      %v3139 = vrsqrt.pop %v3131
      %v3140 = vrsqrt.pop %v3132
      %v3141 = vrsqrt.pop %v3133
      %v3142 = vrsqrt.pop %v3134
      %v3143 = vrsqrt.pop %v3135
      %v3144 = vrsqrt.pop %v3136
      %v3145 = vmul.f32 %v3081, %v3137
      %v3146 = vmul.f32 %v3082, %v3138
      %v3147 = vmul.f32 %v3083, %v3139
      %v3148 = vmul.f32 %v3084, %v3140
      %v3149 = vmul.f32 %v3085, %v3141
      %v3150 = vmul.f32 %v3086, %v3142
      %v3151 = vmul.f32 %v3087, %v3143
      %v3152 = vmul.f32 %v3088, %v3144
      %v3154 = vlaneseq
      %v3155 = vshrl.u32 %v3154, 7
      %v3156 = vsub.s32 0, %v3155
      %v3157 = vrot.slane %v3047, %v3156
      %v3159 = vmul.f32 %v3145, %v3157
      %v3160 = vmul.f32 %v3146, %v3157
      %v3161 = vmul.f32 %v3147, %v3157
      %v3162 = vmul.f32 %v3148, %v3157
      %v3163 = vmul.f32 %v3149, %v3157
      %v3164 = vmul.f32 %v3150, %v3157
      %v3165 = vmul.f32 %v3151, %v3157
      %v3166 = vmul.f32 %v3152, %v3157
      %v3168 = vlaneseq
      %v3169 = vshrl.u32 %v3168, 7
      %v3170 = vsub.s32 0, %v3169
      %v3171 = vrot.slane %v3048, %v3170
      %v3173 = vadd.f32 %v3159, %v3171
      %v3174 = vadd.f32 %v3160, %v3171
      %v3175 = vadd.f32 %v3161, %v3171
      %v3176 = vadd.f32 %v3162, %v3171
      %v3177 = vadd.f32 %v3163, %v3171
      %v3178 = vadd.f32 %v3164, %v3171
      %v3179 = vadd.f32 %v3165, %v3171
      %v3180 = vadd.f32 %v3166, %v3171
      %v3181 = vld [vmem:[%s10] sm:$0xff]
      %v3182 = vld [vmem:[%s10 + $0x8] sm:$0xff]
      %v3183 = vld [vmem:[%s10 + $0x10] sm:$0xff]
      %v3184 = vld [vmem:[%s10 + $0x18] sm:$0xff]
      %v3185 = vld [vmem:[%s11] sm:$0x1]
      %v3187 = vlaneseq
      %v3188 = vshrl.u32 %v3187, 7
      %v3189 = vsub.s32 0, %v3188
      %v3190 = vrot.slane %v3185, %v3189
      %v3193 = vsel %vm99, %v3173, 0
      %v3196 = vsel %vm99, %v3174, 0
      %v3199 = vsel %vm99, %v3175, 0
      %v3202 = vsel %vm99, %v3176, 0
      %v3205 = vsel %vm99, %v3177, 0
      %v3208 = vsel %vm99, %v3178, 0
      %v3211 = vsel %vm99, %v3179, 0
      %v3214 = vsel %vm99, %v3180, 0
      %3216 = vmatprep.subr.mxu0 0.0
      %3217 = vmatpush1.msra.mxu0 0.0
      %3218 = vmatprep.subr.mxu0 0.0
      %3219 = vmatpush1.msra.mxu0 0.0
      %3220 = vmatprep.subr.mxu0 0.0
      %3221 = vmatpush1.msra.mxu0 0.0
      %3222 = vmatprep.subr.mxu0 0.0
      %3223 = vmatpush1.msra.mxu0 0.0
      %3224 = vmatprep.subr.mxu0 0.0
      %3225 = vmatpush1.msra.mxu0 0.0
      %3226 = vmatprep.subr.mxu0 0.0
      %3227 = vmatpush1.msra.mxu0 0.0
      %3228 = vmatprep.subr.mxu0 0.0
      %3229 = vmatpush1.msra.mxu0 0.0
      %3230 = vmatprep.subr.mxu0 0.0
      %3231 = vmatpush1.msra.mxu0 0.0
      %3232 = vmatprep.subr.mxu0 0.0
      %3233 = vmatpush1.msra.mxu0 0.0
      %3234 = vmatprep.subr.mxu0 0.0
      %3235 = vmatpush1.msra.mxu0 0.0
      %3236 = vmatprep.subr.mxu0 0.0
      %3237 = vmatpush1.msra.mxu0 0.0
      %3238 = vmatprep.subr.mxu0 0.0
      %3239 = vmatpush1.msra.mxu0 0.0
      %3240 = vmatprep.subr.mxu0 0.0
      %3241 = vmatpush1.msra.mxu0 %v3184
      %3242 = vmatprep.subr.mxu0 0.0
      %3243 = vmatpush1.msra.mxu0 %v3183
      %3244 = vmatprep.subr.mxu0 0.0
      %3245 = vmatpush1.msra.mxu0 %v3182
      %3246 = vmatprep.subr.mxu0 0.0
      %3247 = vmatpush1.msra.mxu0 %v3181
      %3248 = vmatprep.subr.mxu0 0.0
      %3249 = vmatpush2.msra.mxu0 0.0
      %3250 = vmatprep.subr.mxu0 0.0
      %3251 = vmatpush2.msra.mxu0 0.0
      %3252 = vmatprep.subr.mxu0 0.0
      %3253 = vmatpush2.msra.mxu0 0.0
      %3254 = vmatprep.subr.mxu0 0.0
      %3255 = vmatpush2.msra.mxu0 0.0
      %3256 = vmatprep.subr.mxu0 0.0
      %3257 = vmatpush2.msra.mxu0 0.0
      %3258 = vmatprep.subr.mxu0 0.0
      %3259 = vmatpush2.msra.mxu0 0.0
      %3260 = vmatprep.subr.mxu0 0.0
      %3261 = vmatpush2.msra.mxu0 0.0
      %3262 = vmatprep.subr.mxu0 0.0
      %3263 = vmatpush2.msra.mxu0 0.0
      %3264 = vmatprep.subr.mxu0 0.0
      %3265 = vmatpush2.msra.mxu0 0.0
      %3266 = vmatprep.subr.mxu0 0.0
      %3267 = vmatpush2.msra.mxu0 0.0
      %3268 = vmatprep.subr.mxu0 0.0
      %3269 = vmatpush2.msra.mxu0 0.0
      %3270 = vmatprep.subr.mxu0 0.0
      %3271 = vmatpush2.msra.mxu0 0.0
      %3272 = vmatprep.subr.mxu0 0.0
      %3273 = vmatpush2.msra.mxu0 0.0
      %3274 = vmatprep.subr.mxu0 0.0
      %3275 = vmatpush2.msra.mxu0 0.0
      %3276 = vmatprep.subr.mxu0 0.0
      %3277 = vmatpush2.msra.mxu0 0.0
      %3278 = vmatprep.subr.mxu0 0.0
      %3279 = vmatpush2.msra.mxu0 0.0
      %3280 = vmatprep.mubr.f32.mxu0 0.0
      %3281 = vmatmul.mubr.f32.gmra.mxu0 %v3193
      %v3282 = vpop.f32.mrf.mxu0
      %v3283 = vadd.f32 %v3190, %v3282
      %v3284 = vpop.f32.mrf.mxu0
      %3285 = vmatprep.mubr.f32.mxu0 0.0
      %3286 = vmatmul.mubr.f32.gmra.mxu0 %v3196
      %v3287 = vpop.f32.mrf.mxu0
      %v3288 = vadd.f32 %v3190, %v3287
      %v3289 = vpop.f32.mrf.mxu0
      %3290 = vmatprep.mubr.f32.mxu0 0.0
      %3291 = vmatmul.mubr.f32.gmra.mxu0 %v3199
      %v3292 = vpop.f32.mrf.mxu0
      %v3293 = vadd.f32 %v3190, %v3292
      %v3294 = vpop.f32.mrf.mxu0
      %3295 = vmatprep.mubr.f32.mxu0 0.0
      %3296 = vmatmul.mubr.f32.gmra.mxu0 %v3202
      %v3297 = vpop.f32.mrf.mxu0
      %v3298 = vadd.f32 %v3190, %v3297
      %v3299 = vpop.f32.mrf.mxu0
      %3300 = vmatprep.mubr.f32.mxu0 0.0
      %3301 = vmatmul.mubr.f32.gmra.mxu0 %v3205
      %v3302 = vpop.f32.mrf.mxu0
      %v3303 = vadd.f32 %v3190, %v3302
      %v3304 = vpop.f32.mrf.mxu0
      %3305 = vmatprep.mubr.f32.mxu0 0.0
      %3306 = vmatmul.mubr.f32.gmra.mxu0 %v3208
      %v3307 = vpop.f32.mrf.mxu0
      %v3308 = vadd.f32 %v3190, %v3307
      %v3309 = vpop.f32.mrf.mxu0
      %3310 = vmatprep.mubr.f32.mxu0 0.0
      %3311 = vmatmul.mubr.f32.gmra.mxu0 %v3211
      %v3312 = vpop.f32.mrf.mxu0
      %v3313 = vadd.f32 %v3190, %v3312
      %v3314 = vpop.f32.mrf.mxu0
      %3315 = vmatprep.mubr.f32.mxu0 0.0
      %3316 = vmatmul.mubr.f32.gmra.mxu0 %v3214
      %v3317 = vpop.f32.mrf.mxu0
      %v3318 = vadd.f32 %v3190, %v3317
      %v3319 = vpop.f32.mrf.mxu0
      %3320 = vdwg.mxu0
      %v3321 = vmax.f32 %v3283, 0.0
      %v3322 = vmax.f32 %v3288, 0.0
      %v3323 = vmax.f32 %v3293, 0.0
      %v3324 = vmax.f32 %v3298, 0.0
      %v3325 = vmax.f32 %v3303, 0.0
      %v3326 = vmax.f32 %v3308, 0.0
      %v3327 = vmax.f32 %v3313, 0.0
      %v3328 = vmax.f32 %v3318, 0.0
      %v3329 = vld [vmem:[%s12] sm:$0xff]
      %v3330 = vld [vmem:[%s12 + $0x8] sm:$0xff]
      %v3331 = vld [vmem:[%s12 + $0x10] sm:$0xff]
      %v3332 = vld [vmem:[%s12 + $0x18] sm:$0xff]
      %v3333 = vld [vmem:[%s12 + $0x20] sm:$0xff]
      %v3334 = vld [vmem:[%s12 + $0x28] sm:$0xff]
      %v3335 = vld [vmem:[%s12 + $0x30] sm:$0xff]
      %v3336 = vld [vmem:[%s12 + $0x38] sm:$0xff]
      %v3337 = vld [vmem:[%s12 + $0x40] sm:$0xff]
      %v3338 = vld [vmem:[%s12 + $0x48] sm:$0xff]
      %v3339 = vld [vmem:[%s12 + $0x50] sm:$0xff]
      %v3340 = vld [vmem:[%s12 + $0x58] sm:$0xff]
      %v3341 = vld [vmem:[%s12 + $0x60] sm:$0xff]
      %v3342 = vld [vmem:[%s12 + $0x68] sm:$0xff]
      %v3343 = vld [vmem:[%s12 + $0x70] sm:$0xff]
      %v3344 = vld [vmem:[%s12 + $0x78] sm:$0xff]
      %3345 = vmatprep.subr.mxu0 0.0
      %3346 = vmatpush1.msra.mxu0 %v3344
      %3347 = vmatprep.subr.mxu0 0.0
      %3348 = vmatpush1.msra.mxu0 %v3343
      %3349 = vmatprep.subr.mxu0 0.0
      %3350 = vmatpush1.msra.mxu0 %v3342
      %3351 = vmatprep.subr.mxu0 0.0
      %3352 = vmatpush1.msra.mxu0 %v3341
      %3353 = vmatprep.subr.mxu0 0.0
      %3354 = vmatpush1.msra.mxu0 %v3340
      %3355 = vmatprep.subr.mxu0 0.0
      %3356 = vmatpush1.msra.mxu0 %v3339
      %3357 = vmatprep.subr.mxu0 0.0
      %3358 = vmatpush1.msra.mxu0 %v3338
      %3359 = vmatprep.subr.mxu0 0.0
      %3360 = vmatpush1.msra.mxu0 %v3337
      %3361 = vmatprep.subr.mxu0 0.0
      %3362 = vmatpush1.msra.mxu0 %v3336
      %3363 = vmatprep.subr.mxu0 0.0
      %3364 = vmatpush1.msra.mxu0 %v3335
      %3365 = vmatprep.subr.mxu0 0.0
      %3366 = vmatpush1.msra.mxu0 %v3334
      %3367 = vmatprep.subr.mxu0 0.0
      %3368 = vmatpush1.msra.mxu0 %v3333
      %3369 = vmatprep.subr.mxu0 0.0
      %3370 = vmatpush1.msra.mxu0 %v3332
      %3371 = vmatprep.subr.mxu0 0.0
      %3372 = vmatpush1.msra.mxu0 %v3331
      %3373 = vmatprep.subr.mxu0 0.0
      %3374 = vmatpush1.msra.mxu0 %v3330
      %3375 = vmatprep.subr.mxu0 0.0
      %3376 = vmatpush1.msra.mxu0 %v3329
      %3377 = vmatprep.subr.mxu0 0.0
      %3378 = vmatpush2.msra.mxu0 0.0
      %3379 = vmatprep.subr.mxu0 0.0
      %3380 = vmatpush2.msra.mxu0 0.0
      %3381 = vmatprep.subr.mxu0 0.0
      %3382 = vmatpush2.msra.mxu0 0.0
      %3383 = vmatprep.subr.mxu0 0.0
      %3384 = vmatpush2.msra.mxu0 0.0
      %3385 = vmatprep.subr.mxu0 0.0
      %3386 = vmatpush2.msra.mxu0 0.0
      %3387 = vmatprep.subr.mxu0 0.0
      %3388 = vmatpush2.msra.mxu0 0.0
      %3389 = vmatprep.subr.mxu0 0.0
      %3390 = vmatpush2.msra.mxu0 0.0
      %3391 = vmatprep.subr.mxu0 0.0
      %3392 = vmatpush2.msra.mxu0 0.0
      %3393 = vmatprep.subr.mxu0 0.0
      %3394 = vmatpush2.msra.mxu0 0.0
      %3395 = vmatprep.subr.mxu0 0.0
      %3396 = vmatpush2.msra.mxu0 0.0
      %3397 = vmatprep.subr.mxu0 0.0
      %3398 = vmatpush2.msra.mxu0 0.0
      %3399 = vmatprep.subr.mxu0 0.0
      %3400 = vmatpush2.msra.mxu0 0.0
      %3401 = vmatprep.subr.mxu0 0.0
      %3402 = vmatpush2.msra.mxu0 0.0
      %3403 = vmatprep.subr.mxu0 0.0
      %3404 = vmatpush2.msra.mxu0 0.0
      %3405 = vmatprep.subr.mxu0 0.0
      %3406 = vmatpush2.msra.mxu0 0.0
      %3407 = vmatprep.subr.mxu0 0.0
      %3408 = vmatpush2.msra.mxu0 0.0
      %3409 = vmatprep.mubr.f32.mxu0 0.0
      %3410 = vmatmul.mubr.f32.gmra.mxu0 %v3321
      %v3411 = vpop.f32.mrf.mxu0
      %v3412 = vadd.f32 0.0, %v3411
      %v3413 = vpop.f32.mrf.mxu0
      %3414 = vmatprep.mubr.f32.mxu0 0.0
      %3415 = vmatmul.mubr.f32.gmra.mxu0 %v3322
      %v3416 = vpop.f32.mrf.mxu0
      %v3417 = vadd.f32 0.0, %v3416
      %v3418 = vpop.f32.mrf.mxu0
      %3419 = vmatprep.mubr.f32.mxu0 0.0
      %3420 = vmatmul.mubr.f32.gmra.mxu0 %v3323
      %v3421 = vpop.f32.mrf.mxu0
      %v3422 = vadd.f32 0.0, %v3421
      %v3423 = vpop.f32.mrf.mxu0
      %3424 = vmatprep.mubr.f32.mxu0 0.0
      %3425 = vmatmul.mubr.f32.gmra.mxu0 %v3324
      %v3426 = vpop.f32.mrf.mxu0
      %v3427 = vadd.f32 0.0, %v3426
      %v3428 = vpop.f32.mrf.mxu0
      %3429 = vmatprep.mubr.f32.mxu0 0.0
      %3430 = vmatmul.mubr.f32.gmra.mxu0 %v3325
      %v3431 = vpop.f32.mrf.mxu0
      %v3432 = vadd.f32 0.0, %v3431
      %v3433 = vpop.f32.mrf.mxu0
      %3434 = vmatprep.mubr.f32.mxu0 0.0
      %3435 = vmatmul.mubr.f32.gmra.mxu0 %v3326
      %v3436 = vpop.f32.mrf.mxu0
      %v3437 = vadd.f32 0.0, %v3436
      %v3438 = vpop.f32.mrf.mxu0
      %3439 = vmatprep.mubr.f32.mxu0 0.0
      %3440 = vmatmul.mubr.f32.gmra.mxu0 %v3327
      %v3441 = vpop.f32.mrf.mxu0
      %v3442 = vadd.f32 0.0, %v3441
      %v3443 = vpop.f32.mrf.mxu0
      %3444 = vmatprep.mubr.f32.mxu0 0.0
      %3445 = vmatmul.mubr.f32.gmra.mxu0 %v3328
      %v3446 = vpop.f32.mrf.mxu0
      %v3447 = vadd.f32 0.0, %v3446
      %v3448 = vpop.f32.mrf.mxu0
      %3449 = vdwg.mxu0
      %v3450 = vadd.f32 %v3039, %v3412
      %v3451 = vadd.f32 %v3040, %v3417
      %v3452 = vadd.f32 %v3041, %v3422
      %v3453 = vadd.f32 %v3042, %v3427
      %v3454 = vadd.f32 %v3043, %v3432
      %v3455 = vadd.f32 %v3044, %v3437
      %v3456 = vadd.f32 %v3045, %v3442
      %v3457 = vadd.f32 %v3046, %v3447
      %v3458 = vld [vmem:[%s13] sm:$0x1]
      %v3460 = vlaneseq
      %v3461 = vshrl.u32 %v3460, 7
      %v3462 = vsub.s32 0, %v3461
      %v3463 = vrot.slane %v3458, %v3462
      %v3465 = vadd.f32 %v3450, %v3463
      %v3466 = vadd.f32 %v3451, %v3463
      %v3467 = vadd.f32 %v3452, %v3463
      %v3468 = vadd.f32 %v3453, %v3463
      %v3469 = vadd.f32 %v3454, %v3463
      %v3470 = vadd.f32 %v3455, %v3463
      %v3471 = vadd.f32 %v3456, %v3463
      %v3472 = vadd.f32 %v3457, %v3463
    $region78: #{tpu_custom_call.1} parent=1 // loop_footer
      %s88 = sadd.s32 1, %s84
    $region79: #{tpu_custom_call.1} parent=1 // loop_footer_branch
      %83 = sbr.rel target = $region75
    $region80: #{tpu_custom_call.1} parent=1 // loop_exit
      _
    %v3473 = vld [vmem:[%s14] sm:$0x1]
    %v3474 = vld [vmem:[%s15] sm:$0x1]
    %vm3475 = vcmask 261120
    %v3476 = vsel %vm3475, %v89, 0.0
    %3477 = vadd.xlane.f32.xlu0 %v3476
    %v3478 = vpop.xlane.xlu0 %3477
    %v3479 = vsel %vm3475, %v90, 0.0
    %3480 = vadd.xlane.f32.xlu0 %v3479
    %v3481 = vpop.xlane.xlu0 %3480
    %v3482 = vsel %vm3475, %v91, 0.0
    %3483 = vadd.xlane.f32.xlu0 %v3482
    %v3484 = vpop.xlane.xlu0 %3483
    %v3485 = vsel %vm3475, %v92, 0.0
    %3486 = vadd.xlane.f32.xlu0 %v3485
    %v3487 = vpop.xlane.xlu0 %3486
    %v3488 = vsel %vm3475, %v93, 0.0
    %3489 = vadd.xlane.f32.xlu0 %v3488
    %v3490 = vpop.xlane.xlu0 %3489
    %v3491 = vsel %vm3475, %v94, 0.0
    %3492 = vadd.xlane.f32.xlu0 %v3491
    %v3493 = vpop.xlane.xlu0 %3492
    %v3494 = vsel %vm3475, %v95, 0.0
    %3495 = vadd.xlane.f32.xlu0 %v3494
    %v3496 = vpop.xlane.xlu0 %3495
    %v3497 = vsel %vm3475, %v96, 0.0
    %3498 = vadd.xlane.f32.xlu0 %v3497
    %v3499 = vpop.xlane.xlu0 %3498
    %v3500 = vrcp.pop 32.0
    %v3501 = vmul.f32 %v3478, %v3500
    %v3502 = vmul.f32 %v3481, %v3500
    %v3503 = vmul.f32 %v3484, %v3500
    %v3504 = vmul.f32 %v3487, %v3500
    %v3505 = vmul.f32 %v3490, %v3500
    %v3506 = vmul.f32 %v3493, %v3500
    %v3507 = vmul.f32 %v3496, %v3500
    %v3508 = vmul.f32 %v3499, %v3500
    %v3509 = vsub.f32 %v89, %v3501
    %v3510 = vsub.f32 %v90, %v3502
    %v3511 = vsub.f32 %v91, %v3503
    %v3512 = vsub.f32 %v92, %v3504
    %v3513 = vsub.f32 %v93, %v3505
    %v3514 = vsub.f32 %v94, %v3506
    %v3515 = vsub.f32 %v95, %v3507
    %v3516 = vsub.f32 %v96, %v3508
    %v3517 = vmul.f32 %v3509, %v3509
    %v3518 = vmul.f32 %v3510, %v3510
    %v3519 = vmul.f32 %v3511, %v3511
    %v3520 = vmul.f32 %v3512, %v3512
    %v3521 = vmul.f32 %v3513, %v3513
    %v3522 = vmul.f32 %v3514, %v3514
    %v3523 = vmul.f32 %v3515, %v3515
    %v3524 = vmul.f32 %v3516, %v3516
    %v3525 = vsel %vm3475, %v3517, 0.0
    %3526 = vadd.xlane.f32.xlu0 %v3525
    %v3527 = vpop.xlane.xlu0 %3526
    %v3528 = vsel %vm3475, %v3518, 0.0
    %3529 = vadd.xlane.f32.xlu0 %v3528
    %v3530 = vpop.xlane.xlu0 %3529
    %v3531 = vsel %vm3475, %v3519, 0.0
    %3532 = vadd.xlane.f32.xlu0 %v3531
    %v3533 = vpop.xlane.xlu0 %3532
    %v3534 = vsel %vm3475, %v3520, 0.0
    %3535 = vadd.xlane.f32.xlu0 %v3534
    %v3536 = vpop.xlane.xlu0 %3535
    %v3537 = vsel %vm3475, %v3521, 0.0
    %3538 = vadd.xlane.f32.xlu0 %v3537
    %v3539 = vpop.xlane.xlu0 %3538
    %v3540 = vsel %vm3475, %v3522, 0.0
    %3541 = vadd.xlane.f32.xlu0 %v3540
    %v3542 = vpop.xlane.xlu0 %3541
    %v3543 = vsel %vm3475, %v3523, 0.0
    %3544 = vadd.xlane.f32.xlu0 %v3543
    %v3545 = vpop.xlane.xlu0 %3544
    %v3546 = vsel %vm3475, %v3524, 0.0
    %3547 = vadd.xlane.f32.xlu0 %v3546
    %v3548 = vpop.xlane.xlu0 %3547
    %v3549 = vmul.f32 %v3527, %v3500
    %v3550 = vmul.f32 %v3530, %v3500
    %v3551 = vmul.f32 %v3533, %v3500
    %v3552 = vmul.f32 %v3536, %v3500
    %v3553 = vmul.f32 %v3539, %v3500
    %v3554 = vmul.f32 %v3542, %v3500
    %v3555 = vmul.f32 %v3545, %v3500
    %v3556 = vmul.f32 %v3548, %v3500
    %v3557 = vadd.f32 %v3549, 1e-05
    %v3558 = vadd.f32 %v3550, 1e-05
    %v3559 = vadd.f32 %v3551, 1e-05
    %v3560 = vadd.f32 %v3552, 1e-05
    %v3561 = vadd.f32 %v3553, 1e-05
    %v3562 = vadd.f32 %v3554, 1e-05
    %v3563 = vadd.f32 %v3555, 1e-05
    %v3564 = vadd.f32 %v3556, 1e-05
    %v3565 = vrsqrt.pop %v3557
    %v3566 = vrsqrt.pop %v3558
    %v3567 = vrsqrt.pop %v3559
    %v3568 = vrsqrt.pop %v3560
    %v3569 = vrsqrt.pop %v3561
    %v3570 = vrsqrt.pop %v3562
    %v3571 = vrsqrt.pop %v3563
    %v3572 = vrsqrt.pop %v3564
    %v3573 = vmul.f32 %v3509, %v3565
    %v3574 = vmul.f32 %v3510, %v3566
    %v3575 = vmul.f32 %v3511, %v3567
    %v3576 = vmul.f32 %v3512, %v3568
    %v3577 = vmul.f32 %v3513, %v3569
    %v3578 = vmul.f32 %v3514, %v3570
    %v3579 = vmul.f32 %v3515, %v3571
    %v3580 = vmul.f32 %v3516, %v3572
    %v3582 = vlaneseq
    %v3583 = vshrl.u32 %v3582, 7
    %v3584 = vsub.s32 0, %v3583
    %v3585 = vrot.slane %v3473, %v3584
    %v3587 = vmul.f32 %v3573, %v3585
    %v3588 = vmul.f32 %v3574, %v3585
    %v3589 = vmul.f32 %v3575, %v3585
    %v3590 = vmul.f32 %v3576, %v3585
    %v3591 = vmul.f32 %v3577, %v3585
    %v3592 = vmul.f32 %v3578, %v3585
    %v3593 = vmul.f32 %v3579, %v3585
    %v3594 = vmul.f32 %v3580, %v3585
    %v3596 = vlaneseq
    %v3597 = vshrl.u32 %v3596, 7
    %v3598 = vsub.s32 0, %v3597
    %v3599 = vrot.slane %v3474, %v3598
    %v3601 = vadd.f32 %v3587, %v3599
    %v3602 = vadd.f32 %v3588, %v3599
    %v3603 = vadd.f32 %v3589, %v3599
    %v3604 = vadd.f32 %v3590, %v3599
    %v3605 = vadd.f32 %v3591, %v3599
    %v3606 = vadd.f32 %v3592, %v3599
    %v3607 = vadd.f32 %v3593, %v3599
    %v3608 = vadd.f32 %v3594, %v3599
    %v3609 = vld [vmem:[%s16] sm:$0xff]
    %v3610 = vld [vmem:[%s16 + $0x8] sm:$0xff]
    %v3611 = vld [vmem:[%s16 + $0x10] sm:$0xff]
    %v3612 = vld [vmem:[%s16 + $0x18] sm:$0xff]
    %v3613 = vld [vmem:[%s17] sm:$0x1]
    %v3615 = vlaneseq
    %v3616 = vshrl.u32 %v3615, 7
    %v3617 = vsub.s32 0, %v3616
    %v3618 = vrot.slane %v3613, %v3617
    %v3621 = vsel %vm3475, %v3601, 0
    %v3624 = vsel %vm3475, %v3602, 0
    %v3627 = vsel %vm3475, %v3603, 0
    %v3630 = vsel %vm3475, %v3604, 0
    %v3633 = vsel %vm3475, %v3605, 0
    %v3636 = vsel %vm3475, %v3606, 0
    %v3639 = vsel %vm3475, %v3607, 0
    %v3642 = vsel %vm3475, %v3608, 0
    %3644 = vmatprep.subr.mxu0 0.0
    %3645 = vmatpush1.msra.mxu0 0.0
    %3646 = vmatprep.subr.mxu0 0.0
    %3647 = vmatpush1.msra.mxu0 0.0
    %3648 = vmatprep.subr.mxu0 0.0
    %3649 = vmatpush1.msra.mxu0 0.0
    %3650 = vmatprep.subr.mxu0 0.0
    %3651 = vmatpush1.msra.mxu0 0.0
    %3652 = vmatprep.subr.mxu0 0.0
    %3653 = vmatpush1.msra.mxu0 0.0
    %3654 = vmatprep.subr.mxu0 0.0
    %3655 = vmatpush1.msra.mxu0 0.0
    %3656 = vmatprep.subr.mxu0 0.0
    %3657 = vmatpush1.msra.mxu0 0.0
    %3658 = vmatprep.subr.mxu0 0.0
    %3659 = vmatpush1.msra.mxu0 0.0
    %3660 = vmatprep.subr.mxu0 0.0
    %3661 = vmatpush1.msra.mxu0 0.0
    %3662 = vmatprep.subr.mxu0 0.0
    %3663 = vmatpush1.msra.mxu0 0.0
    %3664 = vmatprep.subr.mxu0 0.0
    %3665 = vmatpush1.msra.mxu0 0.0
    %3666 = vmatprep.subr.mxu0 0.0
    %3667 = vmatpush1.msra.mxu0 0.0
    %3668 = vmatprep.subr.mxu0 0.0
    %3669 = vmatpush1.msra.mxu0 %v3612
    %3670 = vmatprep.subr.mxu0 0.0
    %3671 = vmatpush1.msra.mxu0 %v3611
    %3672 = vmatprep.subr.mxu0 0.0
    %3673 = vmatpush1.msra.mxu0 %v3610
    %3674 = vmatprep.subr.mxu0 0.0
    %3675 = vmatpush1.msra.mxu0 %v3609
    %3676 = vmatprep.subr.mxu0 0.0
    %3677 = vmatpush2.msra.mxu0 0.0
    %3678 = vmatprep.subr.mxu0 0.0
    %3679 = vmatpush2.msra.mxu0 0.0
    %3680 = vmatprep.subr.mxu0 0.0
    %3681 = vmatpush2.msra.mxu0 0.0
    %3682 = vmatprep.subr.mxu0 0.0
    %3683 = vmatpush2.msra.mxu0 0.0
    %3684 = vmatprep.subr.mxu0 0.0
    %3685 = vmatpush2.msra.mxu0 0.0
    %3686 = vmatprep.subr.mxu0 0.0
    %3687 = vmatpush2.msra.mxu0 0.0
    %3688 = vmatprep.subr.mxu0 0.0
    %3689 = vmatpush2.msra.mxu0 0.0
    %3690 = vmatprep.subr.mxu0 0.0
    %3691 = vmatpush2.msra.mxu0 0.0
    %3692 = vmatprep.subr.mxu0 0.0
    %3693 = vmatpush2.msra.mxu0 0.0
    %3694 = vmatprep.subr.mxu0 0.0
    %3695 = vmatpush2.msra.mxu0 0.0
    %3696 = vmatprep.subr.mxu0 0.0
    %3697 = vmatpush2.msra.mxu0 0.0
    %3698 = vmatprep.subr.mxu0 0.0
    %3699 = vmatpush2.msra.mxu0 0.0
    %3700 = vmatprep.subr.mxu0 0.0
    %3701 = vmatpush2.msra.mxu0 0.0
    %3702 = vmatprep.subr.mxu0 0.0
    %3703 = vmatpush2.msra.mxu0 0.0
    %3704 = vmatprep.subr.mxu0 0.0
    %3705 = vmatpush2.msra.mxu0 0.0
    %3706 = vmatprep.subr.mxu0 0.0
    %3707 = vmatpush2.msra.mxu0 0.0
    %3708 = vmatprep.mubr.f32.mxu0 0.0
    %3709 = vmatmul.mubr.f32.gmra.mxu0 %v3621
    %v3710 = vpop.f32.mrf.mxu0
    %v3711 = vadd.f32 %v3618, %v3710
    %v3712 = vpop.f32.mrf.mxu0
    %3713 = vmatprep.mubr.f32.mxu0 0.0
    %3714 = vmatmul.mubr.f32.gmra.mxu0 %v3624
    %v3715 = vpop.f32.mrf.mxu0
    %v3716 = vadd.f32 %v3618, %v3715
    %v3717 = vpop.f32.mrf.mxu0
    %3718 = vmatprep.mubr.f32.mxu0 0.0
    %3719 = vmatmul.mubr.f32.gmra.mxu0 %v3627
    %v3720 = vpop.f32.mrf.mxu0
    %v3721 = vadd.f32 %v3618, %v3720
    %v3722 = vpop.f32.mrf.mxu0
    %3723 = vmatprep.mubr.f32.mxu0 0.0
    %3724 = vmatmul.mubr.f32.gmra.mxu0 %v3630
    %v3725 = vpop.f32.mrf.mxu0
    %v3726 = vadd.f32 %v3618, %v3725
    %v3727 = vpop.f32.mrf.mxu0
    %3728 = vmatprep.mubr.f32.mxu0 0.0
    %3729 = vmatmul.mubr.f32.gmra.mxu0 %v3633
    %v3730 = vpop.f32.mrf.mxu0
    %v3731 = vadd.f32 %v3618, %v3730
    %v3732 = vpop.f32.mrf.mxu0
    %3733 = vmatprep.mubr.f32.mxu0 0.0
    %3734 = vmatmul.mubr.f32.gmra.mxu0 %v3636
    %v3735 = vpop.f32.mrf.mxu0
    %v3736 = vadd.f32 %v3618, %v3735
    %v3737 = vpop.f32.mrf.mxu0
    %3738 = vmatprep.mubr.f32.mxu0 0.0
    %3739 = vmatmul.mubr.f32.gmra.mxu0 %v3639
    %v3740 = vpop.f32.mrf.mxu0
    %v3741 = vadd.f32 %v3618, %v3740
    %v3742 = vpop.f32.mrf.mxu0
    %3743 = vmatprep.mubr.f32.mxu0 0.0
    %3744 = vmatmul.mubr.f32.gmra.mxu0 %v3642
    %v3745 = vpop.f32.mrf.mxu0
    %v3746 = vadd.f32 %v3618, %v3745
    %v3747 = vpop.f32.mrf.mxu0
    %3748 = vdwg.mxu0
    %3749 = vst [vmem:[#allocation2] sm:$0xff] %v3711
    %3750 = vst [vmem:[#allocation2 + $0x8] sm:$0xff] %v3716
    %3751 = vst [vmem:[#allocation2 + $0x10] sm:$0xff] %v3721
    %3752 = vst [vmem:[#allocation2 + $0x18] sm:$0xff] %v3726
    %3753 = vst [vmem:[#allocation2 + $0x20] sm:$0xff] %v3731
    %3754 = vst [vmem:[#allocation2 + $0x28] sm:$0xff] %v3736
    %3755 = vst [vmem:[#allocation2 + $0x30] sm:$0xff] %v3741
    %3756 = vst [vmem:[#allocation2 + $0x38] sm:$0xff] %v3746
    // Predicated region
    $region81: #{tpu_custom_call.1} parent=1 // pred_check
      _
    $region82: #{tpu_custom_call.1} parent=1 // pred_check_branch
      %3758 = sbr.rel (0) target = $region84
    $region83: #{tpu_custom_call.1} parent=1 // pred_region
      %s3760 = ssub.s32 1024, 1024
      %3761 = vsyncadd [#allocation3], %s3760
      %s3762 = sshll.u32 [#allocation2], 4
      %s3763 = int_to_ptr.vmem [resolvable:$true] %s3762
      %3768 = dma.vmem_to_hbm [thread:$0]  %s3763, 1024, %s18, [#allocation3], 128, 128, 8
    $region84: #{tpu_custom_call.1} parent=1 // pred_fallthru
      _
    // Predicated region
    $region85: #{tpu_custom_call.1} parent=1 // pred_check
      _
    $region86: #{tpu_custom_call.1} parent=1 // pred_check_branch
      %3770 = sbr.rel (0) target = $region88
    $region87: #{tpu_custom_call.1} parent=1 // pred_region
      %3771 = dma.done [#allocation3], 1024
    $region88: #{tpu_custom_call.1} parent=1 // pred_fallthru
      _
    %3772 = vsyncpa [#allocation3], 1

</llo_original>
